<compile_context>
chip_gen: v7x
topology: tpu7x:2x2x1
jax: 0.10.0
libtpu: 0.0.40
codegen_flags: <defaults>
</compile_context>

<pallas_src>
import math
import functools

import jax
import jax.numpy as jnp
from jax.experimental import pallas as pl
from jax.experimental.pallas import tpu as pltpu


# ----------------------------------------------------------------------------
# In-kernel helpers
# ----------------------------------------------------------------------------

def _ln(z, g, b):
    """Row-wise LayerNorm (eps=1e-5, biased variance, PyTorch semantics), f32."""
    mean = jnp.mean(z, axis=-1, keepdims=True)
    zc = z - mean
    var = jnp.mean(zc * zc, axis=-1, keepdims=True)
    return zc * jax.lax.rsqrt(var + 1e-5) * g + b


def _attend(q, k, v, w_out_ref, b_out_ref, n_head, causal):
    """Multi-head attention + fused output projection.

    q:(Tq,D) k,v:(Tk,D) f32.  w_out_ref:(D,D) bf16 (rows = ctx features),
    b_out_ref:(1,D) f32.  Heads are processed in an unrolled static loop and
    the output projection is accumulated per head
    (ctx_h @ W_out[h*dh:(h+1)*dh, :]), avoiding in-kernel concat / transpose.
    """
    Tq, D = q.shape
    Tk = k.shape[0]
    dh = D // n_head
    scale = 1.0 / math.sqrt(dh)

    acc = jnp.zeros((Tq, D), jnp.float32)
    for h in range(n_head):
        lo = h * dh
        qh = q[:, lo:lo + dh]
        kh = k[:, lo:lo + dh]
        vh = v[:, lo:lo + dh]
        # scores: contract last dims, no explicit transpose needed
        s = jax.lax.dot_general(qh, kh, (((1,), (1,)), ((), ())),
                                preferred_element_type=jnp.float32) * scale
        if causal:
            r = jax.lax.broadcasted_iota(jnp.int32, (Tq, Tk), 0)
            c = jax.lax.broadcasted_iota(jnp.int32, (Tq, Tk), 1)
            s = jnp.where(c <= r, s, -1e30)
        m = jnp.max(s, axis=-1, keepdims=True)
        p = jnp.exp(s - m)
        denom = jnp.sum(p, axis=-1, keepdims=True)
        p = p * pl.reciprocal(denom, approx=True)
        ctx_h = jnp.dot(p, vh, preferred_element_type=jnp.float32)      # (Tq, dh)
        acc = acc + jnp.dot(ctx_h.astype(jnp.bfloat16),
                            w_out_ref[lo:lo + dh, :],
                            preferred_element_type=jnp.float32)         # (Tq, D)
    return acc + b_out_ref[...]


# ----------------------------------------------------------------------------
# Fused Pallas kernels
# ----------------------------------------------------------------------------

def _decoder_layer_kernel(x_ref, mem_ref,
                          sa_wi_ref, sa_bi_ref, sa_wo_ref, sa_bo_ref,
                          g1_ref, b1_ref,
                          ca_wi_ref, ca_bi_ref, ca_wo_ref, ca_bo_ref,
                          g2_ref, b2_ref,
                          w1_ref, fb1_ref, w2_ref, fb2_ref,
                          g3_ref, b3_ref,
                          o_ref, *, n_head):
    """Full nn.TransformerDecoderLayer (post-norm, ReLU) for one batch element."""
    x = x_ref[0]                                   # (T, D) f32
    mem = mem_ref[0]                               # (S, D) f32
    D = x.shape[-1]

    # --- self-attention sub-block (fused QKV projection) ---
    qkv = jnp.dot(x.astype(jnp.bfloat16), sa_wi_ref[...],
                  preferred_element_type=jnp.float32) + sa_bi_ref[...]   # (T, 3D)
    q = qkv[:, :D]
    k = qkv[:, D:2 * D]
    v = qkv[:, 2 * D:]
    sa = _attend(q, k, v, sa_wo_ref, sa_bo_ref, n_head, causal=True)
    x = _ln(x + sa, g1_ref[...], b1_ref[...])

    # --- cross-attention sub-block (fused KV projection of memory) ---
    q = jnp.dot(x.astype(jnp.bfloat16), ca_wi_ref[:, :D],
                preferred_element_type=jnp.float32) + ca_bi_ref[:, :D]
    kv = jnp.dot(mem.astype(jnp.bfloat16), ca_wi_ref[:, D:],
                 preferred_element_type=jnp.float32) + ca_bi_ref[:, D:]
    k = kv[:, :D]
    v = kv[:, D:]
    ca = _attend(q, k, v, ca_wo_ref, ca_bo_ref, n_head, causal=False)
    x = _ln(x + ca, g2_ref[...], b2_ref[...])

    # --- FFN sub-block ---
    h = jnp.dot(x.astype(jnp.bfloat16), w1_ref[...],
                preferred_element_type=jnp.float32) + fb1_ref[...]
    h = jnp.maximum(h, 0.0)
    y = jnp.dot(h.astype(jnp.bfloat16), w2_ref[...],
                preferred_element_type=jnp.float32) + fb2_ref[...]
    o_ref[0] = _ln(x + y, g3_ref[...], b3_ref[...])


def _vocab_proj_kernel(x_ref, w_ref, b_ref, o_ref):
    """Tiled output projection tile: (tm, D) @ (D, tn) + (1, tn)."""
    o_ref[...] = (jnp.dot(x_ref[...].astype(jnp.bfloat16), w_ref[...],
                          preferred_element_type=jnp.float32) + b_ref[...])


# ----------------------------------------------------------------------------
# pallas_call wrappers
# ----------------------------------------------------------------------------

def _row_tile(n, target=256):
    """Largest row tile <= target that divides n and is a multiple of 8."""
    if n <= target:
        return n
    for t in range(target, 0, -8):
        if n % t == 0:
            return t
    return n


def decoder_layer(x, mem, p, n_head):
    """x:(B,T,D), mem:(B,S,D) f32 -> (B,T,D) f32 (one fully fused layer)."""
    B, T, D = x.shape
    S = mem.shape[1]
    Dff = p['ff1_w'].shape[1]
    kern = functools.partial(_decoder_layer_kernel, n_head=n_head)
    full = lambda b: (0, 0)   # weights: same block every grid step -> resident in VMEM
    return pl.pallas_call(
        kern,
        out_shape=jax.ShapeDtypeStruct((B, T, D), jnp.float32),
        grid=(B,),
        in_specs=[
            pl.BlockSpec((1, T, D), lambda b: (b, 0, 0)),
            pl.BlockSpec((1, S, D), lambda b: (b, 0, 0)),
            pl.BlockSpec((D, 3 * D), full),
            pl.BlockSpec((1, 3 * D), full),
            pl.BlockSpec((D, D), full),
            pl.BlockSpec((1, D), full),
            pl.BlockSpec((1, D), full),
            pl.BlockSpec((1, D), full),
            pl.BlockSpec((D, 3 * D), full),
            pl.BlockSpec((1, 3 * D), full),
            pl.BlockSpec((D, D), full),
            pl.BlockSpec((1, D), full),
            pl.BlockSpec((1, D), full),
            pl.BlockSpec((1, D), full),
            pl.BlockSpec((D, Dff), full),
            pl.BlockSpec((1, Dff), full),
            pl.BlockSpec((Dff, D), full),
            pl.BlockSpec((1, D), full),
            pl.BlockSpec((1, D), full),
            pl.BlockSpec((1, D), full),
        ],
        out_specs=pl.BlockSpec((1, T, D), lambda b: (b, 0, 0)),
        compiler_params=pltpu.CompilerParams(dimension_semantics=("parallel",)),
    )(x, mem,
      p['self_in_w'], p['self_in_b'], p['self_out_w'], p['self_out_b'],
      p['ln1_g'], p['ln1_b'],
      p['cross_in_w'], p['cross_in_b'], p['cross_out_w'], p['cross_out_b'],
      p['ln2_g'], p['ln2_b'],
      p['ff1_w'], p['ff1_b'], p['ff2_w'], p['ff2_b'],
      p['ln3_g'], p['ln3_b'])


def vocab_projection(x, w, b, vocab_size):
    """x:(N,D) f32, w:(D,Vp) bf16 (zero-padded), b:(1,Vp) f32 -> (N,V) f32."""
    N, D = x.shape
    Vp = w.shape[1]
    tm = _row_tile(N)
    tn = min(Vp, 512)
    while Vp % tn:
        tn -= 128
    out = pl.pallas_call(
        _vocab_proj_kernel,
        out_shape=jax.ShapeDtypeStruct((N, Vp), jnp.float32),
        grid=(N // tm, Vp // tn),
        in_specs=[
            pl.BlockSpec((tm, D), lambda i, j: (i, 0)),
            pl.BlockSpec((D, tn), lambda i, j: (0, j)),
            pl.BlockSpec((1, tn), lambda i, j: (0, j)),
        ],
        out_specs=pl.BlockSpec((tm, tn), lambda i, j: (i, j)),
        compiler_params=pltpu.CompilerParams(
            dimension_semantics=("parallel", "parallel")),
    )(x, w, b)
    return out[:, :vocab_size]


# ----------------------------------------------------------------------------
# Model forward (eval mode)
# ----------------------------------------------------------------------------

def positional_encoding(T, D):
    position = jnp.arange(T, dtype=jnp.float32)[:, None]
    div_term = jnp.exp(jnp.arange(0, D, 2, dtype=jnp.float32)
                       * (-math.log(10000.0) / D))
    pe = jnp.zeros((T, D), dtype=jnp.float32)
    pe = pe.at[:, 0::2].set(jnp.sin(position * div_term))
    pe = pe.at[:, 1::2].set(jnp.cos(position * div_term))
    return pe[None, :, :]                          # (1, T, D) for batch-major add


@functools.partial(jax.jit, static_argnames=("n_head", "vocab_size"))
def _forward_core(params, memory, encoded_captions, caption_lengths,
                  *, n_head, vocab_size):
    B, T = encoded_captions.shape
    D = params['embed'].shape[1]

    # one-time layout change: memory (S,B,D) -> batch-major (B,S,D)
    mem_bt = jnp.transpose(memory, (1, 0, 2)).astype(jnp.float32)

    # TODO(synk): embedding gather kept in plain JAX (table lookup, not a hot matmul)
    x = params['embed'][encoded_captions]          # (B, T, D)
    x = x + positional_encoding(T, D)              # dropout == identity

    for p in params['layers']:
        x = decoder_layer(x, mem_bt, p, n_head)

    pred = vocab_projection(x.reshape(B * T, D), params['wdc_w'],
                            params['wdc_b'], vocab_size)
    pred = pred.reshape(B, T, vocab_size)          # already (B, T, V), no permute

    lengths = caption_lengths[:, 0]
    sort_ind = jnp.argsort(-lengths)               # stable descending sort
    sorted_lengths = lengths[sort_ind]
    return pred[sort_ind], encoded_captions[sort_ind], sorted_lengths, sort_ind


def decoder_transformer_forward(params, memory, encoded_captions,
                                caption_lengths, n_head, vocab_size):
    """Mirrors DecoderTransformer.forward (eval mode)."""
    pred_s, enc_s, sorted_lengths, sort_ind = _forward_core(
        params, memory, encoded_captions, caption_lengths,
        n_head=n_head, vocab_size=vocab_size)
    # TODO(synk): .tolist() forces a host sync (module returns a Python list).
    decode_lengths = (sorted_lengths - 1).tolist()
    return pred_s, enc_s, decode_lengths, sort_ind


# ----------------------------------------------------------------------------
# Parameter init (PyTorch layout) + one-time kernel-layout preparation
# ----------------------------------------------------------------------------

def init_params(key, vocab_size, feature_dim, n_head, n_layers):
    D = feature_dim
    ff = 4 * D
    keys = iter(jax.random.split(key, 8 * n_layers + 4))

    def u(k, shape, a=0.1):
        return jax.random.uniform(k, shape, jnp.float32, -a, a)

    layers = []
    for _ in range(n_layers):
        layers.append(dict(
            self_in_w=u(next(keys), (3 * D, D)),
            self_in_b=jnp.zeros((3 * D,), jnp.float32),
            self_out_w=u(next(keys), (D, D)),
            self_out_b=jnp.zeros((D,), jnp.float32),
            cross_in_w=u(next(keys), (3 * D, D)),
            cross_in_b=jnp.zeros((3 * D,), jnp.float32),
            cross_out_w=u(next(keys), (D, D)),
            cross_out_b=jnp.zeros((D,), jnp.float32),
            ff1_w=u(next(keys), (ff, D)),
            ff1_b=jnp.zeros((ff,), jnp.float32),
            ff2_w=u(next(keys), (D, ff)),
            ff2_b=jnp.zeros((D,), jnp.float32),
            ln1_g=jnp.ones((D,), jnp.float32), ln1_b=jnp.zeros((D,), jnp.float32),
            ln2_g=jnp.ones((D,), jnp.float32), ln2_b=jnp.zeros((D,), jnp.float32),
            ln3_g=jnp.ones((D,), jnp.float32), ln3_b=jnp.zeros((D,), jnp.float32),
        ))

    return dict(
        embed=u(next(keys), (vocab_size, D)),      # uniform(-0.1, 0.1)
        wdc_w=u(next(keys), (vocab_size, D)),      # uniform(-0.1, 0.1)
        wdc_b=jnp.zeros((vocab_size,), jnp.float32),
        layers=layers,
    )


def prepare_params(raw, vocab_size):
    """One-time weight layout/dtype prep: transpose to (in, out), cast matmul
    weights to bf16, reshape biases/LN params to (1, D), pad vocab to 128."""
    D = raw['embed'].shape[1]
    Vp = ((vocab_size + 127) // 128) * 128

    def w(a):   # matmul weight -> bf16, (in, out)
        return a.T.astype(jnp.bfloat16)

    def r1(a):  # bias / LN param -> (1, D) f32
        return a.reshape(1, -1).astype(jnp.float32)

    layers = []
    for p in raw['layers']:
        layers.append(dict(
            self_in_w=w(p['self_in_w']), self_in_b=r1(p['self_in_b']),
            self_out_w=w(p['self_out_w']), self_out_b=r1(p['self_out_b']),
            cross_in_w=w(p['cross_in_w']), cross_in_b=r1(p['cross_in_b']),
            cross_out_w=w(p['cross_out_w']), cross_out_b=r1(p['cross_out_b']),
            ff1_w=w(p['ff1_w']), ff1_b=r1(p['ff1_b']),
            ff2_w=w(p['ff2_w']), ff2_b=r1(p['ff2_b']),
            ln1_g=r1(p['ln1_g']), ln1_b=r1(p['ln1_b']),
            ln2_g=r1(p['ln2_g']), ln2_b=r1(p['ln2_b']),
            ln3_g=r1(p['ln3_g']), ln3_b=r1(p['ln3_b']),
        ))

    wdc_w = jnp.zeros((D, Vp), jnp.bfloat16)
    wdc_w = wdc_w.at[:, :vocab_size].set(raw['wdc_w'].T.astype(jnp.bfloat16))
    wdc_b = jnp.zeros((1, Vp), jnp.float32)
    wdc_b = wdc_b.at[:, :vocab_size].set(raw['wdc_b'].reshape(1, -1))

    return dict(embed=raw['embed'].astype(jnp.float32),
                wdc_w=wdc_w, wdc_b=wdc_b, layers=layers)


# ----------------------------------------------------------------------------
# Pure-JAX reference (same bf16 weight casts, exact softmax) for validation
# ----------------------------------------------------------------------------

def _reference_forward(params, memory, encoded_captions, n_head, vocab_size):
    B, T = encoded_captions.shape
    D = params['embed'].shape[1]
    mem = jnp.transpose(memory, (1, 0, 2)).astype(jnp.float32)
    x = params['embed'][encoded_captions] + positional_encoding(T, D)

    def mm(a, w):
        return jnp.dot(a.astype(jnp.bfloat16), w,
                       preferred_element_type=jnp.float32)

    def ln(z, g, b):
        m = jnp.mean(z, -1, keepdims=True)
        v = jnp.mean((z - m) ** 2, -1, keepdims=True)
        return (z - m) * jax.lax.rsqrt(v + 1e-5) * g + b

    def mha(q, k, v, wo, bo, causal):
        Tq, Tk = q.shape[1], k.shape[1]
        dh = D // n_head
        qh = q.reshape(B, Tq, n_head, dh).transpose(0, 2, 1, 3)
        kh = k.reshape(B, Tk, n_head, dh).transpose(0, 2, 1, 3)
        vh = v.reshape(B, Tk, n_head, dh).transpose(0, 2, 1, 3)
        s = jnp.einsum('bhqd,bhkd->bhqk', qh, kh) / math.sqrt(dh)
        if causal:
            r = jnp.arange(Tq)[:, None]
            c = jnp.arange(Tk)[None, :]
            s = jnp.where(c <= r, s, -1e30)
        p = jax.nn.softmax(s, axis=-1)
        ctx = jnp.einsum('bhqk,bhkd->bhqd', p, vh)
        ctx = ctx.transpose(0, 2, 1, 3).reshape(B, Tq, D)
        return mm(ctx, wo) + bo

    for p in params['layers']:
        qkv = mm(x, p['self_in_w']) + p['self_in_b']
        q, k, v = qkv[..., :D], qkv[..., D:2 * D], qkv[..., 2 * D:]
        x = ln(x + mha(q, k, v, p['self_out_w'], p['self_out_b'], True),
               p['ln1_g'], p['ln1_b'])
        q = mm(x, p['cross_in_w'][:, :D]) + p['cross_in_b'][:, :D]
        kv = mm(mem, p['cross_in_w'][:, D:]) + p['cross_in_b'][:, D:]
        k, v = kv[..., :D], kv[..., D:]
        x = ln(x + mha(q, k, v, p['cross_out_w'], p['cross_out_b'], False),
               p['ln2_g'], p['ln2_b'])
        h = jnp.maximum(mm(x, p['ff1_w']) + p['ff1_b'], 0.0)
        y = mm(h, p['ff2_w']) + p['ff2_b']
        x = ln(x + y, p['ln3_g'], p['ln3_b'])

    logits = mm(x, params['wdc_w']) + params['wdc_b']
    return logits[..., :vocab_size]


# ----------------------------------------------------------------------------

if __name__ == "__main__":
    B, T, S = 2, 8, 10          # batch, caption length, memory length
    D, H, L, V = 32, 4, 2, 40   # feature_dim, n_head, n_layers, vocab_size

    root = jax.random.PRNGKey(0)
    kp, km, kc = jax.random.split(root, 3)

    raw_params = init_params(kp, V, D, H, L)
    params = prepare_params(raw_params, V)
    memory = jax.random.normal(km, (S, B, D), dtype=jnp.float32)
    encoded_captions = jax.random.randint(kc, (B, T), 0, V, dtype=jnp.int32)
    caption_lengths = jnp.array([[6], [8]], dtype=jnp.int32)

    pred, enc_sorted, decode_lengths, sort_ind = decoder_transformer_forward(
        params, memory, encoded_captions, caption_lengths, H, V)

    jax.block_until_ready(pred)
    jax.block_until_ready(sort_ind)

    assert pred.shape == (B, T, V)
    assert enc_sorted.shape == (B, T)
    assert len(decode_lengths) == B
    assert bool(jnp.all(jnp.isfinite(pred)))

    # Numerical check vs. a pure-JAX reference (same bf16 weights, exact softmax).
    ref = _reference_forward(params, memory, encoded_captions, H, V)[sort_ind]
    max_err = float(jnp.max(jnp.abs(pred - ref)))
    assert max_err < 5e-2, f"max abs err vs reference: {max_err}"

    print("KERNEL_OK")
</pallas_src>

<mosaic_0001>
module attributes {stable_mosaic.version = 11 : i64} {
  func.func @_vocab_proj_kernel(%arg0: i32, %arg1: i32, %arg2: memref<16x32xf32, #tpu.memory_space<vmem>>, %arg3: memref<32x128xbf16, #tpu.memory_space<vmem>>, %arg4: memref<1x128xf32, #tpu.memory_space<vmem>>, %arg5: memref<16x128xf32, #tpu.memory_space<vmem>>) attributes {dimension_semantics = [#tpu.dimension_semantics<parallel>, #tpu.dimension_semantics<parallel>], iteration_bounds = array<i64: 1, 1>, scalar_prefetch = 0 : i64, scratch_operands = 0 : i64, tpu.core_type = #tpu.core_type<tc>, window_params = [{transform_indices = @transform_0, window_bounds = array<i64: 16, 32>}, {transform_indices = @transform_1, window_bounds = array<i64: 32, 128>}, {transform_indices = @transform_2, window_bounds = array<i64: 1, 128>}, {transform_indices = @transform_3, window_bounds = array<i64: 16, 128>}]} {
    %c0 = arith.constant 0 : index
    %c0_0 = arith.constant 0 : index
    %0 = vector.load %arg2[%c0, %c0_0] : memref<16x32xf32, #tpu.memory_space<vmem>>, vector<16x32xf32>
    %1 = arith.truncf %0 : vector<16x32xf32> to vector<16x32xbf16>
    %c0_1 = arith.constant 0 : index
    %c0_2 = arith.constant 0 : index
    %2 = vector.load %arg3[%c0_1, %c0_2] : memref<32x128xbf16, #tpu.memory_space<vmem>>, vector<32x128xbf16>
    %cst = arith.constant dense<0.000000e+00> : vector<16x128xf32>
    %3 = tpu.matmul %1, %2, %cst {dimension_numbers = #tpu.dot_dimension_numbers<[1], [0], [0], [1], [0, 0, 1, 1], [], []>} : vector<16x32xbf16>, vector<32x128xbf16>, vector<16x128xf32> -> vector<16x128xf32>
    %c0_3 = arith.constant 0 : index
    %c0_4 = arith.constant 0 : index
    %4 = vector.load %arg4[%c0_3, %c0_4] : memref<1x128xf32, #tpu.memory_space<vmem>>, vector<1x128xf32>
    %5 = vector.broadcast %4 : vector<1x128xf32> to vector<16x128xf32>
    %6 = arith.addf %3, %5 : vector<16x128xf32>
    %c0_5 = arith.constant 0 : index
    %c0_6 = arith.constant 0 : index
    %7 = vector.load %arg5[%c0_5, %c0_6] : memref<16x128xf32, #tpu.memory_space<vmem>>, vector<16x128xf32>
    tpu.vector_store %arg5[%c0_5, %c0_6], %6 {strides = array<i32>} : memref<16x128xf32, #tpu.memory_space<vmem>>, vector<16x128xf32>,
    return
  }
  func.func @transform_0(%arg0: i32, %arg1: i32) -> (i32, i32) {
    %c0_i32 = arith.constant 0 : i32
    %c0_i32_0 = arith.constant 0 : i32
    return %arg0, %c0_i32 : i32, i32
  }
  func.func @transform_1(%arg0: i32, %arg1: i32) -> (i32, i32) {
    %c0_i32 = arith.constant 0 : i32
    %c0_i32_0 = arith.constant 0 : i32
    return %c0_i32, %arg1 : i32, i32
  }
  func.func @transform_2(%arg0: i32, %arg1: i32) -> (i32, i32) {
    %c0_i32 = arith.constant 0 : i32
    %c0_i32_0 = arith.constant 0 : i32
    return %c0_i32, %arg1 : i32, i32
  }
  func.func @transform_3(%arg0: i32, %arg1: i32) -> (i32, i32) {
    %c0_i32 = arith.constant 0 : i32
    return %arg0, %arg1 : i32, i32
  }
}

module attributes {stable_mosaic.version = 11 : i64} {
  func.func @_decoder_layer_kernel(%arg0: i32, %arg1: memref<1x8x32xf32, #tpu.memory_space<vmem>>, %arg2: memref<1x10x32xf32, #tpu.memory_space<vmem>>, %arg3: memref<32x96xbf16, #tpu.memory_space<vmem>>, %arg4: memref<1x96xf32, #tpu.memory_space<vmem>>, %arg5: memref<32x32xbf16, #tpu.memory_space<vmem>>, %arg6: memref<1x32xf32, #tpu.memory_space<vmem>>, %arg7: memref<1x32xf32, #tpu.memory_space<vmem>>, %arg8: memref<1x32xf32, #tpu.memory_space<vmem>>, %arg9: memref<32x96xbf16, #tpu.memory_space<vmem>>, %arg10: memref<1x96xf32, #tpu.memory_space<vmem>>, %arg11: memref<32x32xbf16, #tpu.memory_space<vmem>>, %arg12: memref<1x32xf32, #tpu.memory_space<vmem>>, %arg13: memref<1x32xf32, #tpu.memory_space<vmem>>, %arg14: memref<1x32xf32, #tpu.memory_space<vmem>>, %arg15: memref<32x128xbf16, #tpu.memory_space<vmem>>, %arg16: memref<1x128xf32, #tpu.memory_space<vmem>>, %arg17: memref<128x32xbf16, #tpu.memory_space<vmem>>, %arg18: memref<1x32xf32, #tpu.memory_space<vmem>>, %arg19: memref<1x32xf32, #tpu.memory_space<vmem>>, %arg20: memref<1x32xf32, #tpu.memory_space<vmem>>, %arg21: memref<1x8x32xf32, #tpu.memory_space<vmem>>) attributes {dimension_semantics = [#tpu.dimension_semantics<parallel>], iteration_bounds = array<i64: 2>, scalar_prefetch = 0 : i64, scratch_operands = 0 : i64, tpu.core_type = #tpu.core_type<tc>, window_params = [{transform_indices = @transform_0, window_bounds = array<i64: 1, 8, 32>}, {transform_indices = @transform_1, window_bounds = array<i64: 1, 10, 32>}, {pipeline_mode = #tpu.pipeline_mode<synchronous>, transform_indices = @transform_2, window_bounds = array<i64: 32, 96>}, {pipeline_mode = #tpu.pipeline_mode<synchronous>, transform_indices = @transform_3, window_bounds = array<i64: 1, 96>}, {pipeline_mode = #tpu.pipeline_mode<synchronous>, transform_indices = @transform_4, window_bounds = array<i64: 32, 32>}, {pipeline_mode = #tpu.pipeline_mode<synchronous>, transform_indices = @transform_5, window_bounds = array<i64: 1, 32>}, {pipeline_mode = #tpu.pipeline_mode<synchronous>, transform_indices = @transform_6, window_bounds = array<i64: 1, 32>}, {pipeline_mode = #tpu.pipeline_mode<synchronous>, transform_indices = @transform_7, window_bounds = array<i64: 1, 32>}, {pipeline_mode = #tpu.pipeline_mode<synchronous>, transform_indices = @transform_8, window_bounds = array<i64: 32, 96>}, {pipeline_mode = #tpu.pipeline_mode<synchronous>, transform_indices = @transform_9, window_bounds = array<i64: 1, 96>}, {pipeline_mode = #tpu.pipeline_mode<synchronous>, transform_indices = @transform_10, window_bounds = array<i64: 32, 32>}, {pipeline_mode = #tpu.pipeline_mode<synchronous>, transform_indices = @transform_11, window_bounds = array<i64: 1, 32>}, {pipeline_mode = #tpu.pipeline_mode<synchronous>, transform_indices = @transform_12, window_bounds = array<i64: 1, 32>}, {pipeline_mode = #tpu.pipeline_mode<synchronous>, transform_indices = @transform_13, window_bounds = array<i64: 1, 32>}, {pipeline_mode = #tpu.pipeline_mode<synchronous>, transform_indices = @transform_14, window_bounds = array<i64: 32, 128>}, {pipeline_mode = #tpu.pipeline_mode<synchronous>, transform_indices = @transform_15, window_bounds = array<i64: 1, 128>}, {pipeline_mode = #tpu.pipeline_mode<synchronous>, transform_indices = @transform_16, window_bounds = array<i64: 128, 32>}, {pipeline_mode = #tpu.pipeline_mode<synchronous>, transform_indices = @transform_17, window_bounds = array<i64: 1, 32>}, {pipeline_mode = #tpu.pipeline_mode<synchronous>, transform_indices = @transform_18, window_bounds = array<i64: 1, 32>}, {pipeline_mode = #tpu.pipeline_mode<synchronous>, transform_indices = @transform_19, window_bounds = array<i64: 1, 32>}, {transform_indices = @transform_20, window_bounds = array<i64: 1, 8, 32>}]} {
    %c0 = arith.constant 0 : index
    %c0_0 = arith.constant 0 : index
    %c0_1 = arith.constant 0 : index
    %0 = vector.load %arg1[%c0, %c0_0, %c0_1] : memref<1x8x32xf32, #tpu.memory_space<vmem>>, vector<1x8x32xf32>
    %1 = vector.shape_cast %0 : vector<1x8x32xf32> to vector<8x32xf32>
    %c0_2 = arith.constant 0 : index
    %c0_3 = arith.constant 0 : index
    %c0_4 = arith.constant 0 : index
    %2 = vector.load %arg2[%c0_2, %c0_3, %c0_4] : memref<1x10x32xf32, #tpu.memory_space<vmem>>, vector<1x10x32xf32>
    %3 = vector.shape_cast %2 : vector<1x10x32xf32> to vector<10x32xf32>
    %4 = arith.truncf %1 : vector<8x32xf32> to vector<8x32xbf16>
    %c0_5 = arith.constant 0 : index
    %c0_6 = arith.constant 0 : index
    %5 = vector.load %arg3[%c0_5, %c0_6] : memref<32x96xbf16, #tpu.memory_space<vmem>>, vector<32x96xbf16>
    %cst = arith.constant dense<0.000000e+00> : vector<8x96xf32>
    %6 = tpu.matmul %4, %5, %cst {dimension_numbers = #tpu.dot_dimension_numbers<[1], [0], [0], [1], [0, 0, 1, 1], [], []>} : vector<8x32xbf16>, vector<32x96xbf16>, vector<8x96xf32> -> vector<8x96xf32>
    %c0_7 = arith.constant 0 : index
    %c0_8 = arith.constant 0 : index
    %7 = vector.load %arg4[%c0_7, %c0_8] : memref<1x96xf32, #tpu.memory_space<vmem>>, vector<1x96xf32>
    %8 = vector.broadcast %7 : vector<1x96xf32> to vector<8x96xf32>
    %9 = arith.addf %6, %8 : vector<8x96xf32>
    %10 = vector.extract_strided_slice %9 {offsets = [0, 0], sizes = [8, 32], strides = [1, 1]} : vector<8x96xf32> to vector<8x32xf32>
    %11 = vector.extract_strided_slice %9 {offsets = [0, 32], sizes = [8, 32], strides = [1, 1]} : vector<8x96xf32> to vector<8x32xf32>
    %12 = vector.extract_strided_slice %9 {offsets = [0, 64], sizes = [8, 32], strides = [1, 1]} : vector<8x96xf32> to vector<8x32xf32>
    %cst_9 = arith.constant 0.000000e+00 : f32
    %13 = vector.broadcast %cst_9 : f32 to vector<8x32xf32>
    %14 = vector.extract_strided_slice %10 {offsets = [0, 0], sizes = [8, 8], strides = [1, 1]} : vector<8x32xf32> to vector<8x8xf32>
    %15 = vector.extract_strided_slice %11 {offsets = [0, 0], sizes = [8, 8], strides = [1, 1]} : vector<8x32xf32> to vector<8x8xf32>
    %16 = vector.extract_strided_slice %12 {offsets = [0, 0], sizes = [8, 8], strides = [1, 1]} : vector<8x32xf32> to vector<8x8xf32>
    %cst_10 = arith.constant dense<0.000000e+00> : vector<8x8xf32>
    %17 = tpu.matmul %14, %15, %cst_10 {dimension_numbers = #tpu.dot_dimension_numbers<[1], [1], [0], [0], [0, 0, 1, 0], [], []>} : vector<8x8xf32>, vector<8x8xf32>, vector<8x8xf32> -> vector<8x8xf32>
    %cst_11 = arith.constant 0.353553385 : f32
    %18 = vector.broadcast %cst_11 : f32 to vector<8x8xf32>
    %19 = arith.mulf %17, %18 : vector<8x8xf32>
    %20 = tpu.iota {dimensions = array<i32: 0>} : vector<8x8xi32>
    %21 = tpu.iota {dimensions = array<i32: 1>} : vector<8x8xi32>
    %22 = arith.cmpi sle, %21, %20 : vector<8x8xi32>
    %cst_12 = arith.constant -1.000000e+30 : f32
    %23 = vector.broadcast %cst_12 : f32 to vector<8x8xf32>
    %24 = arith.select %22, %19, %23 : vector<8x8xi1>, vector<8x8xf32>
    %cst_13 = arith.constant dense<0xFF800000> : vector<8xf32>
    %25 = vector.multi_reduction <maximumf>, %24, %cst_13 [1] : vector<8x8xf32> to vector<8xf32>
    %26 = vector.shape_cast %25 : vector<8xf32> to vector<8x1xf32>
    %27 = vector.broadcast %26 : vector<8x1xf32> to vector<8x8xf32>
    %28 = arith.subf %24, %27 : vector<8x8xf32>
    %29 = math.exp %28 : vector<8x8xf32>
    %cst_14 = arith.constant dense<0.000000e+00> : vector<8xf32>
    %30 = vector.multi_reduction <add>, %29, %cst_14 [1] : vector<8x8xf32> to vector<8xf32>
    %31 = vector.shape_cast %30 : vector<8xf32> to vector<8x1xf32>
    %32 = tpu.reciprocal %31 {approx = true} : vector<8x1xf32> -> vector<8x1xf32>
    %33 = vector.broadcast %32 : vector<8x1xf32> to vector<8x8xf32>
    %34 = arith.mulf %29, %33 : vector<8x8xf32>
    %cst_15 = arith.constant dense<0.000000e+00> : vector<8x8xf32>
    %35 = tpu.matmul %34, %16, %cst_15 {dimension_numbers = #tpu.dot_dimension_numbers<[1], [0], [0], [1], [0, 0, 1, 1], [], []>} : vector<8x8xf32>, vector<8x8xf32>, vector<8x8xf32> -> vector<8x8xf32>
    %36 = arith.truncf %35 : vector<8x8xf32> to vector<8x8xbf16>
    %c0_16 = arith.constant 0 : index
    %c0_17 = arith.constant 0 : index
    %37 = vector.load %arg5[%c0_16, %c0_17] : memref<32x32xbf16, #tpu.memory_space<vmem>>, vector<8x32xbf16>
    %cst_18 = arith.constant dense<0.000000e+00> : vector<8x32xf32>
    %38 = tpu.matmul %36, %37, %cst_18 {dimension_numbers = #tpu.dot_dimension_numbers<[1], [0], [0], [1], [0, 0, 1, 1], [], []>} : vector<8x8xbf16>, vector<8x32xbf16>, vector<8x32xf32> -> vector<8x32xf32>
    %39 = arith.addf %13, %38 : vector<8x32xf32>
    %40 = vector.extract_strided_slice %10 {offsets = [0, 8], sizes = [8, 8], strides = [1, 1]} : vector<8x32xf32> to vector<8x8xf32>
    %41 = vector.extract_strided_slice %11 {offsets = [0, 8], sizes = [8, 8], strides = [1, 1]} : vector<8x32xf32> to vector<8x8xf32>
    %42 = vector.extract_strided_slice %12 {offsets = [0, 8], sizes = [8, 8], strides = [1, 1]} : vector<8x32xf32> to vector<8x8xf32>
    %cst_19 = arith.constant dense<0.000000e+00> : vector<8x8xf32>
    %43 = tpu.matmul %40, %41, %cst_19 {dimension_numbers = #tpu.dot_dimension_numbers<[1], [1], [0], [0], [0, 0, 1, 0], [], []>} : vector<8x8xf32>, vector<8x8xf32>, vector<8x8xf32> -> vector<8x8xf32>
    %cst_20 = arith.constant 0.353553385 : f32
    %44 = vector.broadcast %cst_20 : f32 to vector<8x8xf32>
    %45 = arith.mulf %43, %44 : vector<8x8xf32>
    %46 = tpu.iota {dimensions = array<i32: 0>} : vector<8x8xi32>
    %47 = tpu.iota {dimensions = array<i32: 1>} : vector<8x8xi32>
    %48 = arith.cmpi sle, %47, %46 : vector<8x8xi32>
    %cst_21 = arith.constant -1.000000e+30 : f32
    %49 = vector.broadcast %cst_21 : f32 to vector<8x8xf32>
    %50 = arith.select %48, %45, %49 : vector<8x8xi1>, vector<8x8xf32>
    %cst_22 = arith.constant dense<0xFF800000> : vector<8xf32>
    %51 = vector.multi_reduction <maximumf>, %50, %cst_22 [1] : vector<8x8xf32> to vector<8xf32>
    %52 = vector.shape_cast %51 : vector<8xf32> to vector<8x1xf32>
    %53 = vector.broadcast %52 : vector<8x1xf32> to vector<8x8xf32>
    %54 = arith.subf %50, %53 : vector<8x8xf32>
    %55 = math.exp %54 : vector<8x8xf32>
    %cst_23 = arith.constant dense<0.000000e+00> : vector<8xf32>
    %56 = vector.multi_reduction <add>, %55, %cst_23 [1] : vector<8x8xf32> to vector<8xf32>
    %57 = vector.shape_cast %56 : vector<8xf32> to vector<8x1xf32>
    %58 = tpu.reciprocal %57 {approx = true} : vector<8x1xf32> -> vector<8x1xf32>
    %59 = vector.broadcast %58 : vector<8x1xf32> to vector<8x8xf32>
    %60 = arith.mulf %55, %59 : vector<8x8xf32>
    %cst_24 = arith.constant dense<0.000000e+00> : vector<8x8xf32>
    %61 = tpu.matmul %60, %42, %cst_24 {dimension_numbers = #tpu.dot_dimension_numbers<[1], [0], [0], [1], [0, 0, 1, 1], [], []>} : vector<8x8xf32>, vector<8x8xf32>, vector<8x8xf32> -> vector<8x8xf32>
    %62 = arith.truncf %61 : vector<8x8xf32> to vector<8x8xbf16>
    %c8 = arith.constant 8 : index
    %c0_25 = arith.constant 0 : index
    %63 = vector.load %arg5[%c8, %c0_25] : memref<32x32xbf16, #tpu.memory_space<vmem>>, vector<8x32xbf16>
    %cst_26 = arith.constant dense<0.000000e+00> : vector<8x32xf32>
    %64 = tpu.matmul %62, %63, %cst_26 {dimension_numbers = #tpu.dot_dimension_numbers<[1], [0], [0], [1], [0, 0, 1, 1], [], []>} : vector<8x8xbf16>, vector<8x32xbf16>, vector<8x32xf32> -> vector<8x32xf32>
    %65 = arith.addf %39, %64 : vector<8x32xf32>
    %66 = vector.extract_strided_slice %10 {offsets = [0, 16], sizes = [8, 8], strides = [1, 1]} : vector<8x32xf32> to vector<8x8xf32>
    %67 = vector.extract_strided_slice %11 {offsets = [0, 16], sizes = [8, 8], strides = [1, 1]} : vector<8x32xf32> to vector<8x8xf32>
    %68 = vector.extract_strided_slice %12 {offsets = [0, 16], sizes = [8, 8], strides = [1, 1]} : vector<8x32xf32> to vector<8x8xf32>
    %cst_27 = arith.constant dense<0.000000e+00> : vector<8x8xf32>
    %69 = tpu.matmul %66, %67, %cst_27 {dimension_numbers = #tpu.dot_dimension_numbers<[1], [1], [0], [0], [0, 0, 1, 0], [], []>} : vector<8x8xf32>, vector<8x8xf32>, vector<8x8xf32> -> vector<8x8xf32>
    %cst_28 = arith.constant 0.353553385 : f32
    %70 = vector.broadcast %cst_28 : f32 to vector<8x8xf32>
    %71 = arith.mulf %69, %70 : vector<8x8xf32>
    %72 = tpu.iota {dimensions = array<i32: 0>} : vector<8x8xi32>
    %73 = tpu.iota {dimensions = array<i32: 1>} : vector<8x8xi32>
    %74 = arith.cmpi sle, %73, %72 : vector<8x8xi32>
    %cst_29 = arith.constant -1.000000e+30 : f32
    %75 = vector.broadcast %cst_29 : f32 to vector<8x8xf32>
    %76 = arith.select %74, %71, %75 : vector<8x8xi1>, vector<8x8xf32>
    %cst_30 = arith.constant dense<0xFF800000> : vector<8xf32>
    %77 = vector.multi_reduction <maximumf>, %76, %cst_30 [1] : vector<8x8xf32> to vector<8xf32>
    %78 = vector.shape_cast %77 : vector<8xf32> to vector<8x1xf32>
    %79 = vector.broadcast %78 : vector<8x1xf32> to vector<8x8xf32>
    %80 = arith.subf %76, %79 : vector<8x8xf32>
    %81 = math.exp %80 : vector<8x8xf32>
    %cst_31 = arith.constant dense<0.000000e+00> : vector<8xf32>
    %82 = vector.multi_reduction <add>, %81, %cst_31 [1] : vector<8x8xf32> to vector<8xf32>
    %83 = vector.shape_cast %82 : vector<8xf32> to vector<8x1xf32>
    %84 = tpu.reciprocal %83 {approx = true} : vector<8x1xf32> -> vector<8x1xf32>
    %85 = vector.broadcast %84 : vector<8x1xf32> to vector<8x8xf32>
    %86 = arith.mulf %81, %85 : vector<8x8xf32>
    %cst_32 = arith.constant dense<0.000000e+00> : vector<8x8xf32>
    %87 = tpu.matmul %86, %68, %cst_32 {dimension_numbers = #tpu.dot_dimension_numbers<[1], [0], [0], [1], [0, 0, 1, 1], [], []>} : vector<8x8xf32>, vector<8x8xf32>, vector<8x8xf32> -> vector<8x8xf32>
    %88 = arith.truncf %87 : vector<8x8xf32> to vector<8x8xbf16>
    %c16 = arith.constant 16 : index
    %c0_33 = arith.constant 0 : index
    %89 = vector.load %arg5[%c16, %c0_33] : memref<32x32xbf16, #tpu.memory_space<vmem>>, vector<8x32xbf16>
    %cst_34 = arith.constant dense<0.000000e+00> : vector<8x32xf32>
    %90 = tpu.matmul %88, %89, %cst_34 {dimension_numbers = #tpu.dot_dimension_numbers<[1], [0], [0], [1], [0, 0, 1, 1], [], []>} : vector<8x8xbf16>, vector<8x32xbf16>, vector<8x32xf32> -> vector<8x32xf32>
    %91 = arith.addf %65, %90 : vector<8x32xf32>
    %92 = vector.extract_strided_slice %10 {offsets = [0, 24], sizes = [8, 8], strides = [1, 1]} : vector<8x32xf32> to vector<8x8xf32>
    %93 = vector.extract_strided_slice %11 {offsets = [0, 24], sizes = [8, 8], strides = [1, 1]} : vector<8x32xf32> to vector<8x8xf32>
    %94 = vector.extract_strided_slice %12 {offsets = [0, 24], sizes = [8, 8], strides = [1, 1]} : vector<8x32xf32> to vector<8x8xf32>
    %cst_35 = arith.constant dense<0.000000e+00> : vector<8x8xf32>
    %95 = tpu.matmul %92, %93, %cst_35 {dimension_numbers = #tpu.dot_dimension_numbers<[1], [1], [0], [0], [0, 0, 1, 0], [], []>} : vector<8x8xf32>, vector<8x8xf32>, vector<8x8xf32> -> vector<8x8xf32>
    %cst_36 = arith.constant 0.353553385 : f32
    %96 = vector.broadcast %cst_36 : f32 to vector<8x8xf32>
    %97 = arith.mulf %95, %96 : vector<8x8xf32>
    %98 = tpu.iota {dimensions = array<i32: 0>} : vector<8x8xi32>
    %99 = tpu.iota {dimensions = array<i32: 1>} : vector<8x8xi32>
    %100 = arith.cmpi sle, %99, %98 : vector<8x8xi32>
    %cst_37 = arith.constant -1.000000e+30 : f32
    %101 = vector.broadcast %cst_37 : f32 to vector<8x8xf32>
    %102 = arith.select %100, %97, %101 : vector<8x8xi1>, vector<8x8xf32>
    %cst_38 = arith.constant dense<0xFF800000> : vector<8xf32>
    %103 = vector.multi_reduction <maximumf>, %102, %cst_38 [1] : vector<8x8xf32> to vector<8xf32>
    %104 = vector.shape_cast %103 : vector<8xf32> to vector<8x1xf32>
    %105 = vector.broadcast %104 : vector<8x1xf32> to vector<8x8xf32>
    %106 = arith.subf %102, %105 : vector<8x8xf32>
    %107 = math.exp %106 : vector<8x8xf32>
    %cst_39 = arith.constant dense<0.000000e+00> : vector<8xf32>
    %108 = vector.multi_reduction <add>, %107, %cst_39 [1] : vector<8x8xf32> to vector<8xf32>
    %109 = vector.shape_cast %108 : vector<8xf32> to vector<8x1xf32>
    %110 = tpu.reciprocal %109 {approx = true} : vector<8x1xf32> -> vector<8x1xf32>
    %111 = vector.broadcast %110 : vector<8x1xf32> to vector<8x8xf32>
    %112 = arith.mulf %107, %111 : vector<8x8xf32>
    %cst_40 = arith.constant dense<0.000000e+00> : vector<8x8xf32>
    %113 = tpu.matmul %112, %94, %cst_40 {dimension_numbers = #tpu.dot_dimension_numbers<[1], [0], [0], [1], [0, 0, 1, 1], [], []>} : vector<8x8xf32>, vector<8x8xf32>, vector<8x8xf32> -> vector<8x8xf32>
    %114 = arith.truncf %113 : vector<8x8xf32> to vector<8x8xbf16>
    %c24 = arith.constant 24 : index
    %c0_41 = arith.constant 0 : index
    %115 = vector.load %arg5[%c24, %c0_41] : memref<32x32xbf16, #tpu.memory_space<vmem>>, vector<8x32xbf16>
    %cst_42 = arith.constant dense<0.000000e+00> : vector<8x32xf32>
    %116 = tpu.matmul %114, %115, %cst_42 {dimension_numbers = #tpu.dot_dimension_numbers<[1], [0], [0], [1], [0, 0, 1, 1], [], []>} : vector<8x8xbf16>, vector<8x32xbf16>, vector<8x32xf32> -> vector<8x32xf32>
    %117 = arith.addf %91, %116 : vector<8x32xf32>
    %c0_43 = arith.constant 0 : index
    %c0_44 = arith.constant 0 : index
    %118 = vector.load %arg6[%c0_43, %c0_44] : memref<1x32xf32, #tpu.memory_space<vmem>>, vector<1x32xf32>
    %119 = vector.broadcast %118 : vector<1x32xf32> to vector<8x32xf32>
    %120 = arith.addf %117, %119 : vector<8x32xf32>
    %121 = arith.addf %1, %120 : vector<8x32xf32>
    %c0_45 = arith.constant 0 : index
    %c0_46 = arith.constant 0 : index
    %122 = vector.load %arg7[%c0_45, %c0_46] : memref<1x32xf32, #tpu.memory_space<vmem>>, vector<1x32xf32>
    %c0_47 = arith.constant 0 : index
    %c0_48 = arith.constant 0 : index
    %123 = vector.load %arg8[%c0_47, %c0_48] : memref<1x32xf32, #tpu.memory_space<vmem>>, vector<1x32xf32>
    %cst_49 = arith.constant dense<0.000000e+00> : vector<8xf32>
    %124 = vector.multi_reduction <add>, %121, %cst_49 [1] : vector<8x32xf32> to vector<8xf32>
    %125 = vector.shape_cast %124 : vector<8xf32> to vector<8x1xf32>
    %cst_50 = arith.constant 3.200000e+01 : f32
    %126 = vector.broadcast %cst_50 : f32 to vector<8x1xf32>
    %127 = arith.divf %125, %126 : vector<8x1xf32>
    %128 = vector.broadcast %127 : vector<8x1xf32> to vector<8x32xf32>
    %129 = arith.subf %121, %128 : vector<8x32xf32>
    %130 = arith.mulf %129, %129 : vector<8x32xf32>
    %cst_51 = arith.constant dense<0.000000e+00> : vector<8xf32>
    %131 = vector.multi_reduction <add>, %130, %cst_51 [1] : vector<8x32xf32> to vector<8xf32>
    %132 = vector.shape_cast %131 : vector<8xf32> to vector<8x1xf32>
    %cst_52 = arith.constant 3.200000e+01 : f32
    %133 = vector.broadcast %cst_52 : f32 to vector<8x1xf32>
    %134 = arith.divf %132, %133 : vector<8x1xf32>
    %cst_53 = arith.constant 9.99999974E-6 : f32
    %135 = vector.broadcast %cst_53 : f32 to vector<8x1xf32>
    %136 = arith.addf %134, %135 : vector<8x1xf32>
    %137 = math.rsqrt %136 : vector<8x1xf32>
    %138 = vector.broadcast %137 : vector<8x1xf32> to vector<8x32xf32>
    %139 = arith.mulf %129, %138 : vector<8x32xf32>
    %140 = vector.broadcast %122 : vector<1x32xf32> to vector<8x32xf32>
    %141 = arith.mulf %139, %140 : vector<8x32xf32>
    %142 = vector.broadcast %123 : vector<1x32xf32> to vector<8x32xf32>
    %143 = arith.addf %141, %142 : vector<8x32xf32>
    %144 = arith.truncf %143 : vector<8x32xf32> to vector<8x32xbf16>
    %c0_54 = arith.constant 0 : index
    %c0_55 = arith.constant 0 : index
    %145 = vector.load %arg9[%c0_54, %c0_55] : memref<32x96xbf16, #tpu.memory_space<vmem>>, vector<32x32xbf16>
    %cst_56 = arith.constant dense<0.000000e+00> : vector<8x32xf32>
    %146 = tpu.matmul %144, %145, %cst_56 {dimension_numbers = #tpu.dot_dimension_numbers<[1], [0], [0], [1], [0, 0, 1, 1], [], []>} : vector<8x32xbf16>, vector<32x32xbf16>, vector<8x32xf32> -> vector<8x32xf32>
    %c0_57 = arith.constant 0 : index
    %c0_58 = arith.constant 0 : index
    %147 = vector.load %arg10[%c0_57, %c0_58] : memref<1x96xf32, #tpu.memory_space<vmem>>, vector<1x32xf32>
    %148 = vector.broadcast %147 : vector<1x32xf32> to vector<8x32xf32>
    %149 = arith.addf %146, %148 : vector<8x32xf32>
    %150 = arith.truncf %3 : vector<10x32xf32> to vector<10x32xbf16>
    %c0_59 = arith.constant 0 : index
    %c32 = arith.constant 32 : index
    %151 = vector.load %arg9[%c0_59, %c32] : memref<32x96xbf16, #tpu.memory_space<vmem>>, vector<32x64xbf16>
    %cst_60 = arith.constant dense<0.000000e+00> : vector<10x64xf32>
    %152 = tpu.matmul %150, %151, %cst_60 {dimension_numbers = #tpu.dot_dimension_numbers<[1], [0], [0], [1], [0, 0, 1, 1], [], []>} : vector<10x32xbf16>, vector<32x64xbf16>, vector<10x64xf32> -> vector<10x64xf32>
    %c0_61 = arith.constant 0 : index
    %c32_62 = arith.constant 32 : index
    %153 = vector.load %arg10[%c0_61, %c32_62] : memref<1x96xf32, #tpu.memory_space<vmem>>, vector<1x64xf32>
    %154 = vector.broadcast %153 : vector<1x64xf32> to vector<10x64xf32>
    %155 = arith.addf %152, %154 : vector<10x64xf32>
    %156 = vector.extract_strided_slice %155 {offsets = [0, 0], sizes = [10, 32], strides = [1, 1]} : vector<10x64xf32> to vector<10x32xf32>
    %157 = vector.extract_strided_slice %155 {offsets = [0, 32], sizes = [10, 32], strides = [1, 1]} : vector<10x64xf32> to vector<10x32xf32>
    %cst_63 = arith.constant 0.000000e+00 : f32
    %158 = vector.broadcast %cst_63 : f32 to vector<8x32xf32>
    %159 = vector.extract_strided_slice %149 {offsets = [0, 0], sizes = [8, 8], strides = [1, 1]} : vector<8x32xf32> to vector<8x8xf32>
    %160 = vector.extract_strided_slice %156 {offsets = [0, 0], sizes = [10, 8], strides = [1, 1]} : vector<10x32xf32> to vector<10x8xf32>
    %161 = vector.extract_strided_slice %157 {offsets = [0, 0], sizes = [10, 8], strides = [1, 1]} : vector<10x32xf32> to vector<10x8xf32>
    %cst_64 = arith.constant dense<0.000000e+00> : vector<8x10xf32>
    %162 = tpu.matmul %159, %160, %cst_64 {dimension_numbers = #tpu.dot_dimension_numbers<[1], [1], [0], [0], [0, 0, 1, 0], [], []>} : vector<8x8xf32>, vector<10x8xf32>, vector<8x10xf32> -> vector<8x10xf32>
    %cst_65 = arith.constant 0.353553385 : f32
    %163 = vector.broadcast %cst_65 : f32 to vector<8x10xf32>
    %164 = arith.mulf %162, %163 : vector<8x10xf32>
    %cst_66 = arith.constant dense<0xFF800000> : vector<8xf32>
    %165 = vector.multi_reduction <maximumf>, %164, %cst_66 [1] : vector<8x10xf32> to vector<8xf32>
    %166 = vector.shape_cast %165 : vector<8xf32> to vector<8x1xf32>
    %167 = vector.broadcast %166 : vector<8x1xf32> to vector<8x10xf32>
    %168 = arith.subf %164, %167 : vector<8x10xf32>
    %169 = math.exp %168 : vector<8x10xf32>
    %cst_67 = arith.constant dense<0.000000e+00> : vector<8xf32>
    %170 = vector.multi_reduction <add>, %169, %cst_67 [1] : vector<8x10xf32> to vector<8xf32>
    %171 = vector.shape_cast %170 : vector<8xf32> to vector<8x1xf32>
    %172 = tpu.reciprocal %171 {approx = true} : vector<8x1xf32> -> vector<8x1xf32>
    %173 = vector.broadcast %172 : vector<8x1xf32> to vector<8x10xf32>
    %174 = arith.mulf %169, %173 : vector<8x10xf32>
    %cst_68 = arith.constant dense<0.000000e+00> : vector<8x8xf32>
    %175 = tpu.matmul %174, %161, %cst_68 {dimension_numbers = #tpu.dot_dimension_numbers<[1], [0], [0], [1], [0, 0, 1, 1], [], []>} : vector<8x10xf32>, vector<10x8xf32>, vector<8x8xf32> -> vector<8x8xf32>
    %176 = arith.truncf %175 : vector<8x8xf32> to vector<8x8xbf16>
    %c0_69 = arith.constant 0 : index
    %c0_70 = arith.constant 0 : index
    %177 = vector.load %arg11[%c0_69, %c0_70] : memref<32x32xbf16, #tpu.memory_space<vmem>>, vector<8x32xbf16>
    %cst_71 = arith.constant dense<0.000000e+00> : vector<8x32xf32>
    %178 = tpu.matmul %176, %177, %cst_71 {dimension_numbers = #tpu.dot_dimension_numbers<[1], [0], [0], [1], [0, 0, 1, 1], [], []>} : vector<8x8xbf16>, vector<8x32xbf16>, vector<8x32xf32> -> vector<8x32xf32>
    %179 = arith.addf %158, %178 : vector<8x32xf32>
    %180 = vector.extract_strided_slice %149 {offsets = [0, 8], sizes = [8, 8], strides = [1, 1]} : vector<8x32xf32> to vector<8x8xf32>
    %181 = vector.extract_strided_slice %156 {offsets = [0, 8], sizes = [10, 8], strides = [1, 1]} : vector<10x32xf32> to vector<10x8xf32>
    %182 = vector.extract_strided_slice %157 {offsets = [0, 8], sizes = [10, 8], strides = [1, 1]} : vector<10x32xf32> to vector<10x8xf32>
    %cst_72 = arith.constant dense<0.000000e+00> : vector<8x10xf32>
    %183 = tpu.matmul %180, %181, %cst_72 {dimension_numbers = #tpu.dot_dimension_numbers<[1], [1], [0], [0], [0, 0, 1, 0], [], []>} : vector<8x8xf32>, vector<10x8xf32>, vector<8x10xf32> -> vector<8x10xf32>
    %cst_73 = arith.constant 0.353553385 : f32
    %184 = vector.broadcast %cst_73 : f32 to vector<8x10xf32>
    %185 = arith.mulf %183, %184 : vector<8x10xf32>
    %cst_74 = arith.constant dense<0xFF800000> : vector<8xf32>
    %186 = vector.multi_reduction <maximumf>, %185, %cst_74 [1] : vector<8x10xf32> to vector<8xf32>
    %187 = vector.shape_cast %186 : vector<8xf32> to vector<8x1xf32>
    %188 = vector.broadcast %187 : vector<8x1xf32> to vector<8x10xf32>
    %189 = arith.subf %185, %188 : vector<8x10xf32>
    %190 = math.exp %189 : vector<8x10xf32>
    %cst_75 = arith.constant dense<0.000000e+00> : vector<8xf32>
    %191 = vector.multi_reduction <add>, %190, %cst_75 [1] : vector<8x10xf32> to vector<8xf32>
    %192 = vector.shape_cast %191 : vector<8xf32> to vector<8x1xf32>
    %193 = tpu.reciprocal %192 {approx = true} : vector<8x1xf32> -> vector<8x1xf32>
    %194 = vector.broadcast %193 : vector<8x1xf32> to vector<8x10xf32>
    %195 = arith.mulf %190, %194 : vector<8x10xf32>
    %cst_76 = arith.constant dense<0.000000e+00> : vector<8x8xf32>
    %196 = tpu.matmul %195, %182, %cst_76 {dimension_numbers = #tpu.dot_dimension_numbers<[1], [0], [0], [1], [0, 0, 1, 1], [], []>} : vector<8x10xf32>, vector<10x8xf32>, vector<8x8xf32> -> vector<8x8xf32>
    %197 = arith.truncf %196 : vector<8x8xf32> to vector<8x8xbf16>
    %c8_77 = arith.constant 8 : index
    %c0_78 = arith.constant 0 : index
    %198 = vector.load %arg11[%c8_77, %c0_78] : memref<32x32xbf16, #tpu.memory_space<vmem>>, vector<8x32xbf16>
    %cst_79 = arith.constant dense<0.000000e+00> : vector<8x32xf32>
    %199 = tpu.matmul %197, %198, %cst_79 {dimension_numbers = #tpu.dot_dimension_numbers<[1], [0], [0], [1], [0, 0, 1, 1], [], []>} : vector<8x8xbf16>, vector<8x32xbf16>, vector<8x32xf32> -> vector<8x32xf32>
    %200 = arith.addf %179, %199 : vector<8x32xf32>
    %201 = vector.extract_strided_slice %149 {offsets = [0, 16], sizes = [8, 8], strides = [1, 1]} : vector<8x32xf32> to vector<8x8xf32>
    %202 = vector.extract_strided_slice %156 {offsets = [0, 16], sizes = [10, 8], strides = [1, 1]} : vector<10x32xf32> to vector<10x8xf32>
    %203 = vector.extract_strided_slice %157 {offsets = [0, 16], sizes = [10, 8], strides = [1, 1]} : vector<10x32xf32> to vector<10x8xf32>
    %cst_80 = arith.constant dense<0.000000e+00> : vector<8x10xf32>
    %204 = tpu.matmul %201, %202, %cst_80 {dimension_numbers = #tpu.dot_dimension_numbers<[1], [1], [0], [0], [0, 0, 1, 0], [], []>} : vector<8x8xf32>, vector<10x8xf32>, vector<8x10xf32> -> vector<8x10xf32>
    %cst_81 = arith.constant 0.353553385 : f32
    %205 = vector.broadcast %cst_81 : f32 to vector<8x10xf32>
    %206 = arith.mulf %204, %205 : vector<8x10xf32>
    %cst_82 = arith.constant dense<0xFF800000> : vector<8xf32>
    %207 = vector.multi_reduction <maximumf>, %206, %cst_82 [1] : vector<8x10xf32> to vector<8xf32>
    %208 = vector.shape_cast %207 : vector<8xf32> to vector<8x1xf32>
    %209 = vector.broadcast %208 : vector<8x1xf32> to vector<8x10xf32>
    %210 = arith.subf %206, %209 : vector<8x10xf32>
    %211 = math.exp %210 : vector<8x10xf32>
    %cst_83 = arith.constant dense<0.000000e+00> : vector<8xf32>
    %212 = vector.multi_reduction <add>, %211, %cst_83 [1] : vector<8x10xf32> to vector<8xf32>
    %213 = vector.shape_cast %212 : vector<8xf32> to vector<8x1xf32>
    %214 = tpu.reciprocal %213 {approx = true} : vector<8x1xf32> -> vector<8x1xf32>
    %215 = vector.broadcast %214 : vector<8x1xf32> to vector<8x10xf32>
    %216 = arith.mulf %211, %215 : vector<8x10xf32>
    %cst_84 = arith.constant dense<0.000000e+00> : vector<8x8xf32>
    %217 = tpu.matmul %216, %203, %cst_84 {dimension_numbers = #tpu.dot_dimension_numbers<[1], [0], [0], [1], [0, 0, 1, 1], [], []>} : vector<8x10xf32>, vector<10x8xf32>, vector<8x8xf32> -> vector<8x8xf32>
    %218 = arith.truncf %217 : vector<8x8xf32> to vector<8x8xbf16>
    %c16_85 = arith.constant 16 : index
    %c0_86 = arith.constant 0 : index
    %219 = vector.load %arg11[%c16_85, %c0_86] : memref<32x32xbf16, #tpu.memory_space<vmem>>, vector<8x32xbf16>
    %cst_87 = arith.constant dense<0.000000e+00> : vector<8x32xf32>
    %220 = tpu.matmul %218, %219, %cst_87 {dimension_numbers = #tpu.dot_dimension_numbers<[1], [0], [0], [1], [0, 0, 1, 1], [], []>} : vector<8x8xbf16>, vector<8x32xbf16>, vector<8x32xf32> -> vector<8x32xf32>
    %221 = arith.addf %200, %220 : vector<8x32xf32>
    %222 = vector.extract_strided_slice %149 {offsets = [0, 24], sizes = [8, 8], strides = [1, 1]} : vector<8x32xf32> to vector<8x8xf32>
    %223 = vector.extract_strided_slice %156 {offsets = [0, 24], sizes = [10, 8], strides = [1, 1]} : vector<10x32xf32> to vector<10x8xf32>
    %224 = vector.extract_strided_slice %157 {offsets = [0, 24], sizes = [10, 8], strides = [1, 1]} : vector<10x32xf32> to vector<10x8xf32>
    %cst_88 = arith.constant dense<0.000000e+00> : vector<8x10xf32>
    %225 = tpu.matmul %222, %223, %cst_88 {dimension_numbers = #tpu.dot_dimension_numbers<[1], [1], [0], [0], [0, 0, 1, 0], [], []>} : vector<8x8xf32>, vector<10x8xf32>, vector<8x10xf32> -> vector<8x10xf32>
    %cst_89 = arith.constant 0.353553385 : f32
    %226 = vector.broadcast %cst_89 : f32 to vector<8x10xf32>
    %227 = arith.mulf %225, %226 : vector<8x10xf32>
    %cst_90 = arith.constant dense<0xFF800000> : vector<8xf32>
    %228 = vector.multi_reduction <maximumf>, %227, %cst_90 [1] : vector<8x10xf32> to vector<8xf32>
    %229 = vector.shape_cast %228 : vector<8xf32> to vector<8x1xf32>
    %230 = vector.broadcast %229 : vector<8x1xf32> to vector<8x10xf32>
    %231 = arith.subf %227, %230 : vector<8x10xf32>
    %232 = math.exp %231 : vector<8x10xf32>
    %cst_91 = arith.constant dense<0.000000e+00> : vector<8xf32>
    %233 = vector.multi_reduction <add>, %232, %cst_91 [1] : vector<8x10xf32> to vector<8xf32>
    %234 = vector.shape_cast %233 : vector<8xf32> to vector<8x1xf32>
    %235 = tpu.reciprocal %234 {approx = true} : vector<8x1xf32> -> vector<8x1xf32>
    %236 = vector.broadcast %235 : vector<8x1xf32> to vector<8x10xf32>
    %237 = arith.mulf %232, %236 : vector<8x10xf32>
    %cst_92 = arith.constant dense<0.000000e+00> : vector<8x8xf32>
    %238 = tpu.matmul %237, %224, %cst_92 {dimension_numbers = #tpu.dot_dimension_numbers<[1], [0], [0], [1], [0, 0, 1, 1], [], []>} : vector<8x10xf32>, vector<10x8xf32>, vector<8x8xf32> -> vector<8x8xf32>
    %239 = arith.truncf %238 : vector<8x8xf32> to vector<8x8xbf16>
    %c24_93 = arith.constant 24 : index
    %c0_94 = arith.constant 0 : index
    %240 = vector.load %arg11[%c24_93, %c0_94] : memref<32x32xbf16, #tpu.memory_space<vmem>>, vector<8x32xbf16>
    %cst_95 = arith.constant dense<0.000000e+00> : vector<8x32xf32>
    %241 = tpu.matmul %239, %240, %cst_95 {dimension_numbers = #tpu.dot_dimension_numbers<[1], [0], [0], [1], [0, 0, 1, 1], [], []>} : vector<8x8xbf16>, vector<8x32xbf16>, vector<8x32xf32> -> vector<8x32xf32>
    %242 = arith.addf %221, %241 : vector<8x32xf32>
    %c0_96 = arith.constant 0 : index
    %c0_97 = arith.constant 0 : index
    %243 = vector.load %arg12[%c0_96, %c0_97] : memref<1x32xf32, #tpu.memory_space<vmem>>, vector<1x32xf32>
    %244 = vector.broadcast %243 : vector<1x32xf32> to vector<8x32xf32>
    %245 = arith.addf %242, %244 : vector<8x32xf32>
    %246 = arith.addf %143, %245 : vector<8x32xf32>
    %c0_98 = arith.constant 0 : index
    %c0_99 = arith.constant 0 : index
    %247 = vector.load %arg13[%c0_98, %c0_99] : memref<1x32xf32, #tpu.memory_space<vmem>>, vector<1x32xf32>
    %c0_100 = arith.constant 0 : index
    %c0_101 = arith.constant 0 : index
    %248 = vector.load %arg14[%c0_100, %c0_101] : memref<1x32xf32, #tpu.memory_space<vmem>>, vector<1x32xf32>
    %cst_102 = arith.constant dense<0.000000e+00> : vector<8xf32>
    %249 = vector.multi_reduction <add>, %246, %cst_102 [1] : vector<8x32xf32> to vector<8xf32>
    %250 = vector.shape_cast %249 : vector<8xf32> to vector<8x1xf32>
    %cst_103 = arith.constant 3.200000e+01 : f32
    %251 = vector.broadcast %cst_103 : f32 to vector<8x1xf32>
    %252 = arith.divf %250, %251 : vector<8x1xf32>
    %253 = vector.broadcast %252 : vector<8x1xf32> to vector<8x32xf32>
    %254 = arith.subf %246, %253 : vector<8x32xf32>
    %255 = arith.mulf %254, %254 : vector<8x32xf32>
    %cst_104 = arith.constant dense<0.000000e+00> : vector<8xf32>
    %256 = vector.multi_reduction <add>, %255, %cst_104 [1] : vector<8x32xf32> to vector<8xf32>
    %257 = vector.shape_cast %256 : vector<8xf32> to vector<8x1xf32>
    %cst_105 = arith.constant 3.200000e+01 : f32
    %258 = vector.broadcast %cst_105 : f32 to vector<8x1xf32>
    %259 = arith.divf %257, %258 : vector<8x1xf32>
    %cst_106 = arith.constant 9.99999974E-6 : f32
    %260 = vector.broadcast %cst_106 : f32 to vector<8x1xf32>
    %261 = arith.addf %259, %260 : vector<8x1xf32>
    %262 = math.rsqrt %261 : vector<8x1xf32>
    %263 = vector.broadcast %262 : vector<8x1xf32> to vector<8x32xf32>
    %264 = arith.mulf %254, %263 : vector<8x32xf32>
    %265 = vector.broadcast %247 : vector<1x32xf32> to vector<8x32xf32>
    %266 = arith.mulf %264, %265 : vector<8x32xf32>
    %267 = vector.broadcast %248 : vector<1x32xf32> to vector<8x32xf32>
    %268 = arith.addf %266, %267 : vector<8x32xf32>
    %269 = arith.truncf %268 : vector<8x32xf32> to vector<8x32xbf16>
    %c0_107 = arith.constant 0 : index
    %c0_108 = arith.constant 0 : index
    %270 = vector.load %arg15[%c0_107, %c0_108] : memref<32x128xbf16, #tpu.memory_space<vmem>>, vector<32x128xbf16>
    %cst_109 = arith.constant dense<0.000000e+00> : vector<8x128xf32>
    %271 = tpu.matmul %269, %270, %cst_109 {dimension_numbers = #tpu.dot_dimension_numbers<[1], [0], [0], [1], [0, 0, 1, 1], [], []>} : vector<8x32xbf16>, vector<32x128xbf16>, vector<8x128xf32> -> vector<8x128xf32>
    %c0_110 = arith.constant 0 : index
    %c0_111 = arith.constant 0 : index
    %272 = vector.load %arg16[%c0_110, %c0_111] : memref<1x128xf32, #tpu.memory_space<vmem>>, vector<1x128xf32>
    %273 = vector.broadcast %272 : vector<1x128xf32> to vector<8x128xf32>
    %274 = arith.addf %271, %273 : vector<8x128xf32>
    %cst_112 = arith.constant 0.000000e+00 : f32
    %275 = vector.broadcast %cst_112 : f32 to vector<8x128xf32>
    %276 = arith.maximumf %274, %275 : vector<8x128xf32>
    %277 = arith.truncf %276 : vector<8x128xf32> to vector<8x128xbf16>
    %c0_113 = arith.constant 0 : index
    %c0_114 = arith.constant 0 : index
    %278 = vector.load %arg17[%c0_113, %c0_114] : memref<128x32xbf16, #tpu.memory_space<vmem>>, vector<128x32xbf16>
    %cst_115 = arith.constant dense<0.000000e+00> : vector<8x32xf32>
    %279 = tpu.matmul %277, %278, %cst_115 {dimension_numbers = #tpu.dot_dimension_numbers<[1], [0], [0], [1], [0, 0, 1, 1], [], []>} : vector<8x128xbf16>, vector<128x32xbf16>, vector<8x32xf32> -> vector<8x32xf32>
    %c0_116 = arith.constant 0 : index
    %c0_117 = arith.constant 0 : index
    %280 = vector.load %arg18[%c0_116, %c0_117] : memref<1x32xf32, #tpu.memory_space<vmem>>, vector<1x32xf32>
    %281 = vector.broadcast %280 : vector<1x32xf32> to vector<8x32xf32>
    %282 = arith.addf %279, %281 : vector<8x32xf32>
    %283 = arith.addf %268, %282 : vector<8x32xf32>
    %c0_118 = arith.constant 0 : index
    %c0_119 = arith.constant 0 : index
    %284 = vector.load %arg19[%c0_118, %c0_119] : memref<1x32xf32, #tpu.memory_space<vmem>>, vector<1x32xf32>
    %c0_120 = arith.constant 0 : index
    %c0_121 = arith.constant 0 : index
    %285 = vector.load %arg20[%c0_120, %c0_121] : memref<1x32xf32, #tpu.memory_space<vmem>>, vector<1x32xf32>
    %cst_122 = arith.constant dense<0.000000e+00> : vector<8xf32>
    %286 = vector.multi_reduction <add>, %283, %cst_122 [1] : vector<8x32xf32> to vector<8xf32>
    %287 = vector.shape_cast %286 : vector<8xf32> to vector<8x1xf32>
    %cst_123 = arith.constant 3.200000e+01 : f32
    %288 = vector.broadcast %cst_123 : f32 to vector<8x1xf32>
    %289 = arith.divf %287, %288 : vector<8x1xf32>
    %290 = vector.broadcast %289 : vector<8x1xf32> to vector<8x32xf32>
    %291 = arith.subf %283, %290 : vector<8x32xf32>
    %292 = arith.mulf %291, %291 : vector<8x32xf32>
    %cst_124 = arith.constant dense<0.000000e+00> : vector<8xf32>
    %293 = vector.multi_reduction <add>, %292, %cst_124 [1] : vector<8x32xf32> to vector<8xf32>
    %294 = vector.shape_cast %293 : vector<8xf32> to vector<8x1xf32>
    %cst_125 = arith.constant 3.200000e+01 : f32
    %295 = vector.broadcast %cst_125 : f32 to vector<8x1xf32>
    %296 = arith.divf %294, %295 : vector<8x1xf32>
    %cst_126 = arith.constant 9.99999974E-6 : f32
    %297 = vector.broadcast %cst_126 : f32 to vector<8x1xf32>
    %298 = arith.addf %296, %297 : vector<8x1xf32>
    %299 = math.rsqrt %298 : vector<8x1xf32>
    %300 = vector.broadcast %299 : vector<8x1xf32> to vector<8x32xf32>
    %301 = arith.mulf %291, %300 : vector<8x32xf32>
    %302 = vector.broadcast %284 : vector<1x32xf32> to vector<8x32xf32>
    %303 = arith.mulf %301, %302 : vector<8x32xf32>
    %304 = vector.broadcast %285 : vector<1x32xf32> to vector<8x32xf32>
    %305 = arith.addf %303, %304 : vector<8x32xf32>
    %c0_127 = arith.constant 0 : index
    %c0_128 = arith.constant 0 : index
    %c0_129 = arith.constant 0 : index
    %306 = vector.load %arg21[%c0_127, %c0_128, %c0_129] : memref<1x8x32xf32, #tpu.memory_space<vmem>>, vector<1x8x32xf32>
    %307 = vector.shape_cast %306 : vector<1x8x32xf32> to vector<8x32xf32>
    %308 = vector.shape_cast %305 : vector<8x32xf32> to vector<1x8x32xf32>
    tpu.vector_store %arg21[%c0_127, %c0_128, %c0_129], %308 {strides = array<i32>} : memref<1x8x32xf32, #tpu.memory_space<vmem>>, vector<1x8x32xf32>,
    return
  }
  func.func @transform_0(%arg0: i32) -> (i32, i32, i32) {
    %c0_i32 = arith.constant 0 : i32
    %c0_i32_0 = arith.constant 0 : i32
    %c0_i32_1 = arith.constant 0 : i32
    return %arg0, %c0_i32, %c0_i32_0 : i32, i32, i32
  }
  func.func @transform_1(%arg0: i32) -> (i32, i32, i32) {
    %c0_i32 = arith.constant 0 : i32
    %c0_i32_0 = arith.constant 0 : i32
    %c0_i32_1 = arith.constant 0 : i32
    return %arg0, %c0_i32, %c0_i32_0 : i32, i32, i32
  }
  func.func @transform_2(%arg0: i32) -> (i32, i32) {
    %c0_i32 = arith.constant 0 : i32
    %c0_i32_0 = arith.constant 0 : i32
    %c0_i32_1 = arith.constant 0 : i32
    return %c0_i32, %c0_i32_0 : i32, i32
  }
  func.func @transform_3(%arg0: i32) -> (i32, i32) {
    %c0_i32 = arith.constant 0 : i32
    %c0_i32_0 = arith.constant 0 : i32
    %c0_i32_1 = arith.constant 0 : i32
    return %c0_i32, %c0_i32_0 : i32, i32
  }
  func.func @transform_4(%arg0: i32) -> (i32, i32) {
    %c0_i32 = arith.constant 0 : i32
    %c0_i32_0 = arith.constant 0 : i32
    %c0_i32_1 = arith.constant 0 : i32
    return %c0_i32, %c0_i32_0 : i32, i32
  }
  func.func @transform_5(%arg0: i32) -> (i32, i32) {
    %c0_i32 = arith.constant 0 : i32
    %c0_i32_0 = arith.constant 0 : i32
    %c0_i32_1 = arith.constant 0 : i32
    return %c0_i32, %c0_i32_0 : i32, i32
  }
  func.func @transform_6(%arg0: i32) -> (i32, i32) {
    %c0_i32 = arith.constant 0 : i32
    %c0_i32_0 = arith.constant 0 : i32
    %c0_i32_1 = arith.constant 0 : i32
    return %c0_i32, %c0_i32_0 : i32, i32
  }
  func.func @transform_7(%arg0: i32) -> (i32, i32) {
    %c0_i32 = arith.constant 0 : i32
    %c0_i32_0 = arith.constant 0 : i32
    %c0_i32_1 = arith.constant 0 : i32
    return %c0_i32, %c0_i32_0 : i32, i32
  }
  func.func @transform_8(%arg0: i32) -> (i32, i32) {
    %c0_i32 = arith.constant 0 : i32
    %c0_i32_0 = arith.constant 0 : i32
    %c0_i32_1 = arith.constant 0 : i32
    return %c0_i32, %c0_i32_0 : i32, i32
  }
  func.func @transform_9(%arg0: i32) -> (i32, i32) {
    %c0_i32 = arith.constant 0 : i32
    %c0_i32_0 = arith.constant 0 : i32
    %c0_i32_1 = arith.constant 0 : i32
    return %c0_i32, %c0_i32_0 : i32, i32
  }
  func.func @transform_10(%arg0: i32) -> (i32, i32) {
    %c0_i32 = arith.constant 0 : i32
    %c0_i32_0 = arith.constant 0 : i32
    %c0_i32_1 = arith.constant 0 : i32
    return %c0_i32, %c0_i32_0 : i32, i32
  }
  func.func @transform_11(%arg0: i32) -> (i32, i32) {
    %c0_i32 = arith.constant 0 : i32
    %c0_i32_0 = arith.constant 0 : i32
    %c0_i32_1 = arith.constant 0 : i32
    return %c0_i32, %c0_i32_0 : i32, i32
  }
  func.func @transform_12(%arg0: i32) -> (i32, i32) {
    %c0_i32 = arith.constant 0 : i32
    %c0_i32_0 = arith.constant 0 : i32
    %c0_i32_1 = arith.constant 0 : i32
    return %c0_i32, %c0_i32_0 : i32, i32
  }
  func.func @transform_13(%arg0: i32) -> (i32, i32) {
    %c0_i32 = arith.constant 0 : i32
    %c0_i32_0 = arith.constant 0 : i32
    %c0_i32_1 = arith.constant 0 : i32
    return %c0_i32, %c0_i32_0 : i32, i32
  }
  func.func @transform_14(%arg0: i32) -> (i32, i32) {
    %c0_i32 = arith.constant 0 : i32
    %c0_i32_0 = arith.constant 0 : i32
    %c0_i32_1 = arith.constant 0 : i32
    return %c0_i32, %c0_i32_0 : i32, i32
  }
  func.func @transform_15(%arg0: i32) -> (i32, i32) {
    %c0_i32 = arith.constant 0 : i32
    %c0_i32_0 = arith.constant 0 : i32
    %c0_i32_1 = arith.constant 0 : i32
    return %c0_i32, %c0_i32_0 : i32, i32
  }
  func.func @transform_16(%arg0: i32) -> (i32, i32) {
    %c0_i32 = arith.constant 0 : i32
    %c0_i32_0 = arith.constant 0 : i32
    %c0_i32_1 = arith.constant 0 : i32
    return %c0_i32, %c0_i32_0 : i32, i32
  }
  func.func @transform_17(%arg0: i32) -> (i32, i32) {
    %c0_i32 = arith.constant 0 : i32
    %c0_i32_0 = arith.constant 0 : i32
    %c0_i32_1 = arith.constant 0 : i32
    return %c0_i32, %c0_i32_0 : i32, i32
  }
  func.func @transform_18(%arg0: i32) -> (i32, i32) {
    %c0_i32 = arith.constant 0 : i32
    %c0_i32_0 = arith.constant 0 : i32
    %c0_i32_1 = arith.constant 0 : i32
    return %c0_i32, %c0_i32_0 : i32, i32
  }
  func.func @transform_19(%arg0: i32) -> (i32, i32) {
    %c0_i32 = arith.constant 0 : i32
    %c0_i32_0 = arith.constant 0 : i32
    %c0_i32_1 = arith.constant 0 : i32
    return %c0_i32, %c0_i32_0 : i32, i32
  }
  func.func @transform_20(%arg0: i32) -> (i32, i32, i32) {
    %c0_i32 = arith.constant 0 : i32
    %c0_i32_0 = arith.constant 0 : i32
    %c0_i32_1 = arith.constant 0 : i32
    return %arg0, %c0_i32, %c0_i32_0 : i32, i32, i32
  }
}

</mosaic_0001>

<llo_original>
// kernel: _forward_core.5
$region0: #{_forward_core.5}
  #allocation0 [shape = 'u32[]', space=smem, size = 0x4, offset = 0x4, fixed_abs, tag = 'smem constant byte address 0x4 - core index']
  #allocation1 [shape = 'u32[144,128]{1,0:T(1,128)}', space=vmem, size = 0x12000, scoped, tag = 'internal scratch']
  %s0 = inlined_call_operand.vmem [shape: f32[16,32], index: 0, kind: input, shape index: {}]
  %s1 = inlined_call_operand.vmem [shape: bf16[32,128], index: 1, kind: input, shape index: {}]
  %s2 = inlined_call_operand.vmem [shape: f32[1,128], index: 2, kind: input, shape index: {}]
  %s3 = inlined_call_operand.vmem [shape: f32[16,128], index: 3, kind: output, shape index: {}]
  %s4 = sld [smem:[#allocation0]]
  $region22: #{_forward_core.5} parent=0
    _
  %s6 = ssub.s32 1, %s4
  %s7 = scalar_select 0, %s6, %s4
  // Predicated region
  $region2: #{_forward_core.5} parent=0 // pred_check
    _
  $region3: #{_forward_core.5} parent=0 // pred_check_branch
    %9 = sbr.rel (0) target = $region5
  $region4: #{_forward_core.5} parent=0 // pred_region
    _
  $region5: #{_forward_core.5} parent=0 // pred_fallthru
    _
  // Predicated region
  $region6: #{_forward_core.5} parent=0 // pred_check
    _
  $region7: #{_forward_core.5} parent=0 // pred_check_branch
    %11 = sbr.rel (0) target = $region9
  $region8: #{_forward_core.5} parent=0 // pred_region
    _
  $region9: #{_forward_core.5} parent=0 // pred_fallthru
    _
  // Predicated region
  $region10: #{_forward_core.5} parent=0 // pred_check
    _
  $region11: #{_forward_core.5} parent=0 // pred_check_branch
    %13 = sbr.rel (0) target = $region13
  $region12: #{_forward_core.5} parent=0 // pred_region
    _
  $region13: #{_forward_core.5} parent=0 // pred_fallthru
    _
  %v15 = vld [vmem:[%s0] sm:$0xff]
  %v16 = vld [vmem:[%s0 + $0x8] sm:$0xff]
  %v17 = vpack.c.bf16 %v16, %v15
  %v18 = vld [vmem:[%s1] sm:$0xf]
  %v19 = vld [vmem:[%s1 + $0x4] sm:$0xf]
  %v20 = vld [vmem:[%s1 + $0x8] sm:$0xf]
  %v21 = vld [vmem:[%s1 + $0xc] sm:$0xf]
  %v22 = vld [vmem:[%s2] sm:$0x1]
  %v24 = vlaneseq
  %v25 = vshrl.u32 %v24, 7
  %v26 = vsub.s32 0, %v25
  %v27 = vrot.slane %v22, %v26
  %v33 = vunpack.c.l.b16 %v18
  %v34 = vunpack.c.l.b16 %v19
  %v35 = vunpack.c.l.b16 %v20
  %v36 = vunpack.c.l.b16 %v21
  %v37 = vpack.c.b16 %v34, %v33
  %v38 = vpack.c.b16 %v36, %v35
  %vm41 = vcmask 261120
  %v43 = vsel %vm41, %v17, 0
  %45 = vmatprep.subr.bf16.mxu0 0
  %46 = vmatpush1.bf16.msra.mxu0 %v37
  %47 = vmatprep.subr.bf16.mxu0 0
  %48 = vmatpush1.bf16.msra.mxu0 %v38
  %49 = vmatprep.subr.bf16.mxu0 0
  %50 = vmatpush1.bf16.msra.mxu0 0
  %51 = vmatprep.subr.bf16.mxu0 0
  %52 = vmatpush1.bf16.msra.mxu0 0
  %53 = vmatprep.subr.bf16.mxu0 0
  %54 = vmatpush1.bf16.msra.mxu0 0
  %55 = vmatprep.subr.bf16.mxu0 0
  %56 = vmatpush1.bf16.msra.mxu0 0
  %57 = vmatprep.subr.bf16.mxu0 0
  %58 = vmatpush1.bf16.msra.mxu0 0
  %59 = vmatprep.subr.bf16.mxu0 0
  %60 = vmatpush1.bf16.msra.mxu0 0
  %61 = vmatprep.subr.bf16.mxu0 0
  %62 = vmatpush1.bf16.msra.mxu0 0
  %63 = vmatprep.subr.bf16.mxu0 0
  %64 = vmatpush1.bf16.msra.mxu0 0
  %65 = vmatprep.subr.bf16.mxu0 0
  %66 = vmatpush1.bf16.msra.mxu0 0
  %67 = vmatprep.subr.bf16.mxu0 0
  %68 = vmatpush1.bf16.msra.mxu0 0
  %69 = vmatprep.subr.bf16.mxu0 0
  %70 = vmatpush1.bf16.msra.mxu0 0
  %71 = vmatprep.subr.bf16.mxu0 0
  %72 = vmatpush1.bf16.msra.mxu0 0
  %73 = vmatprep.subr.bf16.mxu0 0
  %74 = vmatpush1.bf16.msra.mxu0 0
  %75 = vmatprep.subr.bf16.mxu0 0
  %76 = vmatpush1.bf16.msra.mxu0 0
  %77 = vmatprep.mubr.bf16.mxu0 0
  %78 = vmatmul.mubr.bf16.gmra.mrb[0].mxu0 %v43
  %v79 = vpop.f32.mrb[0].mxu0
  %v80 = vadd.f32 %v27, %v79
  %v81 = vpop.f32.mrb[0].mxu0
  %v82 = vpop.f32.mrb[0].mxu0
  %v83 = vadd.f32 %v27, %v82
  %v84 = vpop.f32.mrb[0].mxu0
  %85 = vdwg.mxu0
  %86 = vst [vmem:[%s3] sm:$0xff] %v80
  %87 = vst [vmem:[%s3 + $0x8] sm:$0xff] %v83
  // Predicated region
  $region14: #{_forward_core.5} parent=0 // pred_check
    _
  $region15: #{_forward_core.5} parent=0 // pred_check_branch
    %89 = sbr.rel (0) target = $region17
  $region16: #{_forward_core.5} parent=0 // pred_region
    _
  $region17: #{_forward_core.5} parent=0 // pred_fallthru
    _
  // Predicated region
  $region18: #{_forward_core.5} parent=0 // pred_check
    _
  $region19: #{_forward_core.5} parent=0 // pred_check_branch
    %91 = sbr.rel (0) target = $region21
  $region20: #{_forward_core.5} parent=0 // pred_region
    _
  $region21: #{_forward_core.5} parent=0 // pred_fallthru
    _

// kernel: _forward_core.3
$region0: #{_forward_core.3}
  #allocation0 [shape = 'u32[]', space=smem, size = 0x4, offset = 0x4, fixed_abs, tag = 'smem constant byte address 0x4 - core index']
  #allocation1 [shape = 'u32[144,128]{1,0:T(1,128)}', space=vmem, size = 0x12000, scoped, tag = 'internal scratch']
  %s0 = inlined_call_operand.vmem [shape: f32[2,8,32], index: 0, kind: input, shape index: {}]
  %s1 = inlined_call_operand.vmem [shape: f32[2,10,32], index: 1, kind: input, shape index: {}]
  %s2 = inlined_call_operand.vmem [shape: bf16[32,96], index: 2, kind: input, shape index: {}]
  %s3 = inlined_call_operand.vmem [shape: f32[1,96], index: 3, kind: input, shape index: {}]
  %s4 = inlined_call_operand.vmem [shape: bf16[32,32], index: 4, kind: input, shape index: {}]
  %s5 = inlined_call_operand.vmem [shape: f32[1,32], index: 5, kind: input, shape index: {}]
  %s6 = inlined_call_operand.vmem [shape: f32[1,32], index: 6, kind: input, shape index: {}]
  %s7 = inlined_call_operand.vmem [shape: f32[1,32], index: 7, kind: input, shape index: {}]
  %s8 = inlined_call_operand.vmem [shape: bf16[32,96], index: 8, kind: input, shape index: {}]
  %s9 = inlined_call_operand.vmem [shape: f32[1,96], index: 9, kind: input, shape index: {}]
  %s10 = inlined_call_operand.vmem [shape: bf16[32,32], index: 10, kind: input, shape index: {}]
  %s11 = inlined_call_operand.vmem [shape: f32[1,32], index: 11, kind: input, shape index: {}]
  %s12 = inlined_call_operand.vmem [shape: f32[1,32], index: 12, kind: input, shape index: {}]
  %s13 = inlined_call_operand.vmem [shape: f32[1,32], index: 13, kind: input, shape index: {}]
  %s14 = inlined_call_operand.vmem [shape: bf16[32,128], index: 14, kind: input, shape index: {}]
  %s15 = inlined_call_operand.vmem [shape: f32[1,128], index: 15, kind: input, shape index: {}]
  %s16 = inlined_call_operand.vmem [shape: bf16[128,32], index: 16, kind: input, shape index: {}]
  %s17 = inlined_call_operand.vmem [shape: f32[1,32], index: 17, kind: input, shape index: {}]
  %s18 = inlined_call_operand.vmem [shape: f32[1,32], index: 18, kind: input, shape index: {}]
  %s19 = inlined_call_operand.vmem [shape: f32[1,32], index: 19, kind: input, shape index: {}]
  %s20 = inlined_call_operand.vmem [shape: f32[2,8,32], index: 20, kind: output, shape index: {}]
  %s21 = sld [smem:[#allocation0]]
  $region113: #{_forward_core.3} parent=0
    _
  %s23 = ssub.s32 1, %s21
  %s24 = scalar_select 0, %s23, %s21
  loop: start=0, step=1, limit=4
  $region2: #{_forward_core.3} parent=0 // loop_pre_header
    _
  $region3: #{_forward_core.3} parent=0 // loop_header
    %s26 = sphi 0, %s30
    %p27 = scmp.ge.s32.totalorder %s26, 4
    %s36 = sphi 0, %s38
    %s39 = sphi 0, %s36
    %s40 = sphi 0, %s39
    %s56 = sphi 0, %s40
    %s62 = sphi 0, %s64
    %s65 = sphi 0, %s62
    %s66 = sphi 0, %s65
    %s82 = sphi 0, %s66
    %s86 = sphi 0, %s86
    %s88 = sphi 0, %s86
    %s89 = sphi 0, %s88
    %s103 = sphi 0, %s89
    %s107 = sphi 0, %s107
    %s109 = sphi 0, %s107
    %s110 = sphi 0, %s109
    %s124 = sphi 0, %s110
    %s128 = sphi 0, %s128
    %s130 = sphi 0, %s128
    %s131 = sphi 0, %s130
    %s145 = sphi 0, %s131
    %s149 = sphi 0, %s149
    %s151 = sphi 0, %s149
    %s152 = sphi 0, %s151
    %s166 = sphi 0, %s152
    %s170 = sphi 0, %s170
    %s172 = sphi 0, %s170
    %s173 = sphi 0, %s172
    %s187 = sphi 0, %s173
    %s191 = sphi 0, %s191
    %s193 = sphi 0, %s191
    %s194 = sphi 0, %s193
    %s208 = sphi 0, %s194
    %s212 = sphi 0, %s212
    %s214 = sphi 0, %s212
    %s215 = sphi 0, %s214
    %s229 = sphi 0, %s215
    %s233 = sphi 0, %s233
    %s235 = sphi 0, %s233
    %s236 = sphi 0, %s235
    %s250 = sphi 0, %s236
    %s254 = sphi 0, %s254
    %s256 = sphi 0, %s254
    %s257 = sphi 0, %s256
    %s271 = sphi 0, %s257
    %s275 = sphi 0, %s275
    %s277 = sphi 0, %s275
    %s278 = sphi 0, %s277
    %s292 = sphi 0, %s278
    %s296 = sphi 0, %s296
    %s298 = sphi 0, %s296
    %s299 = sphi 0, %s298
    %s313 = sphi 0, %s299
    %s317 = sphi 0, %s317
    %s319 = sphi 0, %s317
    %s320 = sphi 0, %s319
    %s334 = sphi 0, %s320
    %s338 = sphi 0, %s338
    %s340 = sphi 0, %s338
    %s341 = sphi 0, %s340
    %s355 = sphi 0, %s341
    %s359 = sphi 0, %s359
    %s361 = sphi 0, %s359
    %s362 = sphi 0, %s361
    %s376 = sphi 0, %s362
    %s380 = sphi 0, %s380
    %s382 = sphi 0, %s380
    %s383 = sphi 0, %s382
    %s397 = sphi 0, %s383
    %s401 = sphi 0, %s401
    %s403 = sphi 0, %s401
    %s404 = sphi 0, %s403
    %s418 = sphi 0, %s404
    %s422 = sphi 0, %s422
    %s424 = sphi 0, %s422
    %s425 = sphi 0, %s424
    %s439 = sphi 0, %s425
    %s443 = sphi 0, %s443
    %s445 = sphi 0, %s443
    %s446 = sphi 0, %s445
    %s460 = sphi 0, %s446
    %s466 = sphi 0, %s468
    %s469 = sphi 0, %s466
    %s470 = sphi 0, %s469
    %s486 = sphi 0, %s470
  $region4: #{_forward_core.3} parent=0 // loop_header_branch
    %29 = sbr.rel (%p27) target = $region8
  $region5: #{_forward_core.3} parent=0 // loop_body
    %s31 = ssub.s32 %s26, 1
    %s32 = ssub.s32 %s26, 2
    %s33 = sadd.s32 %s26, 1
    %s34 = ssub.s32 %s26, %s33
    %p35 = scmp.eq.s32.totalorder %s34, 0
    %s37 = sadd.s32 %s36, 1
    %s38 = scalar_select %p35, %s36, %s37
    %p41 = pneg %p35
    %p42 = scmp.eq.s32.totalorder %s26, 1
    %p43 = por %p41, %p42
    %p44 = scmp.ne.s32.totalorder %s36, %s39
    %p45 = scmp.eq.s32.totalorder %s26, 0
    %p46 = por %p44, %p45
    %p47 = scmp.ne.s32.totalorder %s36, %s39
    %p48 = scmp.eq.s32.totalorder %s31, 1
    %p49 = por %p47, %p48
    %p50 = scmp.ne.s32.totalorder %s39, %s40
    %p51 = scmp.eq.s32.totalorder %s31, 0
    %p52 = por %p50, %p51
    %p53 = scmp.ne.s32.totalorder %s39, %s40
    %p54 = scmp.eq.s32.totalorder %s32, 1
    %p55 = por %p53, %p54
    %p57 = scmp.ne.s32.totalorder %s40, %s56
    %p58 = scmp.eq.s32.totalorder %s32, 0
    %p59 = por %p57, %p58
    %s60 = ssub.s32 %s26, %s33
    %p61 = scmp.eq.s32.totalorder %s60, 0
    %s63 = sadd.s32 %s62, 1
    %s64 = scalar_select %p61, %s62, %s63
    %p67 = pneg %p61
    %p68 = scmp.eq.s32.totalorder %s26, 1
    %p69 = por %p67, %p68
    %p70 = scmp.ne.s32.totalorder %s62, %s65
    %p71 = scmp.eq.s32.totalorder %s26, 0
    %p72 = por %p70, %p71
    %p73 = scmp.ne.s32.totalorder %s62, %s65
    %p74 = scmp.eq.s32.totalorder %s31, 1
    %p75 = por %p73, %p74
    %p76 = scmp.ne.s32.totalorder %s65, %s66
    %p77 = scmp.eq.s32.totalorder %s31, 0
    %p78 = por %p76, %p77
    %p79 = scmp.ne.s32.totalorder %s65, %s66
    %p80 = scmp.eq.s32.totalorder %s32, 1
    %p81 = por %p79, %p80
    %p83 = scmp.ne.s32.totalorder %s66, %s82
    %p84 = scmp.eq.s32.totalorder %s32, 0
    %p85 = por %p83, %p84
    %s87 = sadd.s32 %s86, 1
    %p90 = scmp.eq.s32.totalorder %s26, 1
    %p91 = scmp.ne.s32.totalorder %s86, %s88
    %p92 = scmp.eq.s32.totalorder %s26, 0
    %p93 = por %p91, %p92
    %p94 = scmp.ne.s32.totalorder %s86, %s88
    %p95 = scmp.eq.s32.totalorder %s31, 1
    %p96 = por %p94, %p95
    %p97 = scmp.ne.s32.totalorder %s88, %s89
    %p98 = scmp.eq.s32.totalorder %s31, 0
    %p99 = por %p97, %p98
    %p100 = scmp.ne.s32.totalorder %s88, %s89
    %p101 = scmp.eq.s32.totalorder %s32, 1
    %p102 = por %p100, %p101
    %p104 = scmp.ne.s32.totalorder %s89, %s103
    %p105 = scmp.eq.s32.totalorder %s32, 0
    %p106 = por %p104, %p105
    %s108 = sadd.s32 %s107, 1
    %p111 = scmp.eq.s32.totalorder %s26, 1
    %p112 = scmp.ne.s32.totalorder %s107, %s109
    %p113 = scmp.eq.s32.totalorder %s26, 0
    %p114 = por %p112, %p113
    %p115 = scmp.ne.s32.totalorder %s107, %s109
    %p116 = scmp.eq.s32.totalorder %s31, 1
    %p117 = por %p115, %p116
    %p118 = scmp.ne.s32.totalorder %s109, %s110
    %p119 = scmp.eq.s32.totalorder %s31, 0
    %p120 = por %p118, %p119
    %p121 = scmp.ne.s32.totalorder %s109, %s110
    %p122 = scmp.eq.s32.totalorder %s32, 1
    %p123 = por %p121, %p122
    %p125 = scmp.ne.s32.totalorder %s110, %s124
    %p126 = scmp.eq.s32.totalorder %s32, 0
    %p127 = por %p125, %p126
    %s129 = sadd.s32 %s128, 1
    %p132 = scmp.eq.s32.totalorder %s26, 1
    %p133 = scmp.ne.s32.totalorder %s128, %s130
    %p134 = scmp.eq.s32.totalorder %s26, 0
    %p135 = por %p133, %p134
    %p136 = scmp.ne.s32.totalorder %s128, %s130
    %p137 = scmp.eq.s32.totalorder %s31, 1
    %p138 = por %p136, %p137
    %p139 = scmp.ne.s32.totalorder %s130, %s131
    %p140 = scmp.eq.s32.totalorder %s31, 0
    %p141 = por %p139, %p140
    %p142 = scmp.ne.s32.totalorder %s130, %s131
    %p143 = scmp.eq.s32.totalorder %s32, 1
    %p144 = por %p142, %p143
    %p146 = scmp.ne.s32.totalorder %s131, %s145
    %p147 = scmp.eq.s32.totalorder %s32, 0
    %p148 = por %p146, %p147
    %s150 = sadd.s32 %s149, 1
    %p153 = scmp.eq.s32.totalorder %s26, 1
    %p154 = scmp.ne.s32.totalorder %s149, %s151
    %p155 = scmp.eq.s32.totalorder %s26, 0
    %p156 = por %p154, %p155
    %p157 = scmp.ne.s32.totalorder %s149, %s151
    %p158 = scmp.eq.s32.totalorder %s31, 1
    %p159 = por %p157, %p158
    %p160 = scmp.ne.s32.totalorder %s151, %s152
    %p161 = scmp.eq.s32.totalorder %s31, 0
    %p162 = por %p160, %p161
    %p163 = scmp.ne.s32.totalorder %s151, %s152
    %p164 = scmp.eq.s32.totalorder %s32, 1
    %p165 = por %p163, %p164
    %p167 = scmp.ne.s32.totalorder %s152, %s166
    %p168 = scmp.eq.s32.totalorder %s32, 0
    %p169 = por %p167, %p168
    %s171 = sadd.s32 %s170, 1
    %p174 = scmp.eq.s32.totalorder %s26, 1
    %p175 = scmp.ne.s32.totalorder %s170, %s172
    %p176 = scmp.eq.s32.totalorder %s26, 0
    %p177 = por %p175, %p176
    %p178 = scmp.ne.s32.totalorder %s170, %s172
    %p179 = scmp.eq.s32.totalorder %s31, 1
    %p180 = por %p178, %p179
    %p181 = scmp.ne.s32.totalorder %s172, %s173
    %p182 = scmp.eq.s32.totalorder %s31, 0
    %p183 = por %p181, %p182
    %p184 = scmp.ne.s32.totalorder %s172, %s173
    %p185 = scmp.eq.s32.totalorder %s32, 1
    %p186 = por %p184, %p185
    %p188 = scmp.ne.s32.totalorder %s173, %s187
    %p189 = scmp.eq.s32.totalorder %s32, 0
    %p190 = por %p188, %p189
    %s192 = sadd.s32 %s191, 1
    %p195 = scmp.eq.s32.totalorder %s26, 1
    %p196 = scmp.ne.s32.totalorder %s191, %s193
    %p197 = scmp.eq.s32.totalorder %s26, 0
    %p198 = por %p196, %p197
    %p199 = scmp.ne.s32.totalorder %s191, %s193
    %p200 = scmp.eq.s32.totalorder %s31, 1
    %p201 = por %p199, %p200
    %p202 = scmp.ne.s32.totalorder %s193, %s194
    %p203 = scmp.eq.s32.totalorder %s31, 0
    %p204 = por %p202, %p203
    %p205 = scmp.ne.s32.totalorder %s193, %s194
    %p206 = scmp.eq.s32.totalorder %s32, 1
    %p207 = por %p205, %p206
    %p209 = scmp.ne.s32.totalorder %s194, %s208
    %p210 = scmp.eq.s32.totalorder %s32, 0
    %p211 = por %p209, %p210
    %s213 = sadd.s32 %s212, 1
    %p216 = scmp.eq.s32.totalorder %s26, 1
    %p217 = scmp.ne.s32.totalorder %s212, %s214
    %p218 = scmp.eq.s32.totalorder %s26, 0
    %p219 = por %p217, %p218
    %p220 = scmp.ne.s32.totalorder %s212, %s214
    %p221 = scmp.eq.s32.totalorder %s31, 1
    %p222 = por %p220, %p221
    %p223 = scmp.ne.s32.totalorder %s214, %s215
    %p224 = scmp.eq.s32.totalorder %s31, 0
    %p225 = por %p223, %p224
    %p226 = scmp.ne.s32.totalorder %s214, %s215
    %p227 = scmp.eq.s32.totalorder %s32, 1
    %p228 = por %p226, %p227
    %p230 = scmp.ne.s32.totalorder %s215, %s229
    %p231 = scmp.eq.s32.totalorder %s32, 0
    %p232 = por %p230, %p231
    %s234 = sadd.s32 %s233, 1
    %p237 = scmp.eq.s32.totalorder %s26, 1
    %p238 = scmp.ne.s32.totalorder %s233, %s235
    %p239 = scmp.eq.s32.totalorder %s26, 0
    %p240 = por %p238, %p239
    %p241 = scmp.ne.s32.totalorder %s233, %s235
    %p242 = scmp.eq.s32.totalorder %s31, 1
    %p243 = por %p241, %p242
    %p244 = scmp.ne.s32.totalorder %s235, %s236
    %p245 = scmp.eq.s32.totalorder %s31, 0
    %p246 = por %p244, %p245
    %p247 = scmp.ne.s32.totalorder %s235, %s236
    %p248 = scmp.eq.s32.totalorder %s32, 1
    %p249 = por %p247, %p248
    %p251 = scmp.ne.s32.totalorder %s236, %s250
    %p252 = scmp.eq.s32.totalorder %s32, 0
    %p253 = por %p251, %p252
    %s255 = sadd.s32 %s254, 1
    %p258 = scmp.eq.s32.totalorder %s26, 1
    %p259 = scmp.ne.s32.totalorder %s254, %s256
    %p260 = scmp.eq.s32.totalorder %s26, 0
    %p261 = por %p259, %p260
    %p262 = scmp.ne.s32.totalorder %s254, %s256
    %p263 = scmp.eq.s32.totalorder %s31, 1
    %p264 = por %p262, %p263
    %p265 = scmp.ne.s32.totalorder %s256, %s257
    %p266 = scmp.eq.s32.totalorder %s31, 0
    %p267 = por %p265, %p266
    %p268 = scmp.ne.s32.totalorder %s256, %s257
    %p269 = scmp.eq.s32.totalorder %s32, 1
    %p270 = por %p268, %p269
    %p272 = scmp.ne.s32.totalorder %s257, %s271
    %p273 = scmp.eq.s32.totalorder %s32, 0
    %p274 = por %p272, %p273
    %s276 = sadd.s32 %s275, 1
    %p279 = scmp.eq.s32.totalorder %s26, 1
    %p280 = scmp.ne.s32.totalorder %s275, %s277
    %p281 = scmp.eq.s32.totalorder %s26, 0
    %p282 = por %p280, %p281
    %p283 = scmp.ne.s32.totalorder %s275, %s277
    %p284 = scmp.eq.s32.totalorder %s31, 1
    %p285 = por %p283, %p284
    %p286 = scmp.ne.s32.totalorder %s277, %s278
    %p287 = scmp.eq.s32.totalorder %s31, 0
    %p288 = por %p286, %p287
    %p289 = scmp.ne.s32.totalorder %s277, %s278
    %p290 = scmp.eq.s32.totalorder %s32, 1
    %p291 = por %p289, %p290
    %p293 = scmp.ne.s32.totalorder %s278, %s292
    %p294 = scmp.eq.s32.totalorder %s32, 0
    %p295 = por %p293, %p294
    %s297 = sadd.s32 %s296, 1
    %p300 = scmp.eq.s32.totalorder %s26, 1
    %p301 = scmp.ne.s32.totalorder %s296, %s298
    %p302 = scmp.eq.s32.totalorder %s26, 0
    %p303 = por %p301, %p302
    %p304 = scmp.ne.s32.totalorder %s296, %s298
    %p305 = scmp.eq.s32.totalorder %s31, 1
    %p306 = por %p304, %p305
    %p307 = scmp.ne.s32.totalorder %s298, %s299
    %p308 = scmp.eq.s32.totalorder %s31, 0
    %p309 = por %p307, %p308
    %p310 = scmp.ne.s32.totalorder %s298, %s299
    %p311 = scmp.eq.s32.totalorder %s32, 1
    %p312 = por %p310, %p311
    %p314 = scmp.ne.s32.totalorder %s299, %s313
    %p315 = scmp.eq.s32.totalorder %s32, 0
    %p316 = por %p314, %p315
    %s318 = sadd.s32 %s317, 1
    %p321 = scmp.eq.s32.totalorder %s26, 1
    %p322 = scmp.ne.s32.totalorder %s317, %s319
    %p323 = scmp.eq.s32.totalorder %s26, 0
    %p324 = por %p322, %p323
    %p325 = scmp.ne.s32.totalorder %s317, %s319
    %p326 = scmp.eq.s32.totalorder %s31, 1
    %p327 = por %p325, %p326
    %p328 = scmp.ne.s32.totalorder %s319, %s320
    %p329 = scmp.eq.s32.totalorder %s31, 0
    %p330 = por %p328, %p329
    %p331 = scmp.ne.s32.totalorder %s319, %s320
    %p332 = scmp.eq.s32.totalorder %s32, 1
    %p333 = por %p331, %p332
    %p335 = scmp.ne.s32.totalorder %s320, %s334
    %p336 = scmp.eq.s32.totalorder %s32, 0
    %p337 = por %p335, %p336
    %s339 = sadd.s32 %s338, 1
    %p342 = scmp.eq.s32.totalorder %s26, 1
    %p343 = scmp.ne.s32.totalorder %s338, %s340
    %p344 = scmp.eq.s32.totalorder %s26, 0
    %p345 = por %p343, %p344
    %p346 = scmp.ne.s32.totalorder %s338, %s340
    %p347 = scmp.eq.s32.totalorder %s31, 1
    %p348 = por %p346, %p347
    %p349 = scmp.ne.s32.totalorder %s340, %s341
    %p350 = scmp.eq.s32.totalorder %s31, 0
    %p351 = por %p349, %p350
    %p352 = scmp.ne.s32.totalorder %s340, %s341
    %p353 = scmp.eq.s32.totalorder %s32, 1
    %p354 = por %p352, %p353
    %p356 = scmp.ne.s32.totalorder %s341, %s355
    %p357 = scmp.eq.s32.totalorder %s32, 0
    %p358 = por %p356, %p357
    %s360 = sadd.s32 %s359, 1
    %p363 = scmp.eq.s32.totalorder %s26, 1
    %p364 = scmp.ne.s32.totalorder %s359, %s361
    %p365 = scmp.eq.s32.totalorder %s26, 0
    %p366 = por %p364, %p365
    %p367 = scmp.ne.s32.totalorder %s359, %s361
    %p368 = scmp.eq.s32.totalorder %s31, 1
    %p369 = por %p367, %p368
    %p370 = scmp.ne.s32.totalorder %s361, %s362
    %p371 = scmp.eq.s32.totalorder %s31, 0
    %p372 = por %p370, %p371
    %p373 = scmp.ne.s32.totalorder %s361, %s362
    %p374 = scmp.eq.s32.totalorder %s32, 1
    %p375 = por %p373, %p374
    %p377 = scmp.ne.s32.totalorder %s362, %s376
    %p378 = scmp.eq.s32.totalorder %s32, 0
    %p379 = por %p377, %p378
    %s381 = sadd.s32 %s380, 1
    %p384 = scmp.eq.s32.totalorder %s26, 1
    %p385 = scmp.ne.s32.totalorder %s380, %s382
    %p386 = scmp.eq.s32.totalorder %s26, 0
    %p387 = por %p385, %p386
    %p388 = scmp.ne.s32.totalorder %s380, %s382
    %p389 = scmp.eq.s32.totalorder %s31, 1
    %p390 = por %p388, %p389
    %p391 = scmp.ne.s32.totalorder %s382, %s383
    %p392 = scmp.eq.s32.totalorder %s31, 0
    %p393 = por %p391, %p392
    %p394 = scmp.ne.s32.totalorder %s382, %s383
    %p395 = scmp.eq.s32.totalorder %s32, 1
    %p396 = por %p394, %p395
    %p398 = scmp.ne.s32.totalorder %s383, %s397
    %p399 = scmp.eq.s32.totalorder %s32, 0
    %p400 = por %p398, %p399
    %s402 = sadd.s32 %s401, 1
    %p405 = scmp.eq.s32.totalorder %s26, 1
    %p406 = scmp.ne.s32.totalorder %s401, %s403
    %p407 = scmp.eq.s32.totalorder %s26, 0
    %p408 = por %p406, %p407
    %p409 = scmp.ne.s32.totalorder %s401, %s403
    %p410 = scmp.eq.s32.totalorder %s31, 1
    %p411 = por %p409, %p410
    %p412 = scmp.ne.s32.totalorder %s403, %s404
    %p413 = scmp.eq.s32.totalorder %s31, 0
    %p414 = por %p412, %p413
    %p415 = scmp.ne.s32.totalorder %s403, %s404
    %p416 = scmp.eq.s32.totalorder %s32, 1
    %p417 = por %p415, %p416
    %p419 = scmp.ne.s32.totalorder %s404, %s418
    %p420 = scmp.eq.s32.totalorder %s32, 0
    %p421 = por %p419, %p420
    %s423 = sadd.s32 %s422, 1
    %p426 = scmp.eq.s32.totalorder %s26, 1
    %p427 = scmp.ne.s32.totalorder %s422, %s424
    %p428 = scmp.eq.s32.totalorder %s26, 0
    %p429 = por %p427, %p428
    %p430 = scmp.ne.s32.totalorder %s422, %s424
    %p431 = scmp.eq.s32.totalorder %s31, 1
    %p432 = por %p430, %p431
    %p433 = scmp.ne.s32.totalorder %s424, %s425
    %p434 = scmp.eq.s32.totalorder %s31, 0
    %p435 = por %p433, %p434
    %p436 = scmp.ne.s32.totalorder %s424, %s425
    %p437 = scmp.eq.s32.totalorder %s32, 1
    %p438 = por %p436, %p437
    %p440 = scmp.ne.s32.totalorder %s425, %s439
    %p441 = scmp.eq.s32.totalorder %s32, 0
    %p442 = por %p440, %p441
    %s444 = sadd.s32 %s443, 1
    %p447 = scmp.eq.s32.totalorder %s26, 1
    %p448 = scmp.ne.s32.totalorder %s443, %s445
    %p449 = scmp.eq.s32.totalorder %s26, 0
    %p450 = por %p448, %p449
    %p451 = scmp.ne.s32.totalorder %s443, %s445
    %p452 = scmp.eq.s32.totalorder %s31, 1
    %p453 = por %p451, %p452
    %p454 = scmp.ne.s32.totalorder %s445, %s446
    %p455 = scmp.eq.s32.totalorder %s31, 0
    %p456 = por %p454, %p455
    %p457 = scmp.ne.s32.totalorder %s445, %s446
    %p458 = scmp.eq.s32.totalorder %s32, 1
    %p459 = por %p457, %p458
    %p461 = scmp.ne.s32.totalorder %s446, %s460
    %p462 = scmp.eq.s32.totalorder %s32, 0
    %p463 = por %p461, %p462
    %s464 = ssub.s32 %s26, %s33
    %p465 = scmp.eq.s32.totalorder %s464, 0
    %s467 = sadd.s32 %s466, 1
    %s468 = scalar_select %p465, %s466, %s467
    %p471 = pneg %p465
    %p472 = scmp.eq.s32.totalorder %s26, 1
    %p473 = por %p471, %p472
    %p474 = scmp.ne.s32.totalorder %s466, %s469
    %p475 = scmp.eq.s32.totalorder %s26, 0
    %p476 = por %p474, %p475
    %p477 = scmp.ne.s32.totalorder %s466, %s469
    %p478 = scmp.eq.s32.totalorder %s31, 1
    %p479 = por %p477, %p478
    %p480 = scmp.ne.s32.totalorder %s469, %s470
    %p481 = scmp.eq.s32.totalorder %s31, 0
    %p482 = por %p480, %p481
    %p483 = scmp.ne.s32.totalorder %s469, %s470
    %p484 = scmp.eq.s32.totalorder %s32, 1
    %p485 = por %p483, %p484
    %p487 = scmp.ne.s32.totalorder %s470, %s486
    %p488 = scmp.eq.s32.totalorder %s32, 0
    %p489 = por %p487, %p488
    %p490 = scmp.le.s32.totalorder 1, %s26
    %p491 = scmp.lt.s32.totalorder %s26, 3
    %p492 = pnand %p490, %p491
    %p493 = pneg %p492
    // Predicated region
    $region9: #{_forward_core.3} parent=5 // pred_check
      _
    $region10: #{_forward_core.3} parent=5 // pred_check_branch
      %495 = sbr.rel (%p492) target = $region12
    $region11: #{_forward_core.3} parent=5 // pred_region
      %s496 = ssub.s32 %s26, 1
      // Predicated region
      $region13: #{_forward_core.3} parent=11 // pred_check
        %p497 = pneg %p99
      $region14: #{_forward_core.3} parent=11 // pred_check_branch
        %499 = sbr.rel (%p497) target = $region16
      $region15: #{_forward_core.3} parent=11 // pred_region
        _
      $region16: #{_forward_core.3} parent=11 // pred_fallthru
        _
      // Predicated region
      $region17: #{_forward_core.3} parent=11 // pred_check
        %p500 = pneg %p120
      $region18: #{_forward_core.3} parent=11 // pred_check_branch
        %502 = sbr.rel (%p500) target = $region20
      $region19: #{_forward_core.3} parent=11 // pred_region
        _
      $region20: #{_forward_core.3} parent=11 // pred_fallthru
        _
      // Predicated region
      $region21: #{_forward_core.3} parent=11 // pred_check
        %p503 = pneg %p141
      $region22: #{_forward_core.3} parent=11 // pred_check_branch
        %505 = sbr.rel (%p503) target = $region24
      $region23: #{_forward_core.3} parent=11 // pred_region
        _
      $region24: #{_forward_core.3} parent=11 // pred_fallthru
        _
      // Predicated region
      $region25: #{_forward_core.3} parent=11 // pred_check
        %p506 = pneg %p162
      $region26: #{_forward_core.3} parent=11 // pred_check_branch
        %508 = sbr.rel (%p506) target = $region28
      $region27: #{_forward_core.3} parent=11 // pred_region
        _
      $region28: #{_forward_core.3} parent=11 // pred_fallthru
        _
      // Predicated region
      $region29: #{_forward_core.3} parent=11 // pred_check
        %p509 = pneg %p183
      $region30: #{_forward_core.3} parent=11 // pred_check_branch
        %511 = sbr.rel (%p509) target = $region32
      $region31: #{_forward_core.3} parent=11 // pred_region
        _
      $region32: #{_forward_core.3} parent=11 // pred_fallthru
        _
      // Predicated region
      $region33: #{_forward_core.3} parent=11 // pred_check
        %p512 = pneg %p204
      $region34: #{_forward_core.3} parent=11 // pred_check_branch
        %514 = sbr.rel (%p512) target = $region36
      $region35: #{_forward_core.3} parent=11 // pred_region
        _
      $region36: #{_forward_core.3} parent=11 // pred_fallthru
        _
      // Predicated region
      $region37: #{_forward_core.3} parent=11 // pred_check
        %p515 = pneg %p225
      $region38: #{_forward_core.3} parent=11 // pred_check_branch
        %517 = sbr.rel (%p515) target = $region40
      $region39: #{_forward_core.3} parent=11 // pred_region
        _
      $region40: #{_forward_core.3} parent=11 // pred_fallthru
        _
      // Predicated region
      $region41: #{_forward_core.3} parent=11 // pred_check
        %p518 = pneg %p246
      $region42: #{_forward_core.3} parent=11 // pred_check_branch
        %520 = sbr.rel (%p518) target = $region44
      $region43: #{_forward_core.3} parent=11 // pred_region
        _
      $region44: #{_forward_core.3} parent=11 // pred_fallthru
        _
      // Predicated region
      $region45: #{_forward_core.3} parent=11 // pred_check
        %p521 = pneg %p267
      $region46: #{_forward_core.3} parent=11 // pred_check_branch
        %523 = sbr.rel (%p521) target = $region48
      $region47: #{_forward_core.3} parent=11 // pred_region
        _
      $region48: #{_forward_core.3} parent=11 // pred_fallthru
        _
      // Predicated region
      $region49: #{_forward_core.3} parent=11 // pred_check
        %p524 = pneg %p288
      $region50: #{_forward_core.3} parent=11 // pred_check_branch
        %526 = sbr.rel (%p524) target = $region52
      $region51: #{_forward_core.3} parent=11 // pred_region
        _
      $region52: #{_forward_core.3} parent=11 // pred_fallthru
        _
      // Predicated region
      $region53: #{_forward_core.3} parent=11 // pred_check
        %p527 = pneg %p309
      $region54: #{_forward_core.3} parent=11 // pred_check_branch
        %529 = sbr.rel (%p527) target = $region56
      $region55: #{_forward_core.3} parent=11 // pred_region
        _
      $region56: #{_forward_core.3} parent=11 // pred_fallthru
        _
      // Predicated region
      $region57: #{_forward_core.3} parent=11 // pred_check
        %p530 = pneg %p330
      $region58: #{_forward_core.3} parent=11 // pred_check_branch
        %532 = sbr.rel (%p530) target = $region60
      $region59: #{_forward_core.3} parent=11 // pred_region
        _
      $region60: #{_forward_core.3} parent=11 // pred_fallthru
        _
      // Predicated region
      $region61: #{_forward_core.3} parent=11 // pred_check
        %p533 = pneg %p351
      $region62: #{_forward_core.3} parent=11 // pred_check_branch
        %535 = sbr.rel (%p533) target = $region64
      $region63: #{_forward_core.3} parent=11 // pred_region
        _
      $region64: #{_forward_core.3} parent=11 // pred_fallthru
        _
      // Predicated region
      $region65: #{_forward_core.3} parent=11 // pred_check
        %p536 = pneg %p372
      $region66: #{_forward_core.3} parent=11 // pred_check_branch
        %538 = sbr.rel (%p536) target = $region68
      $region67: #{_forward_core.3} parent=11 // pred_region
        _
      $region68: #{_forward_core.3} parent=11 // pred_fallthru
        _
      // Predicated region
      $region69: #{_forward_core.3} parent=11 // pred_check
        %p539 = pneg %p393
      $region70: #{_forward_core.3} parent=11 // pred_check_branch
        %541 = sbr.rel (%p539) target = $region72
      $region71: #{_forward_core.3} parent=11 // pred_region
        _
      $region72: #{_forward_core.3} parent=11 // pred_fallthru
        _
      // Predicated region
      $region73: #{_forward_core.3} parent=11 // pred_check
        %p542 = pneg %p414
      $region74: #{_forward_core.3} parent=11 // pred_check_branch
        %544 = sbr.rel (%p542) target = $region76
      $region75: #{_forward_core.3} parent=11 // pred_region
        _
      $region76: #{_forward_core.3} parent=11 // pred_fallthru
        _
      // Predicated region
      $region77: #{_forward_core.3} parent=11 // pred_check
        %p545 = pneg %p435
      $region78: #{_forward_core.3} parent=11 // pred_check_branch
        %547 = sbr.rel (%p545) target = $region80
      $region79: #{_forward_core.3} parent=11 // pred_region
        _
      $region80: #{_forward_core.3} parent=11 // pred_fallthru
        _
      // Predicated region
      $region81: #{_forward_core.3} parent=11 // pred_check
        %p548 = pneg %p456
      $region82: #{_forward_core.3} parent=11 // pred_check_branch
        %550 = sbr.rel (%p548) target = $region84
      $region83: #{_forward_core.3} parent=11 // pred_region
        _
      $region84: #{_forward_core.3} parent=11 // pred_fallthru
        _
    $region12: #{_forward_core.3} parent=5 // pred_fallthru
      _
    %p551 = scmp.lt.s32.totalorder %s26, 2
    // Predicated region
    $region85: #{_forward_core.3} parent=5 // pred_check
      %p552 = pneg %p551
    $region86: #{_forward_core.3} parent=5 // pred_check_branch
      %554 = sbr.rel (%p552) target = $region88
    $region87: #{_forward_core.3} parent=5 // pred_region
      // Predicated region
      $region89: #{_forward_core.3} parent=87 // pred_check
        %p555 = pneg %p46
      $region90: #{_forward_core.3} parent=87 // pred_check_branch
        %557 = sbr.rel (%p555) target = $region92
      $region91: #{_forward_core.3} parent=87 // pred_region
        %p558 = scmp.lt.s32.totalorder %s26, 1
        %s559 = scalar_select %p558, %s26, 1
        %s560 = smul.addr %s559, 8
        %s561 = scalar_lea.vmem %s0, %s560
      $region92: #{_forward_core.3} parent=87 // pred_fallthru
        _
      // Predicated region
      $region93: #{_forward_core.3} parent=87 // pred_check
        %p562 = pneg %p72
      $region94: #{_forward_core.3} parent=87 // pred_check_branch
        %564 = sbr.rel (%p562) target = $region96
      $region95: #{_forward_core.3} parent=87 // pred_region
        %p565 = scmp.lt.s32.totalorder %s26, 1
        %s566 = scalar_select %p565, %s26, 1
        %s567 = smul.addr %s566, 2
        %s568 = smul.addr %s567, 8
        %s569 = scalar_lea.vmem %s1, %s568
      $region96: #{_forward_core.3} parent=87 // pred_fallthru
        _
    $region88: #{_forward_core.3} parent=5 // pred_fallthru
      _
    %p570 = scmp.le.s32.totalorder 1, %s26
    %p571 = scmp.lt.s32.totalorder %s26, 3
    %p572 = pnand %p570, %p571
    %p573 = pneg %p572
    // Predicated region
    $region97: #{_forward_core.3} parent=5 // pred_check
      _
    $region98: #{_forward_core.3} parent=5 // pred_check_branch
      %575 = sbr.rel (%p572) target = $region100
    $region99: #{_forward_core.3} parent=5 // pred_region
      %s576 = ssub.s32 %s26, 1
      %p577 = scmp.lt.s32.totalorder %s31, 1
      %s578 = scalar_select %p577, %s31, 1
      %s579 = smul.addr %s578, 8
      %s580 = scalar_lea.vmem %s0, %s579
      %p581 = pneg %p52
      %p582 = pneg %p49
      %p583 = scmp.lt.s32.totalorder %s31, 1
      %s584 = scalar_select %p583, %s31, 1
      %s585 = smul.addr %s584, 2
      %s586 = smul.addr %s585, 8
      %s587 = scalar_lea.vmem %s1, %s586
      %p588 = pneg %p78
      %p589 = pneg %p75
      %p590 = pneg %p99
      %p591 = pneg %p96
      %p592 = pneg %p120
      %p593 = pneg %p117
      %p594 = pneg %p141
      %p595 = pneg %p138
      %p596 = pneg %p162
      %p597 = pneg %p159
      %p598 = pneg %p183
      %p599 = pneg %p180
      %p600 = pneg %p204
      %p601 = pneg %p201
      %p602 = pneg %p225
      %p603 = pneg %p222
      %p604 = pneg %p246
      %p605 = pneg %p243
      %p606 = pneg %p267
      %p607 = pneg %p264
      %p608 = pneg %p288
      %p609 = pneg %p285
      %p610 = pneg %p309
      %p611 = pneg %p306
      %p612 = pneg %p330
      %p613 = pneg %p327
      %p614 = pneg %p351
      %p615 = pneg %p348
      %p616 = pneg %p372
      %p617 = pneg %p369
      %p618 = pneg %p393
      %p619 = pneg %p390
      %p620 = pneg %p414
      %p621 = pneg %p411
      %p622 = pneg %p435
      %p623 = pneg %p432
      %p624 = pneg %p456
      %p625 = pneg %p453
      %p626 = pneg %p482
      %p627 = pneg %p479
      %p628 = scmp.lt.s32.totalorder %s31, 1
      %s629 = scalar_select %p628, %s31, 1
      %s630 = smul.addr %s629, 8
      %s631 = scalar_lea.vmem %s20, %s630
      %p632 = scmp.lt.s32.totalorder %s31, 1
      %s633 = scalar_select %p632, %s31, 1
      %s634 = smul.addr %s633, 8
      %s635 = scalar_lea.vmem %s0, %s634
      %p636 = scmp.lt.s32.totalorder %s31, 1
      %s637 = scalar_select %p636, %s31, 1
      %s638 = smul.addr %s637, 2
      %s639 = smul.addr %s638, 8
      %s640 = scalar_lea.vmem %s1, %s639
      %p641 = scmp.lt.s32.totalorder %s31, 1
      %s642 = scalar_select %p641, %s31, 1
      %s643 = smul.addr %s642, 8
      %s644 = scalar_lea.vmem %s20, %s643
      %v646 = vld [vmem:[%s635] sm:$0xff]
      %v647 = vld [vmem:[%s640] sm:$0xff]
      %v648 = vld [vmem:[%s640 + $0x8] sm:$0x3]
      %v649 = vpack.c.bf16 %v646, %v646
      %v650 = vld [vmem:[%s2] sm:$0xf]
      %v651 = vld [vmem:[%s2 + $0x4] sm:$0xf]
      %v652 = vld [vmem:[%s2 + $0x8] sm:$0xf]
      %v653 = vld [vmem:[%s2 + $0xc] sm:$0xf]
      %v654 = vld [vmem:[%s3] sm:$0x1]
      %v656 = vlaneseq
      %v657 = vshrl.u32 %v656, 7
      %v658 = vsub.s32 0, %v657
      %v659 = vrot.slane %v654, %v658
      %v665 = vunpack.c.l.b16 %v650
      %v666 = vunpack.c.l.b16 %v651
      %v667 = vunpack.c.l.b16 %v652
      %v668 = vunpack.c.l.b16 %v653
      %v669 = vpack.c.b16 %v666, %v665
      %v670 = vpack.c.b16 %v668, %v667
      %vm673 = vcmask 261120
      %v675 = vsel %vm673, %v649, 0
      %677 = vmatprep.subr.bf16.mxu0 0
      %678 = vmatpush1.bf16.msra.mxu0 %v669
      %679 = vmatprep.subr.bf16.mxu0 0
      %680 = vmatpush1.bf16.msra.mxu0 %v670
      %681 = vmatprep.subr.bf16.mxu0 0
      %682 = vmatpush1.bf16.msra.mxu0 0
      %683 = vmatprep.subr.bf16.mxu0 0
      %684 = vmatpush1.bf16.msra.mxu0 0
      %685 = vmatprep.subr.bf16.mxu0 0
      %686 = vmatpush1.bf16.msra.mxu0 0
      %687 = vmatprep.subr.bf16.mxu0 0
      %688 = vmatpush1.bf16.msra.mxu0 0
      %689 = vmatprep.subr.bf16.mxu0 0
      %690 = vmatpush1.bf16.msra.mxu0 0
      %691 = vmatprep.subr.bf16.mxu0 0
      %692 = vmatpush1.bf16.msra.mxu0 0
      %693 = vmatprep.subr.bf16.mxu0 0
      %694 = vmatpush1.bf16.msra.mxu0 0
      %695 = vmatprep.subr.bf16.mxu0 0
      %696 = vmatpush1.bf16.msra.mxu0 0
      %697 = vmatprep.subr.bf16.mxu0 0
      %698 = vmatpush1.bf16.msra.mxu0 0
      %699 = vmatprep.subr.bf16.mxu0 0
      %700 = vmatpush1.bf16.msra.mxu0 0
      %701 = vmatprep.subr.bf16.mxu0 0
      %702 = vmatpush1.bf16.msra.mxu0 0
      %703 = vmatprep.subr.bf16.mxu0 0
      %704 = vmatpush1.bf16.msra.mxu0 0
      %705 = vmatprep.subr.bf16.mxu0 0
      %706 = vmatpush1.bf16.msra.mxu0 0
      %707 = vmatprep.subr.bf16.mxu0 0
      %708 = vmatpush1.bf16.msra.mxu0 0
      %709 = vmatprep.mubr.bf16.mxu0 0
      %710 = vmatmul.mubr.bf16.gmra.mrb[0].mxu0 %v675
      %v711 = vpop.f32.mrb[0].mxu0
      %v712 = vadd.f32 %v659, %v711
      %v713 = vpop.f32.mrb[0].mxu0
      %v714 = vpop.f32.mrb[0].mxu0
      %v715 = vpop.f32.mrb[0].mxu0
      %716 = vdwg.mxu0
      %718 = vrot.lane.b32.xlu0 %v712, 96
      %v719 = vpop.permute.xlu0 %718
      %vm720 = vcmask 64512
      %v721 = vsel %vm720, %v712, 0
      %v723 = vsel %vm720, %v719, 0
      %725 = vmatprep.subr.mxu0 0.0
      %726 = vmatpush1.xpose.msra.mxu0 %v723
      %727 = vmatprep.subr.mxu0 0.0
      %728 = vmatpush1.xpose.msra.mxu0 0.0
      %729 = vmatprep.subr.mxu0 0.0
      %730 = vmatpush1.xpose.msra.mxu0 0.0
      %731 = vmatprep.subr.mxu0 0.0
      %732 = vmatpush1.xpose.msra.mxu0 0.0
      %733 = vmatprep.subr.mxu0 0.0
      %734 = vmatpush1.xpose.msra.mxu0 0.0
      %735 = vmatprep.subr.mxu0 0.0
      %736 = vmatpush1.xpose.msra.mxu0 0.0
      %737 = vmatprep.subr.mxu0 0.0
      %738 = vmatpush1.xpose.msra.mxu0 0.0
      %739 = vmatprep.subr.mxu0 0.0
      %740 = vmatpush1.xpose.msra.mxu0 0.0
      %741 = vmatprep.subr.mxu0 0.0
      %742 = vmatpush1.xpose.msra.mxu0 0.0
      %743 = vmatprep.subr.mxu0 0.0
      %744 = vmatpush1.xpose.msra.mxu0 0.0
      %745 = vmatprep.subr.mxu0 0.0
      %746 = vmatpush1.xpose.msra.mxu0 0.0
      %747 = vmatprep.subr.mxu0 0.0
      %748 = vmatpush1.xpose.msra.mxu0 0.0
      %749 = vmatprep.subr.mxu0 0.0
      %750 = vmatpush1.xpose.msra.mxu0 0.0
      %751 = vmatprep.subr.mxu0 0.0
      %752 = vmatpush1.xpose.msra.mxu0 0.0
      %753 = vmatprep.subr.mxu0 0.0
      %754 = vmatpush1.xpose.msra.mxu0 0.0
      %755 = vmatprep.subr.mxu0 0.0
      %756 = vmatpush1.xpose.msra.mxu0 0.0
      %757 = vmatprep.subr.mxu0 0.0
      %758 = vmatpush1.xpose.msra.mxu0 0.0
      %759 = vmatprep.subr.mxu0 0.0
      %760 = vmatpush1.xpose.msra.mxu0 0.0
      %761 = vmatprep.subr.mxu0 0.0
      %762 = vmatpush1.xpose.msra.mxu0 0.0
      %763 = vmatprep.subr.mxu0 0.0
      %764 = vmatpush1.xpose.msra.mxu0 0.0
      %765 = vmatprep.subr.mxu0 0.0
      %766 = vmatpush1.xpose.msra.mxu0 0.0
      %767 = vmatprep.subr.mxu0 0.0
      %768 = vmatpush1.xpose.msra.mxu0 0.0
      %769 = vmatprep.subr.mxu0 0.0
      %770 = vmatpush1.xpose.msra.mxu0 0.0
      %771 = vmatprep.subr.mxu0 0.0
      %772 = vmatpush1.xpose.msra.mxu0 0.0
      %773 = vmatprep.subr.mxu0 0.0
      %774 = vmatpush1.xpose.msra.mxu0 0.0
      %775 = vmatprep.subr.mxu0 0.0
      %776 = vmatpush1.xpose.msra.mxu0 0.0
      %777 = vmatprep.subr.mxu0 0.0
      %778 = vmatpush1.xpose.msra.mxu0 0.0
      %779 = vmatprep.subr.mxu0 0.0
      %780 = vmatpush1.xpose.msra.mxu0 0.0
      %781 = vmatprep.subr.mxu0 0.0
      %782 = vmatpush1.xpose.msra.mxu0 0.0
      %783 = vmatprep.subr.mxu0 0.0
      %784 = vmatpush1.xpose.msra.mxu0 0.0
      %785 = vmatprep.subr.mxu0 0.0
      %786 = vmatpush1.xpose.msra.mxu0 0.0
      %787 = vmatprep.subr.mxu0 0.0
      %788 = vmatpush1.xpose.msra.mxu0 0.0
      %789 = vmatprep.mubr.f32.mxu0 0.0
      %790 = vmatmul.mubr.f32.gmra.mrb[0].mxu0 %v721
      %v791 = vpop.f32.mrb[0].mxu0
      %v792 = vadd.f32 0.0, %v791
      %v793 = vpop.f32.mrb[0].mxu0
      %794 = vdwg.mxu0
      %v795 = vmul.f32 %v792, 0.35355338
      %v796 = vlaneseq
      %v797 = vshrl.u32 %v796, 7
      %v798 = vlaneseq
      %v799 = vand.u32 %v798, 127
      %vm800 = vcmp.le.s32.totalorder %v799, %v797
      %v801 = vsel %vm800, %v795, -1e+30
      %v802 = vsel %vm720, %v801, -inf
      %803 = vmax.xlane.f32.xlu0 %v802
      %v804 = vpop.xlane.xlu0 %803
      %v805 = vsub.f32 %v801, %v804
      %v806 = vmul.f32 %v805, 1.442695
      %v807 = vpow.pop %v806
      %v808 = vsel %vm720, %v807, 0.0
      %809 = vadd.xlane.f32.xlu0 %v808
      %v810 = vpop.xlane.xlu0 %809
      %v811 = vrcp.pop %v810
      %v812 = vmul.f32 %v807, %v811
      %813 = vrot.lane.b32.xlu0 %v712, 64
      %v814 = vpop.permute.xlu0 %813
      %v817 = vsel %vm720, %v812, 0
      %819 = vmatprep.subr.mxu0 0.0
      %820 = vmatpush1.msra.mxu0 %v814
      %821 = vmatprep.subr.mxu0 0.0
      %822 = vmatpush1.msra.mxu0 0.0
      %823 = vmatprep.subr.mxu0 0.0
      %824 = vmatpush1.msra.mxu0 0.0
      %825 = vmatprep.subr.mxu0 0.0
      %826 = vmatpush1.msra.mxu0 0.0
      %827 = vmatprep.subr.mxu0 0.0
      %828 = vmatpush1.msra.mxu0 0.0
      %829 = vmatprep.subr.mxu0 0.0
      %830 = vmatpush1.msra.mxu0 0.0
      %831 = vmatprep.subr.mxu0 0.0
      %832 = vmatpush1.msra.mxu0 0.0
      %833 = vmatprep.subr.mxu0 0.0
      %834 = vmatpush1.msra.mxu0 0.0
      %835 = vmatprep.subr.mxu0 0.0
      %836 = vmatpush1.msra.mxu0 0.0
      %837 = vmatprep.subr.mxu0 0.0
      %838 = vmatpush1.msra.mxu0 0.0
      %839 = vmatprep.subr.mxu0 0.0
      %840 = vmatpush1.msra.mxu0 0.0
      %841 = vmatprep.subr.mxu0 0.0
      %842 = vmatpush1.msra.mxu0 0.0
      %843 = vmatprep.subr.mxu0 0.0
      %844 = vmatpush1.msra.mxu0 0.0
      %845 = vmatprep.subr.mxu0 0.0
      %846 = vmatpush1.msra.mxu0 0.0
      %847 = vmatprep.subr.mxu0 0.0
      %848 = vmatpush1.msra.mxu0 0.0
      %849 = vmatprep.subr.mxu0 0.0
      %850 = vmatpush1.msra.mxu0 0.0
      %851 = vmatprep.subr.mxu0 0.0
      %852 = vmatpush1.msra.mxu0 0.0
      %853 = vmatprep.subr.mxu0 0.0
      %854 = vmatpush1.msra.mxu0 0.0
      %855 = vmatprep.subr.mxu0 0.0
      %856 = vmatpush1.msra.mxu0 0.0
      %857 = vmatprep.subr.mxu0 0.0
      %858 = vmatpush1.msra.mxu0 0.0
      %859 = vmatprep.subr.mxu0 0.0
      %860 = vmatpush1.msra.mxu0 0.0
      %861 = vmatprep.subr.mxu0 0.0
      %862 = vmatpush1.msra.mxu0 0.0
      %863 = vmatprep.subr.mxu0 0.0
      %864 = vmatpush1.msra.mxu0 0.0
      %865 = vmatprep.subr.mxu0 0.0
      %866 = vmatpush1.msra.mxu0 0.0
      %867 = vmatprep.subr.mxu0 0.0
      %868 = vmatpush1.msra.mxu0 0.0
      %869 = vmatprep.subr.mxu0 0.0
      %870 = vmatpush1.msra.mxu0 0.0
      %871 = vmatprep.subr.mxu0 0.0
      %872 = vmatpush1.msra.mxu0 0.0
      %873 = vmatprep.subr.mxu0 0.0
      %874 = vmatpush1.msra.mxu0 0.0
      %875 = vmatprep.subr.mxu0 0.0
      %876 = vmatpush1.msra.mxu0 0.0
      %877 = vmatprep.subr.mxu0 0.0
      %878 = vmatpush1.msra.mxu0 0.0
      %879 = vmatprep.subr.mxu0 0.0
      %880 = vmatpush1.msra.mxu0 0.0
      %881 = vmatprep.subr.mxu0 0.0
      %882 = vmatpush1.msra.mxu0 0.0
      %883 = vmatprep.mubr.f32.mxu0 0.0
      %884 = vmatmul.mubr.f32.gmra.mrb[0].mxu0 %v817
      %v885 = vpop.f32.mrb[0].mxu0
      %v886 = vadd.f32 0.0, %v885
      %v887 = vpop.f32.mrb[0].mxu0
      %888 = vdwg.mxu0
      %v889 = vpack.c.bf16 %v886, %v886
      %v890 = vld [vmem:[%s4] sm:$0xf]
      %891 = vrot.lane.b32.xlu0 %v712, 120
      %v892 = vpop.permute.xlu0 %891
      %893 = vrot.lane.b32.xlu0 %v712, 88
      %v894 = vpop.permute.xlu0 %893
      %v895 = vsel %vm720, %v892, 0
      %v897 = vsel %vm720, %v894, 0
      %899 = vmatprep.subr.mxu0 0.0
      %900 = vmatpush1.xpose.msra.mxu0 %v897
      %901 = vmatprep.subr.mxu0 0.0
      %902 = vmatpush1.xpose.msra.mxu0 0.0
      %903 = vmatprep.subr.mxu0 0.0
      %904 = vmatpush1.xpose.msra.mxu0 0.0
      %905 = vmatprep.subr.mxu0 0.0
      %906 = vmatpush1.xpose.msra.mxu0 0.0
      %907 = vmatprep.subr.mxu0 0.0
      %908 = vmatpush1.xpose.msra.mxu0 0.0
      %909 = vmatprep.subr.mxu0 0.0
      %910 = vmatpush1.xpose.msra.mxu0 0.0
      %911 = vmatprep.subr.mxu0 0.0
      %912 = vmatpush1.xpose.msra.mxu0 0.0
      %913 = vmatprep.subr.mxu0 0.0
      %914 = vmatpush1.xpose.msra.mxu0 0.0
      %915 = vmatprep.subr.mxu0 0.0
      %916 = vmatpush1.xpose.msra.mxu0 0.0
      %917 = vmatprep.subr.mxu0 0.0
      %918 = vmatpush1.xpose.msra.mxu0 0.0
      %919 = vmatprep.subr.mxu0 0.0
      %920 = vmatpush1.xpose.msra.mxu0 0.0
      %921 = vmatprep.subr.mxu0 0.0
      %922 = vmatpush1.xpose.msra.mxu0 0.0
      %923 = vmatprep.subr.mxu0 0.0
      %924 = vmatpush1.xpose.msra.mxu0 0.0
      %925 = vmatprep.subr.mxu0 0.0
      %926 = vmatpush1.xpose.msra.mxu0 0.0
      %927 = vmatprep.subr.mxu0 0.0
      %928 = vmatpush1.xpose.msra.mxu0 0.0
      %929 = vmatprep.subr.mxu0 0.0
      %930 = vmatpush1.xpose.msra.mxu0 0.0
      %931 = vmatprep.subr.mxu0 0.0
      %932 = vmatpush1.xpose.msra.mxu0 0.0
      %933 = vmatprep.subr.mxu0 0.0
      %934 = vmatpush1.xpose.msra.mxu0 0.0
      %935 = vmatprep.subr.mxu0 0.0
      %936 = vmatpush1.xpose.msra.mxu0 0.0
      %937 = vmatprep.subr.mxu0 0.0
      %938 = vmatpush1.xpose.msra.mxu0 0.0
      %939 = vmatprep.subr.mxu0 0.0
      %940 = vmatpush1.xpose.msra.mxu0 0.0
      %941 = vmatprep.subr.mxu0 0.0
      %942 = vmatpush1.xpose.msra.mxu0 0.0
      %943 = vmatprep.subr.mxu0 0.0
      %944 = vmatpush1.xpose.msra.mxu0 0.0
      %945 = vmatprep.subr.mxu0 0.0
      %946 = vmatpush1.xpose.msra.mxu0 0.0
      %947 = vmatprep.subr.mxu0 0.0
      %948 = vmatpush1.xpose.msra.mxu0 0.0
      %949 = vmatprep.subr.mxu0 0.0
      %950 = vmatpush1.xpose.msra.mxu0 0.0
      %951 = vmatprep.subr.mxu0 0.0
      %952 = vmatpush1.xpose.msra.mxu0 0.0
      %953 = vmatprep.subr.mxu0 0.0
      %954 = vmatpush1.xpose.msra.mxu0 0.0
      %955 = vmatprep.subr.mxu0 0.0
      %956 = vmatpush1.xpose.msra.mxu0 0.0
      %957 = vmatprep.subr.mxu0 0.0
      %958 = vmatpush1.xpose.msra.mxu0 0.0
      %959 = vmatprep.subr.mxu0 0.0
      %960 = vmatpush1.xpose.msra.mxu0 0.0
      %961 = vmatprep.subr.mxu0 0.0
      %962 = vmatpush1.xpose.msra.mxu0 0.0
      %963 = vmatprep.mubr.f32.mxu0 0.0
      %964 = vmatmul.mubr.f32.gmra.mrb[0].mxu0 %v895
      %v965 = vpop.f32.mrb[0].mxu0
      %v966 = vadd.f32 0.0, %v965
      %v967 = vpop.f32.mrb[0].mxu0
      %968 = vdwg.mxu0
      %v969 = vmul.f32 %v966, 0.35355338
      %v970 = vsel %vm800, %v969, -1e+30
      %v971 = vsel %vm720, %v970, -inf
      %972 = vmax.xlane.f32.xlu0 %v971
      %v973 = vpop.xlane.xlu0 %972
      %v974 = vsub.f32 %v970, %v973
      %v975 = vmul.f32 %v974, 1.442695
      %v976 = vpow.pop %v975
      %v977 = vsel %vm720, %v976, 0.0
      %978 = vadd.xlane.f32.xlu0 %v977
      %v979 = vpop.xlane.xlu0 %978
      %v980 = vrcp.pop %v979
      %v981 = vmul.f32 %v976, %v980
      %982 = vrot.lane.b32.xlu0 %v712, 56
      %v983 = vpop.permute.xlu0 %982
      %v986 = vsel %vm720, %v981, 0
      %988 = vmatprep.subr.mxu0 0.0
      %989 = vmatpush1.msra.mxu0 %v983
      %990 = vmatprep.subr.mxu0 0.0
      %991 = vmatpush1.msra.mxu0 0.0
      %992 = vmatprep.subr.mxu0 0.0
      %993 = vmatpush1.msra.mxu0 0.0
      %994 = vmatprep.subr.mxu0 0.0
      %995 = vmatpush1.msra.mxu0 0.0
      %996 = vmatprep.subr.mxu0 0.0
      %997 = vmatpush1.msra.mxu0 0.0
      %998 = vmatprep.subr.mxu0 0.0
      %999 = vmatpush1.msra.mxu0 0.0
      %1000 = vmatprep.subr.mxu0 0.0
      %1001 = vmatpush1.msra.mxu0 0.0
      %1002 = vmatprep.subr.mxu0 0.0
      %1003 = vmatpush1.msra.mxu0 0.0
      %1004 = vmatprep.subr.mxu0 0.0
      %1005 = vmatpush1.msra.mxu0 0.0
      %1006 = vmatprep.subr.mxu0 0.0
      %1007 = vmatpush1.msra.mxu0 0.0
      %1008 = vmatprep.subr.mxu0 0.0
      %1009 = vmatpush1.msra.mxu0 0.0
      %1010 = vmatprep.subr.mxu0 0.0
      %1011 = vmatpush1.msra.mxu0 0.0
      %1012 = vmatprep.subr.mxu0 0.0
      %1013 = vmatpush1.msra.mxu0 0.0
      %1014 = vmatprep.subr.mxu0 0.0
      %1015 = vmatpush1.msra.mxu0 0.0
      %1016 = vmatprep.subr.mxu0 0.0
      %1017 = vmatpush1.msra.mxu0 0.0
      %1018 = vmatprep.subr.mxu0 0.0
      %1019 = vmatpush1.msra.mxu0 0.0
      %1020 = vmatprep.subr.mxu0 0.0
      %1021 = vmatpush1.msra.mxu0 0.0
      %1022 = vmatprep.subr.mxu0 0.0
      %1023 = vmatpush1.msra.mxu0 0.0
      %1024 = vmatprep.subr.mxu0 0.0
      %1025 = vmatpush1.msra.mxu0 0.0
      %1026 = vmatprep.subr.mxu0 0.0
      %1027 = vmatpush1.msra.mxu0 0.0
      %1028 = vmatprep.subr.mxu0 0.0
      %1029 = vmatpush1.msra.mxu0 0.0
      %1030 = vmatprep.subr.mxu0 0.0
      %1031 = vmatpush1.msra.mxu0 0.0
      %1032 = vmatprep.subr.mxu0 0.0
      %1033 = vmatpush1.msra.mxu0 0.0
      %1034 = vmatprep.subr.mxu0 0.0
      %1035 = vmatpush1.msra.mxu0 0.0
      %1036 = vmatprep.subr.mxu0 0.0
      %1037 = vmatpush1.msra.mxu0 0.0
      %1038 = vmatprep.subr.mxu0 0.0
      %1039 = vmatpush1.msra.mxu0 0.0
      %1040 = vmatprep.subr.mxu0 0.0
      %1041 = vmatpush1.msra.mxu0 0.0
      %1042 = vmatprep.subr.mxu0 0.0
      %1043 = vmatpush1.msra.mxu0 0.0
      %1044 = vmatprep.subr.mxu0 0.0
      %1045 = vmatpush1.msra.mxu0 0.0
      %1046 = vmatprep.subr.mxu0 0.0
      %1047 = vmatpush1.msra.mxu0 0.0
      %1048 = vmatprep.subr.mxu0 0.0
      %1049 = vmatpush1.msra.mxu0 0.0
      %1050 = vmatprep.subr.mxu0 0.0
      %1051 = vmatpush1.msra.mxu0 0.0
      %1052 = vmatprep.mubr.f32.mxu0 0.0
      %1053 = vmatmul.mubr.f32.gmra.mrb[0].mxu0 %v986
      %v1054 = vpop.f32.mrb[0].mxu0
      %v1055 = vadd.f32 0.0, %v1054
      %v1056 = vpop.f32.mrb[0].mxu0
      %1057 = vdwg.mxu0
      %v1058 = vpack.c.bf16 %v1055, %v1055
      %v1059 = vld [vmem:[%s4 + $0x4] sm:$0xf]
      %v1061 = vsel %vm720, %v1058, 0
      %vm1063 = vcmask 1043456
      %v1065 = vsel %vm1063, %v1059, 0
      %1067 = vmatprep.subr.bf16.mxu0 0
      %1068 = vmatpush1.bf16.msra.mxu0 %v1065
      %1069 = vmatprep.subr.bf16.mxu0 0
      %1070 = vmatpush1.bf16.msra.mxu0 0
      %1071 = vmatprep.subr.bf16.mxu0 0
      %1072 = vmatpush1.bf16.msra.mxu0 0
      %1073 = vmatprep.subr.bf16.mxu0 0
      %1074 = vmatpush1.bf16.msra.mxu0 0
      %1075 = vmatprep.subr.bf16.mxu0 0
      %1076 = vmatpush1.bf16.msra.mxu0 0
      %1077 = vmatprep.subr.bf16.mxu0 0
      %1078 = vmatpush1.bf16.msra.mxu0 0
      %1079 = vmatprep.subr.bf16.mxu0 0
      %1080 = vmatpush1.bf16.msra.mxu0 0
      %1081 = vmatprep.subr.bf16.mxu0 0
      %1082 = vmatpush1.bf16.msra.mxu0 0
      %1083 = vmatprep.subr.bf16.mxu0 0
      %1084 = vmatpush1.bf16.msra.mxu0 0
      %1085 = vmatprep.subr.bf16.mxu0 0
      %1086 = vmatpush1.bf16.msra.mxu0 0
      %1087 = vmatprep.subr.bf16.mxu0 0
      %1088 = vmatpush1.bf16.msra.mxu0 0
      %1089 = vmatprep.subr.bf16.mxu0 0
      %1090 = vmatpush1.bf16.msra.mxu0 0
      %1091 = vmatprep.subr.bf16.mxu0 0
      %1092 = vmatpush1.bf16.msra.mxu0 0
      %1093 = vmatprep.subr.bf16.mxu0 0
      %1094 = vmatpush1.bf16.msra.mxu0 0
      %1095 = vmatprep.subr.bf16.mxu0 0
      %1096 = vmatpush1.bf16.msra.mxu0 0
      %1097 = vmatprep.subr.bf16.mxu0 0
      %1098 = vmatpush1.bf16.msra.mxu0 0
      %1099 = vmatprep.mubr.bf16.mxu0 0
      %1100 = vmatmul.mubr.bf16.gmra.mrb[0].mxu0 %v1061
      %v1101 = vpop.f32.mrb[0].mxu0
      %v1102 = vadd.f32 0.0, %v1101
      %v1103 = vpop.f32.mrb[0].mxu0
      %v1104 = vpop.f32.mrb[0].mxu0
      %v1105 = vpop.f32.mrb[0].mxu0
      %1106 = vdwg.mxu0
      %v1108 = vsel %vm720, %v889, 0
      %v1111 = vsel %vm1063, %v890, 0
      %1113 = vmatprep.subr.bf16.mxu0 0
      %1114 = vmatpush1.bf16.msra.mxu0 %v1111
      %1115 = vmatprep.subr.bf16.mxu0 0
      %1116 = vmatpush1.bf16.msra.mxu0 0
      %1117 = vmatprep.subr.bf16.mxu0 0
      %1118 = vmatpush1.bf16.msra.mxu0 0
      %1119 = vmatprep.subr.bf16.mxu0 0
      %1120 = vmatpush1.bf16.msra.mxu0 0
      %1121 = vmatprep.subr.bf16.mxu0 0
      %1122 = vmatpush1.bf16.msra.mxu0 0
      %1123 = vmatprep.subr.bf16.mxu0 0
      %1124 = vmatpush1.bf16.msra.mxu0 0
      %1125 = vmatprep.subr.bf16.mxu0 0
      %1126 = vmatpush1.bf16.msra.mxu0 0
      %1127 = vmatprep.subr.bf16.mxu0 0
      %1128 = vmatpush1.bf16.msra.mxu0 0
      %1129 = vmatprep.subr.bf16.mxu0 0
      %1130 = vmatpush1.bf16.msra.mxu0 0
      %1131 = vmatprep.subr.bf16.mxu0 0
      %1132 = vmatpush1.bf16.msra.mxu0 0
      %1133 = vmatprep.subr.bf16.mxu0 0
      %1134 = vmatpush1.bf16.msra.mxu0 0
      %1135 = vmatprep.subr.bf16.mxu0 0
      %1136 = vmatpush1.bf16.msra.mxu0 0
      %1137 = vmatprep.subr.bf16.mxu0 0
      %1138 = vmatpush1.bf16.msra.mxu0 0
      %1139 = vmatprep.subr.bf16.mxu0 0
      %1140 = vmatpush1.bf16.msra.mxu0 0
      %1141 = vmatprep.subr.bf16.mxu0 0
      %1142 = vmatpush1.bf16.msra.mxu0 0
      %1143 = vmatprep.subr.bf16.mxu0 0
      %1144 = vmatpush1.bf16.msra.mxu0 0
      %1145 = vmatprep.mubr.bf16.mxu0 0
      %1146 = vmatmul.mubr.bf16.gmra.mrb[0].mxu0 %v1108
      %v1147 = vpop.f32.mrb[0].mxu0
      %v1148 = vadd.f32 %v1102, %v1147
      %v1149 = vpop.f32.mrb[0].mxu0
      %v1150 = vpop.f32.mrb[0].mxu0
      %v1151 = vpop.f32.mrb[0].mxu0
      %1152 = vdwg.mxu0
      %1153 = vrot.lane.b32.xlu0 %v712, 112
      %v1154 = vpop.permute.xlu0 %1153
      %1155 = vrot.lane.b32.xlu0 %v712, 80
      %v1156 = vpop.permute.xlu0 %1155
      %v1157 = vsel %vm720, %v1154, 0
      %v1159 = vsel %vm720, %v1156, 0
      %1161 = vmatprep.subr.mxu0 0.0
      %1162 = vmatpush1.xpose.msra.mxu0 %v1159
      %1163 = vmatprep.subr.mxu0 0.0
      %1164 = vmatpush1.xpose.msra.mxu0 0.0
      %1165 = vmatprep.subr.mxu0 0.0
      %1166 = vmatpush1.xpose.msra.mxu0 0.0
      %1167 = vmatprep.subr.mxu0 0.0
      %1168 = vmatpush1.xpose.msra.mxu0 0.0
      %1169 = vmatprep.subr.mxu0 0.0
      %1170 = vmatpush1.xpose.msra.mxu0 0.0
      %1171 = vmatprep.subr.mxu0 0.0
      %1172 = vmatpush1.xpose.msra.mxu0 0.0
      %1173 = vmatprep.subr.mxu0 0.0
      %1174 = vmatpush1.xpose.msra.mxu0 0.0
      %1175 = vmatprep.subr.mxu0 0.0
      %1176 = vmatpush1.xpose.msra.mxu0 0.0
      %1177 = vmatprep.subr.mxu0 0.0
      %1178 = vmatpush1.xpose.msra.mxu0 0.0
      %1179 = vmatprep.subr.mxu0 0.0
      %1180 = vmatpush1.xpose.msra.mxu0 0.0
      %1181 = vmatprep.subr.mxu0 0.0
      %1182 = vmatpush1.xpose.msra.mxu0 0.0
      %1183 = vmatprep.subr.mxu0 0.0
      %1184 = vmatpush1.xpose.msra.mxu0 0.0
      %1185 = vmatprep.subr.mxu0 0.0
      %1186 = vmatpush1.xpose.msra.mxu0 0.0
      %1187 = vmatprep.subr.mxu0 0.0
      %1188 = vmatpush1.xpose.msra.mxu0 0.0
      %1189 = vmatprep.subr.mxu0 0.0
      %1190 = vmatpush1.xpose.msra.mxu0 0.0
      %1191 = vmatprep.subr.mxu0 0.0
      %1192 = vmatpush1.xpose.msra.mxu0 0.0
      %1193 = vmatprep.subr.mxu0 0.0
      %1194 = vmatpush1.xpose.msra.mxu0 0.0
      %1195 = vmatprep.subr.mxu0 0.0
      %1196 = vmatpush1.xpose.msra.mxu0 0.0
      %1197 = vmatprep.subr.mxu0 0.0
      %1198 = vmatpush1.xpose.msra.mxu0 0.0
      %1199 = vmatprep.subr.mxu0 0.0
      %1200 = vmatpush1.xpose.msra.mxu0 0.0
      %1201 = vmatprep.subr.mxu0 0.0
      %1202 = vmatpush1.xpose.msra.mxu0 0.0
      %1203 = vmatprep.subr.mxu0 0.0
      %1204 = vmatpush1.xpose.msra.mxu0 0.0
      %1205 = vmatprep.subr.mxu0 0.0
      %1206 = vmatpush1.xpose.msra.mxu0 0.0
      %1207 = vmatprep.subr.mxu0 0.0
      %1208 = vmatpush1.xpose.msra.mxu0 0.0
      %1209 = vmatprep.subr.mxu0 0.0
      %1210 = vmatpush1.xpose.msra.mxu0 0.0
      %1211 = vmatprep.subr.mxu0 0.0
      %1212 = vmatpush1.xpose.msra.mxu0 0.0
      %1213 = vmatprep.subr.mxu0 0.0
      %1214 = vmatpush1.xpose.msra.mxu0 0.0
      %1215 = vmatprep.subr.mxu0 0.0
      %1216 = vmatpush1.xpose.msra.mxu0 0.0
      %1217 = vmatprep.subr.mxu0 0.0
      %1218 = vmatpush1.xpose.msra.mxu0 0.0
      %1219 = vmatprep.subr.mxu0 0.0
      %1220 = vmatpush1.xpose.msra.mxu0 0.0
      %1221 = vmatprep.subr.mxu0 0.0
      %1222 = vmatpush1.xpose.msra.mxu0 0.0
      %1223 = vmatprep.subr.mxu0 0.0
      %1224 = vmatpush1.xpose.msra.mxu0 0.0
      %1225 = vmatprep.mubr.f32.mxu0 0.0
      %1226 = vmatmul.mubr.f32.gmra.mrb[0].mxu0 %v1157
      %v1227 = vpop.f32.mrb[0].mxu0
      %v1228 = vadd.f32 0.0, %v1227
      %v1229 = vpop.f32.mrb[0].mxu0
      %1230 = vdwg.mxu0
      %v1231 = vmul.f32 %v1228, 0.35355338
      %v1232 = vsel %vm800, %v1231, -1e+30
      %v1233 = vsel %vm720, %v1232, -inf
      %1234 = vmax.xlane.f32.xlu0 %v1233
      %v1235 = vpop.xlane.xlu0 %1234
      %v1236 = vsub.f32 %v1232, %v1235
      %v1237 = vmul.f32 %v1236, 1.442695
      %v1238 = vpow.pop %v1237
      %v1239 = vsel %vm720, %v1238, 0.0
      %1240 = vadd.xlane.f32.xlu0 %v1239
      %v1241 = vpop.xlane.xlu0 %1240
      %v1242 = vrcp.pop %v1241
      %v1243 = vmul.f32 %v1238, %v1242
      %1244 = vrot.lane.b32.xlu0 %v712, 48
      %v1245 = vpop.permute.xlu0 %1244
      %v1248 = vsel %vm720, %v1243, 0
      %1250 = vmatprep.subr.mxu0 0.0
      %1251 = vmatpush1.msra.mxu0 %v1245
      %1252 = vmatprep.subr.mxu0 0.0
      %1253 = vmatpush1.msra.mxu0 0.0
      %1254 = vmatprep.subr.mxu0 0.0
      %1255 = vmatpush1.msra.mxu0 0.0
      %1256 = vmatprep.subr.mxu0 0.0
      %1257 = vmatpush1.msra.mxu0 0.0
      %1258 = vmatprep.subr.mxu0 0.0
      %1259 = vmatpush1.msra.mxu0 0.0
      %1260 = vmatprep.subr.mxu0 0.0
      %1261 = vmatpush1.msra.mxu0 0.0
      %1262 = vmatprep.subr.mxu0 0.0
      %1263 = vmatpush1.msra.mxu0 0.0
      %1264 = vmatprep.subr.mxu0 0.0
      %1265 = vmatpush1.msra.mxu0 0.0
      %1266 = vmatprep.subr.mxu0 0.0
      %1267 = vmatpush1.msra.mxu0 0.0
      %1268 = vmatprep.subr.mxu0 0.0
      %1269 = vmatpush1.msra.mxu0 0.0
      %1270 = vmatprep.subr.mxu0 0.0
      %1271 = vmatpush1.msra.mxu0 0.0
      %1272 = vmatprep.subr.mxu0 0.0
      %1273 = vmatpush1.msra.mxu0 0.0
      %1274 = vmatprep.subr.mxu0 0.0
      %1275 = vmatpush1.msra.mxu0 0.0
      %1276 = vmatprep.subr.mxu0 0.0
      %1277 = vmatpush1.msra.mxu0 0.0
      %1278 = vmatprep.subr.mxu0 0.0
      %1279 = vmatpush1.msra.mxu0 0.0
      %1280 = vmatprep.subr.mxu0 0.0
      %1281 = vmatpush1.msra.mxu0 0.0
      %1282 = vmatprep.subr.mxu0 0.0
      %1283 = vmatpush1.msra.mxu0 0.0
      %1284 = vmatprep.subr.mxu0 0.0
      %1285 = vmatpush1.msra.mxu0 0.0
      %1286 = vmatprep.subr.mxu0 0.0
      %1287 = vmatpush1.msra.mxu0 0.0
      %1288 = vmatprep.subr.mxu0 0.0
      %1289 = vmatpush1.msra.mxu0 0.0
      %1290 = vmatprep.subr.mxu0 0.0
      %1291 = vmatpush1.msra.mxu0 0.0
      %1292 = vmatprep.subr.mxu0 0.0
      %1293 = vmatpush1.msra.mxu0 0.0
      %1294 = vmatprep.subr.mxu0 0.0
      %1295 = vmatpush1.msra.mxu0 0.0
      %1296 = vmatprep.subr.mxu0 0.0
      %1297 = vmatpush1.msra.mxu0 0.0
      %1298 = vmatprep.subr.mxu0 0.0
      %1299 = vmatpush1.msra.mxu0 0.0
      %1300 = vmatprep.subr.mxu0 0.0
      %1301 = vmatpush1.msra.mxu0 0.0
      %1302 = vmatprep.subr.mxu0 0.0
      %1303 = vmatpush1.msra.mxu0 0.0
      %1304 = vmatprep.subr.mxu0 0.0
      %1305 = vmatpush1.msra.mxu0 0.0
      %1306 = vmatprep.subr.mxu0 0.0
      %1307 = vmatpush1.msra.mxu0 0.0
      %1308 = vmatprep.subr.mxu0 0.0
      %1309 = vmatpush1.msra.mxu0 0.0
      %1310 = vmatprep.subr.mxu0 0.0
      %1311 = vmatpush1.msra.mxu0 0.0
      %1312 = vmatprep.subr.mxu0 0.0
      %1313 = vmatpush1.msra.mxu0 0.0
      %1314 = vmatprep.mubr.f32.mxu0 0.0
      %1315 = vmatmul.mubr.f32.gmra.mrb[0].mxu0 %v1248
      %v1316 = vpop.f32.mrb[0].mxu0
      %v1317 = vadd.f32 0.0, %v1316
      %v1318 = vpop.f32.mrb[0].mxu0
      %1319 = vdwg.mxu0
      %v1320 = vpack.c.bf16 %v1317, %v1317
      %v1321 = vld [vmem:[%s4 + $0x8] sm:$0xf]
      %v1323 = vsel %vm720, %v1320, 0
      %v1326 = vsel %vm1063, %v1321, 0
      %1328 = vmatprep.subr.bf16.mxu0 0
      %1329 = vmatpush1.bf16.msra.mxu0 %v1326
      %1330 = vmatprep.subr.bf16.mxu0 0
      %1331 = vmatpush1.bf16.msra.mxu0 0
      %1332 = vmatprep.subr.bf16.mxu0 0
      %1333 = vmatpush1.bf16.msra.mxu0 0
      %1334 = vmatprep.subr.bf16.mxu0 0
      %1335 = vmatpush1.bf16.msra.mxu0 0
      %1336 = vmatprep.subr.bf16.mxu0 0
      %1337 = vmatpush1.bf16.msra.mxu0 0
      %1338 = vmatprep.subr.bf16.mxu0 0
      %1339 = vmatpush1.bf16.msra.mxu0 0
      %1340 = vmatprep.subr.bf16.mxu0 0
      %1341 = vmatpush1.bf16.msra.mxu0 0
      %1342 = vmatprep.subr.bf16.mxu0 0
      %1343 = vmatpush1.bf16.msra.mxu0 0
      %1344 = vmatprep.subr.bf16.mxu0 0
      %1345 = vmatpush1.bf16.msra.mxu0 0
      %1346 = vmatprep.subr.bf16.mxu0 0
      %1347 = vmatpush1.bf16.msra.mxu0 0
      %1348 = vmatprep.subr.bf16.mxu0 0
      %1349 = vmatpush1.bf16.msra.mxu0 0
      %1350 = vmatprep.subr.bf16.mxu0 0
      %1351 = vmatpush1.bf16.msra.mxu0 0
      %1352 = vmatprep.subr.bf16.mxu0 0
      %1353 = vmatpush1.bf16.msra.mxu0 0
      %1354 = vmatprep.subr.bf16.mxu0 0
      %1355 = vmatpush1.bf16.msra.mxu0 0
      %1356 = vmatprep.subr.bf16.mxu0 0
      %1357 = vmatpush1.bf16.msra.mxu0 0
      %1358 = vmatprep.subr.bf16.mxu0 0
      %1359 = vmatpush1.bf16.msra.mxu0 0
      %1360 = vmatprep.mubr.bf16.mxu0 0
      %1361 = vmatmul.mubr.bf16.gmra.mrb[0].mxu0 %v1323
      %v1362 = vpop.f32.mrb[0].mxu0
      %v1363 = vadd.f32 0.0, %v1362
      %v1364 = vpop.f32.mrb[0].mxu0
      %v1365 = vpop.f32.mrb[0].mxu0
      %v1366 = vpop.f32.mrb[0].mxu0
      %1367 = vdwg.mxu0
      %v1368 = vadd.f32 %v1148, %v1363
      %1369 = vrot.lane.b32.xlu0 %v712, 104
      %v1370 = vpop.permute.xlu0 %1369
      %1371 = vrot.lane.b32.xlu0 %v712, 72
      %v1372 = vpop.permute.xlu0 %1371
      %v1373 = vsel %vm720, %v1370, 0
      %v1375 = vsel %vm720, %v1372, 0
      %1377 = vmatprep.subr.mxu0 0.0
      %1378 = vmatpush1.xpose.msra.mxu0 %v1375
      %1379 = vmatprep.subr.mxu0 0.0
      %1380 = vmatpush1.xpose.msra.mxu0 0.0
      %1381 = vmatprep.subr.mxu0 0.0
      %1382 = vmatpush1.xpose.msra.mxu0 0.0
      %1383 = vmatprep.subr.mxu0 0.0
      %1384 = vmatpush1.xpose.msra.mxu0 0.0
      %1385 = vmatprep.subr.mxu0 0.0
      %1386 = vmatpush1.xpose.msra.mxu0 0.0
      %1387 = vmatprep.subr.mxu0 0.0
      %1388 = vmatpush1.xpose.msra.mxu0 0.0
      %1389 = vmatprep.subr.mxu0 0.0
      %1390 = vmatpush1.xpose.msra.mxu0 0.0
      %1391 = vmatprep.subr.mxu0 0.0
      %1392 = vmatpush1.xpose.msra.mxu0 0.0
      %1393 = vmatprep.subr.mxu0 0.0
      %1394 = vmatpush1.xpose.msra.mxu0 0.0
      %1395 = vmatprep.subr.mxu0 0.0
      %1396 = vmatpush1.xpose.msra.mxu0 0.0
      %1397 = vmatprep.subr.mxu0 0.0
      %1398 = vmatpush1.xpose.msra.mxu0 0.0
      %1399 = vmatprep.subr.mxu0 0.0
      %1400 = vmatpush1.xpose.msra.mxu0 0.0
      %1401 = vmatprep.subr.mxu0 0.0
      %1402 = vmatpush1.xpose.msra.mxu0 0.0
      %1403 = vmatprep.subr.mxu0 0.0
      %1404 = vmatpush1.xpose.msra.mxu0 0.0
      %1405 = vmatprep.subr.mxu0 0.0
      %1406 = vmatpush1.xpose.msra.mxu0 0.0
      %1407 = vmatprep.subr.mxu0 0.0
      %1408 = vmatpush1.xpose.msra.mxu0 0.0
      %1409 = vmatprep.subr.mxu0 0.0
      %1410 = vmatpush1.xpose.msra.mxu0 0.0
      %1411 = vmatprep.subr.mxu0 0.0
      %1412 = vmatpush1.xpose.msra.mxu0 0.0
      %1413 = vmatprep.subr.mxu0 0.0
      %1414 = vmatpush1.xpose.msra.mxu0 0.0
      %1415 = vmatprep.subr.mxu0 0.0
      %1416 = vmatpush1.xpose.msra.mxu0 0.0
      %1417 = vmatprep.subr.mxu0 0.0
      %1418 = vmatpush1.xpose.msra.mxu0 0.0
      %1419 = vmatprep.subr.mxu0 0.0
      %1420 = vmatpush1.xpose.msra.mxu0 0.0
      %1421 = vmatprep.subr.mxu0 0.0
      %1422 = vmatpush1.xpose.msra.mxu0 0.0
      %1423 = vmatprep.subr.mxu0 0.0
      %1424 = vmatpush1.xpose.msra.mxu0 0.0
      %1425 = vmatprep.subr.mxu0 0.0
      %1426 = vmatpush1.xpose.msra.mxu0 0.0
      %1427 = vmatprep.subr.mxu0 0.0
      %1428 = vmatpush1.xpose.msra.mxu0 0.0
      %1429 = vmatprep.subr.mxu0 0.0
      %1430 = vmatpush1.xpose.msra.mxu0 0.0
      %1431 = vmatprep.subr.mxu0 0.0
      %1432 = vmatpush1.xpose.msra.mxu0 0.0
      %1433 = vmatprep.subr.mxu0 0.0
      %1434 = vmatpush1.xpose.msra.mxu0 0.0
      %1435 = vmatprep.subr.mxu0 0.0
      %1436 = vmatpush1.xpose.msra.mxu0 0.0
      %1437 = vmatprep.subr.mxu0 0.0
      %1438 = vmatpush1.xpose.msra.mxu0 0.0
      %1439 = vmatprep.subr.mxu0 0.0
      %1440 = vmatpush1.xpose.msra.mxu0 0.0
      %1441 = vmatprep.mubr.f32.mxu0 0.0
      %1442 = vmatmul.mubr.f32.gmra.mrb[0].mxu0 %v1373
      %v1443 = vpop.f32.mrb[0].mxu0
      %v1444 = vadd.f32 0.0, %v1443
      %v1445 = vpop.f32.mrb[0].mxu0
      %1446 = vdwg.mxu0
      %v1447 = vmul.f32 %v1444, 0.35355338
      %v1448 = vsel %vm800, %v1447, -1e+30
      %v1449 = vsel %vm720, %v1448, -inf
      %1450 = vmax.xlane.f32.xlu0 %v1449
      %v1451 = vpop.xlane.xlu0 %1450
      %v1452 = vsub.f32 %v1448, %v1451
      %v1453 = vmul.f32 %v1452, 1.442695
      %v1454 = vpow.pop %v1453
      %v1455 = vsel %vm720, %v1454, 0.0
      %1456 = vadd.xlane.f32.xlu0 %v1455
      %v1457 = vpop.xlane.xlu0 %1456
      %v1458 = vrcp.pop %v1457
      %v1459 = vmul.f32 %v1454, %v1458
      %1460 = vrot.lane.b32.xlu0 %v712, 40
      %v1461 = vpop.permute.xlu0 %1460
      %v1464 = vsel %vm720, %v1459, 0
      %1466 = vmatprep.subr.mxu0 0.0
      %1467 = vmatpush1.msra.mxu0 %v1461
      %1468 = vmatprep.subr.mxu0 0.0
      %1469 = vmatpush1.msra.mxu0 0.0
      %1470 = vmatprep.subr.mxu0 0.0
      %1471 = vmatpush1.msra.mxu0 0.0
      %1472 = vmatprep.subr.mxu0 0.0
      %1473 = vmatpush1.msra.mxu0 0.0
      %1474 = vmatprep.subr.mxu0 0.0
      %1475 = vmatpush1.msra.mxu0 0.0
      %1476 = vmatprep.subr.mxu0 0.0
      %1477 = vmatpush1.msra.mxu0 0.0
      %1478 = vmatprep.subr.mxu0 0.0
      %1479 = vmatpush1.msra.mxu0 0.0
      %1480 = vmatprep.subr.mxu0 0.0
      %1481 = vmatpush1.msra.mxu0 0.0
      %1482 = vmatprep.subr.mxu0 0.0
      %1483 = vmatpush1.msra.mxu0 0.0
      %1484 = vmatprep.subr.mxu0 0.0
      %1485 = vmatpush1.msra.mxu0 0.0
      %1486 = vmatprep.subr.mxu0 0.0
      %1487 = vmatpush1.msra.mxu0 0.0
      %1488 = vmatprep.subr.mxu0 0.0
      %1489 = vmatpush1.msra.mxu0 0.0
      %1490 = vmatprep.subr.mxu0 0.0
      %1491 = vmatpush1.msra.mxu0 0.0
      %1492 = vmatprep.subr.mxu0 0.0
      %1493 = vmatpush1.msra.mxu0 0.0
      %1494 = vmatprep.subr.mxu0 0.0
      %1495 = vmatpush1.msra.mxu0 0.0
      %1496 = vmatprep.subr.mxu0 0.0
      %1497 = vmatpush1.msra.mxu0 0.0
      %1498 = vmatprep.subr.mxu0 0.0
      %1499 = vmatpush1.msra.mxu0 0.0
      %1500 = vmatprep.subr.mxu0 0.0
      %1501 = vmatpush1.msra.mxu0 0.0
      %1502 = vmatprep.subr.mxu0 0.0
      %1503 = vmatpush1.msra.mxu0 0.0
      %1504 = vmatprep.subr.mxu0 0.0
      %1505 = vmatpush1.msra.mxu0 0.0
      %1506 = vmatprep.subr.mxu0 0.0
      %1507 = vmatpush1.msra.mxu0 0.0
      %1508 = vmatprep.subr.mxu0 0.0
      %1509 = vmatpush1.msra.mxu0 0.0
      %1510 = vmatprep.subr.mxu0 0.0
      %1511 = vmatpush1.msra.mxu0 0.0
      %1512 = vmatprep.subr.mxu0 0.0
      %1513 = vmatpush1.msra.mxu0 0.0
      %1514 = vmatprep.subr.mxu0 0.0
      %1515 = vmatpush1.msra.mxu0 0.0
      %1516 = vmatprep.subr.mxu0 0.0
      %1517 = vmatpush1.msra.mxu0 0.0
      %1518 = vmatprep.subr.mxu0 0.0
      %1519 = vmatpush1.msra.mxu0 0.0
      %1520 = vmatprep.subr.mxu0 0.0
      %1521 = vmatpush1.msra.mxu0 0.0
      %1522 = vmatprep.subr.mxu0 0.0
      %1523 = vmatpush1.msra.mxu0 0.0
      %1524 = vmatprep.subr.mxu0 0.0
      %1525 = vmatpush1.msra.mxu0 0.0
      %1526 = vmatprep.subr.mxu0 0.0
      %1527 = vmatpush1.msra.mxu0 0.0
      %1528 = vmatprep.subr.mxu0 0.0
      %1529 = vmatpush1.msra.mxu0 0.0
      %1530 = vmatprep.mubr.f32.mxu0 0.0
      %1531 = vmatmul.mubr.f32.gmra.mrb[0].mxu0 %v1464
      %v1532 = vpop.f32.mrb[0].mxu0
      %v1533 = vadd.f32 0.0, %v1532
      %v1534 = vpop.f32.mrb[0].mxu0
      %1535 = vdwg.mxu0
      %v1536 = vpack.c.bf16 %v1533, %v1533
      %v1537 = vld [vmem:[%s4 + $0xc] sm:$0xf]
      %v1539 = vsel %vm720, %v1536, 0
      %v1542 = vsel %vm1063, %v1537, 0
      %1544 = vmatprep.subr.bf16.mxu0 0
      %1545 = vmatpush1.bf16.msra.mxu0 %v1542
      %1546 = vmatprep.subr.bf16.mxu0 0
      %1547 = vmatpush1.bf16.msra.mxu0 0
      %1548 = vmatprep.subr.bf16.mxu0 0
      %1549 = vmatpush1.bf16.msra.mxu0 0
      %1550 = vmatprep.subr.bf16.mxu0 0
      %1551 = vmatpush1.bf16.msra.mxu0 0
      %1552 = vmatprep.subr.bf16.mxu0 0
      %1553 = vmatpush1.bf16.msra.mxu0 0
      %1554 = vmatprep.subr.bf16.mxu0 0
      %1555 = vmatpush1.bf16.msra.mxu0 0
      %1556 = vmatprep.subr.bf16.mxu0 0
      %1557 = vmatpush1.bf16.msra.mxu0 0
      %1558 = vmatprep.subr.bf16.mxu0 0
      %1559 = vmatpush1.bf16.msra.mxu0 0
      %1560 = vmatprep.subr.bf16.mxu0 0
      %1561 = vmatpush1.bf16.msra.mxu0 0
      %1562 = vmatprep.subr.bf16.mxu0 0
      %1563 = vmatpush1.bf16.msra.mxu0 0
      %1564 = vmatprep.subr.bf16.mxu0 0
      %1565 = vmatpush1.bf16.msra.mxu0 0
      %1566 = vmatprep.subr.bf16.mxu0 0
      %1567 = vmatpush1.bf16.msra.mxu0 0
      %1568 = vmatprep.subr.bf16.mxu0 0
      %1569 = vmatpush1.bf16.msra.mxu0 0
      %1570 = vmatprep.subr.bf16.mxu0 0
      %1571 = vmatpush1.bf16.msra.mxu0 0
      %1572 = vmatprep.subr.bf16.mxu0 0
      %1573 = vmatpush1.bf16.msra.mxu0 0
      %1574 = vmatprep.subr.bf16.mxu0 0
      %1575 = vmatpush1.bf16.msra.mxu0 0
      %1576 = vmatprep.mubr.bf16.mxu0 0
      %1577 = vmatmul.mubr.bf16.gmra.mrb[0].mxu0 %v1539
      %v1578 = vpop.f32.mrb[0].mxu0
      %v1579 = vadd.f32 0.0, %v1578
      %v1580 = vpop.f32.mrb[0].mxu0
      %v1581 = vpop.f32.mrb[0].mxu0
      %v1582 = vpop.f32.mrb[0].mxu0
      %1583 = vdwg.mxu0
      %v1584 = vadd.f32 %v1368, %v1579
      %v1585 = vld [vmem:[%s5] sm:$0x1]
      %v1587 = vlaneseq
      %v1588 = vshrl.u32 %v1587, 7
      %v1589 = vsub.s32 0, %v1588
      %v1590 = vrot.slane %v1585, %v1589
      %v1592 = vadd.f32 %v1584, %v1590
      %v1593 = vadd.f32 %v646, %v1592
      %v1594 = vld [vmem:[%s6] sm:$0x1]
      %v1595 = vld [vmem:[%s7] sm:$0x1]
      %v1596 = vsel %vm673, %v1593, 0.0
      %1597 = vadd.xlane.f32.xlu0 %v1596
      %v1598 = vpop.xlane.xlu0 %1597
      %v1599 = vrcp.pop 32.0
      %v1600 = vmul.f32 %v1598, %v1599
      %v1601 = vsub.f32 %v1593, %v1600
      %v1602 = vmul.f32 %v1601, %v1601
      %v1603 = vsel %vm673, %v1602, 0.0
      %1604 = vadd.xlane.f32.xlu0 %v1603
      %v1605 = vpop.xlane.xlu0 %1604
      %v1606 = vmul.f32 %v1605, %v1599
      %v1607 = vadd.f32 %v1606, 1e-05
      %v1608 = vrsqrt.pop %v1607
      %v1609 = vmul.f32 %v1601, %v1608
      %v1611 = vlaneseq
      %v1612 = vshrl.u32 %v1611, 7
      %v1613 = vsub.s32 0, %v1612
      %v1614 = vrot.slane %v1594, %v1613
      %v1616 = vmul.f32 %v1609, %v1614
      %v1618 = vlaneseq
      %v1619 = vshrl.u32 %v1618, 7
      %v1620 = vsub.s32 0, %v1619
      %v1621 = vrot.slane %v1595, %v1620
      %v1623 = vadd.f32 %v1616, %v1621
      %v1624 = vpack.c.bf16 %v1623, %v1623
      %v1625 = vld [vmem:[%s8] sm:$0xf]
      %v1626 = vld [vmem:[%s8 + $0x4] sm:$0xf]
      %v1627 = vld [vmem:[%s8 + $0x8] sm:$0xf]
      %v1628 = vld [vmem:[%s8 + $0xc] sm:$0xf]
      %v1629 = vld [vmem:[%s9] sm:$0x1]
      %v1631 = vlaneseq
      %v1632 = vshrl.u32 %v1631, 7
      %v1633 = vsub.s32 0, %v1632
      %v1634 = vrot.slane %v1629, %v1633
      %v1640 = vunpack.c.l.b16 %v1625
      %v1641 = vunpack.c.l.b16 %v1626
      %v1642 = vunpack.c.l.b16 %v1627
      %v1643 = vunpack.c.l.b16 %v1628
      %v1644 = vpack.c.b16 %v1641, %v1640
      %v1645 = vpack.c.b16 %v1643, %v1642
      %v1649 = vsel %vm673, %v1624, 0
      %1651 = vmatprep.subr.bf16.mxu0 0
      %1652 = vmatpush1.bf16.msra.mxu0 %v1644
      %1653 = vmatprep.subr.bf16.mxu0 0
      %1654 = vmatpush1.bf16.msra.mxu0 %v1645
      %1655 = vmatprep.subr.bf16.mxu0 0
      %1656 = vmatpush1.bf16.msra.mxu0 0
      %1657 = vmatprep.subr.bf16.mxu0 0
      %1658 = vmatpush1.bf16.msra.mxu0 0
      %1659 = vmatprep.subr.bf16.mxu0 0
      %1660 = vmatpush1.bf16.msra.mxu0 0
      %1661 = vmatprep.subr.bf16.mxu0 0
      %1662 = vmatpush1.bf16.msra.mxu0 0
      %1663 = vmatprep.subr.bf16.mxu0 0
      %1664 = vmatpush1.bf16.msra.mxu0 0
      %1665 = vmatprep.subr.bf16.mxu0 0
      %1666 = vmatpush1.bf16.msra.mxu0 0
      %1667 = vmatprep.subr.bf16.mxu0 0
      %1668 = vmatpush1.bf16.msra.mxu0 0
      %1669 = vmatprep.subr.bf16.mxu0 0
      %1670 = vmatpush1.bf16.msra.mxu0 0
      %1671 = vmatprep.subr.bf16.mxu0 0
      %1672 = vmatpush1.bf16.msra.mxu0 0
      %1673 = vmatprep.subr.bf16.mxu0 0
      %1674 = vmatpush1.bf16.msra.mxu0 0
      %1675 = vmatprep.subr.bf16.mxu0 0
      %1676 = vmatpush1.bf16.msra.mxu0 0
      %1677 = vmatprep.subr.bf16.mxu0 0
      %1678 = vmatpush1.bf16.msra.mxu0 0
      %1679 = vmatprep.subr.bf16.mxu0 0
      %1680 = vmatpush1.bf16.msra.mxu0 0
      %1681 = vmatprep.subr.bf16.mxu0 0
      %1682 = vmatpush1.bf16.msra.mxu0 0
      %1683 = vmatprep.mubr.bf16.mxu0 0
      %1684 = vmatmul.mubr.bf16.gmra.mrb[0].mxu0 %v1649
      %v1685 = vpop.f32.mrb[0].mxu0
      %v1686 = vadd.f32 %v1634, %v1685
      %v1687 = vpop.f32.mrb[0].mxu0
      %v1688 = vpop.f32.mrb[0].mxu0
      %v1689 = vpop.f32.mrb[0].mxu0
      %1690 = vdwg.mxu0
      %v1691 = vpack.c.bf16 %v648, %v647
      %1692 = vrot.lane.b32.xlu0 %v1644, 96
      %v1693 = vpop.permute.xlu0 %1692
      %1694 = vrot.lane.b32.xlu0 %v1645, 96
      %v1695 = vpop.permute.xlu0 %1694
      %1698 = vrot.lane.b32.xlu0 %v1634, 96
      %v1699 = vpop.permute.xlu0 %1698
      %v1702 = vsel %vm673, %v1691, 0
      %1704 = vmatprep.subr.bf16.mxu0 0
      %1705 = vmatpush1.bf16.msra.mxu0 %v1693
      %1706 = vmatprep.subr.bf16.mxu0 0
      %1707 = vmatpush1.bf16.msra.mxu0 %v1695
      %1708 = vmatprep.subr.bf16.mxu0 0
      %1709 = vmatpush1.bf16.msra.mxu0 0
      %1710 = vmatprep.subr.bf16.mxu0 0
      %1711 = vmatpush1.bf16.msra.mxu0 0
      %1712 = vmatprep.subr.bf16.mxu0 0
      %1713 = vmatpush1.bf16.msra.mxu0 0
      %1714 = vmatprep.subr.bf16.mxu0 0
      %1715 = vmatpush1.bf16.msra.mxu0 0
      %1716 = vmatprep.subr.bf16.mxu0 0
      %1717 = vmatpush1.bf16.msra.mxu0 0
      %1718 = vmatprep.subr.bf16.mxu0 0
      %1719 = vmatpush1.bf16.msra.mxu0 0
      %1720 = vmatprep.subr.bf16.mxu0 0
      %1721 = vmatpush1.bf16.msra.mxu0 0
      %1722 = vmatprep.subr.bf16.mxu0 0
      %1723 = vmatpush1.bf16.msra.mxu0 0
      %1724 = vmatprep.subr.bf16.mxu0 0
      %1725 = vmatpush1.bf16.msra.mxu0 0
      %1726 = vmatprep.subr.bf16.mxu0 0
      %1727 = vmatpush1.bf16.msra.mxu0 0
      %1728 = vmatprep.subr.bf16.mxu0 0
      %1729 = vmatpush1.bf16.msra.mxu0 0
      %1730 = vmatprep.subr.bf16.mxu0 0
      %1731 = vmatpush1.bf16.msra.mxu0 0
      %1732 = vmatprep.subr.bf16.mxu0 0
      %1733 = vmatpush1.bf16.msra.mxu0 0
      %1734 = vmatprep.subr.bf16.mxu0 0
      %1735 = vmatpush1.bf16.msra.mxu0 0
      %1736 = vmatprep.mubr.bf16.mxu0 0
      %1737 = vmatmul.mubr.bf16.gmra.mrb[0].mxu0 %v1702
      %v1738 = vpop.f32.mrb[0].mxu0
      %v1739 = vadd.f32 %v1699, %v1738
      %v1740 = vpop.f32.mrb[0].mxu0
      %v1741 = vpop.f32.mrb[0].mxu0
      %v1742 = vadd.f32 %v1699, %v1741
      %v1743 = vpop.f32.mrb[0].mxu0
      %1744 = vdwg.mxu0
      %v1746 = vsel %vm720, %v1686, 0
      %v1749 = vsel %vm720, %v1739, 0
      %v1752 = vsel %vm720, %v1742, 0
      %1754 = vmatprep.subr.mxu0 0.0
      %1755 = vmatpush1.xpose.msra.mxu0 %v1749
      %1756 = vmatprep.subr.mxu0 0.0
      %1757 = vmatpush1.xpose.msra.mxu0 %v1752
      %1758 = vmatprep.subr.mxu0 0.0
      %1759 = vmatpush1.xpose.msra.mxu0 0.0
      %1760 = vmatprep.subr.mxu0 0.0
      %1761 = vmatpush1.xpose.msra.mxu0 0.0
      %1762 = vmatprep.subr.mxu0 0.0
      %1763 = vmatpush1.xpose.msra.mxu0 0.0
      %1764 = vmatprep.subr.mxu0 0.0
      %1765 = vmatpush1.xpose.msra.mxu0 0.0
      %1766 = vmatprep.subr.mxu0 0.0
      %1767 = vmatpush1.xpose.msra.mxu0 0.0
      %1768 = vmatprep.subr.mxu0 0.0
      %1769 = vmatpush1.xpose.msra.mxu0 0.0
      %1770 = vmatprep.subr.mxu0 0.0
      %1771 = vmatpush1.xpose.msra.mxu0 0.0
      %1772 = vmatprep.subr.mxu0 0.0
      %1773 = vmatpush1.xpose.msra.mxu0 0.0
      %1774 = vmatprep.subr.mxu0 0.0
      %1775 = vmatpush1.xpose.msra.mxu0 0.0
      %1776 = vmatprep.subr.mxu0 0.0
      %1777 = vmatpush1.xpose.msra.mxu0 0.0
      %1778 = vmatprep.subr.mxu0 0.0
      %1779 = vmatpush1.xpose.msra.mxu0 0.0
      %1780 = vmatprep.subr.mxu0 0.0
      %1781 = vmatpush1.xpose.msra.mxu0 0.0
      %1782 = vmatprep.subr.mxu0 0.0
      %1783 = vmatpush1.xpose.msra.mxu0 0.0
      %1784 = vmatprep.subr.mxu0 0.0
      %1785 = vmatpush1.xpose.msra.mxu0 0.0
      %1786 = vmatprep.subr.mxu0 0.0
      %1787 = vmatpush1.xpose.msra.mxu0 0.0
      %1788 = vmatprep.subr.mxu0 0.0
      %1789 = vmatpush1.xpose.msra.mxu0 0.0
      %1790 = vmatprep.subr.mxu0 0.0
      %1791 = vmatpush1.xpose.msra.mxu0 0.0
      %1792 = vmatprep.subr.mxu0 0.0
      %1793 = vmatpush1.xpose.msra.mxu0 0.0
      %1794 = vmatprep.subr.mxu0 0.0
      %1795 = vmatpush1.xpose.msra.mxu0 0.0
      %1796 = vmatprep.subr.mxu0 0.0
      %1797 = vmatpush1.xpose.msra.mxu0 0.0
      %1798 = vmatprep.subr.mxu0 0.0
      %1799 = vmatpush1.xpose.msra.mxu0 0.0
      %1800 = vmatprep.subr.mxu0 0.0
      %1801 = vmatpush1.xpose.msra.mxu0 0.0
      %1802 = vmatprep.subr.mxu0 0.0
      %1803 = vmatpush1.xpose.msra.mxu0 0.0
      %1804 = vmatprep.subr.mxu0 0.0
      %1805 = vmatpush1.xpose.msra.mxu0 0.0
      %1806 = vmatprep.subr.mxu0 0.0
      %1807 = vmatpush1.xpose.msra.mxu0 0.0
      %1808 = vmatprep.subr.mxu0 0.0
      %1809 = vmatpush1.xpose.msra.mxu0 0.0
      %1810 = vmatprep.subr.mxu0 0.0
      %1811 = vmatpush1.xpose.msra.mxu0 0.0
      %1812 = vmatprep.subr.mxu0 0.0
      %1813 = vmatpush1.xpose.msra.mxu0 0.0
      %1814 = vmatprep.subr.mxu0 0.0
      %1815 = vmatpush1.xpose.msra.mxu0 0.0
      %1816 = vmatprep.subr.mxu0 0.0
      %1817 = vmatpush1.xpose.msra.mxu0 0.0
      %1818 = vmatprep.mubr.f32.mxu0 0.0
      %1819 = vmatmul.mubr.f32.gmra.mrb[0].mxu0 %v1746
      %v1820 = vpop.f32.mrb[0].mxu0
      %v1821 = vadd.f32 0.0, %v1820
      %v1822 = vpop.f32.mrb[0].mxu0
      %1823 = vdwg.mxu0
      %v1824 = vmul.f32 %v1821, 0.35355338
      %vm1825 = vcmask 80896
      %v1826 = vsel %vm1825, %v1824, -inf
      %1827 = vmax.xlane.f32.xlu0 %v1826
      %v1828 = vpop.xlane.xlu0 %1827
      %v1829 = vsub.f32 %v1824, %v1828
      %v1830 = vmul.f32 %v1829, 1.442695
      %v1831 = vpow.pop %v1830
      %v1832 = vsel %vm1825, %v1831, 0.0
      %1833 = vadd.xlane.f32.xlu0 %v1832
      %v1834 = vpop.xlane.xlu0 %1833
      %v1835 = vrcp.pop %v1834
      %v1836 = vmul.f32 %v1831, %v1835
      %1837 = vrot.lane.b32.xlu0 %v1739, 96
      %v1838 = vpop.permute.xlu0 %1837
      %1839 = vrot.lane.b32.xlu0 %v1742, 96
      %v1840 = vpop.permute.xlu0 %1839
      %v1843 = vsel %vm1825, %v1836, 0
      %vm1845 = vcmask 1041408
      %v1846 = vsel %vm1845, %v1840, 0
      %1848 = vmatprep.subr.mxu0 0.0
      %1849 = vmatpush1.msra.mxu0 %v1838
      %1850 = vmatprep.subr.mxu0 0.0
      %1851 = vmatpush1.msra.mxu0 %v1846
      %1852 = vmatprep.subr.mxu0 0.0
      %1853 = vmatpush1.msra.mxu0 0.0
      %1854 = vmatprep.subr.mxu0 0.0
      %1855 = vmatpush1.msra.mxu0 0.0
      %1856 = vmatprep.subr.mxu0 0.0
      %1857 = vmatpush1.msra.mxu0 0.0
      %1858 = vmatprep.subr.mxu0 0.0
      %1859 = vmatpush1.msra.mxu0 0.0
      %1860 = vmatprep.subr.mxu0 0.0
      %1861 = vmatpush1.msra.mxu0 0.0
      %1862 = vmatprep.subr.mxu0 0.0
      %1863 = vmatpush1.msra.mxu0 0.0
      %1864 = vmatprep.subr.mxu0 0.0
      %1865 = vmatpush1.msra.mxu0 0.0
      %1866 = vmatprep.subr.mxu0 0.0
      %1867 = vmatpush1.msra.mxu0 0.0
      %1868 = vmatprep.subr.mxu0 0.0
      %1869 = vmatpush1.msra.mxu0 0.0
      %1870 = vmatprep.subr.mxu0 0.0
      %1871 = vmatpush1.msra.mxu0 0.0
      %1872 = vmatprep.subr.mxu0 0.0
      %1873 = vmatpush1.msra.mxu0 0.0
      %1874 = vmatprep.subr.mxu0 0.0
      %1875 = vmatpush1.msra.mxu0 0.0
      %1876 = vmatprep.subr.mxu0 0.0
      %1877 = vmatpush1.msra.mxu0 0.0
      %1878 = vmatprep.subr.mxu0 0.0
      %1879 = vmatpush1.msra.mxu0 0.0
      %1880 = vmatprep.subr.mxu0 0.0
      %1881 = vmatpush1.msra.mxu0 0.0
      %1882 = vmatprep.subr.mxu0 0.0
      %1883 = vmatpush1.msra.mxu0 0.0
      %1884 = vmatprep.subr.mxu0 0.0
      %1885 = vmatpush1.msra.mxu0 0.0
      %1886 = vmatprep.subr.mxu0 0.0
      %1887 = vmatpush1.msra.mxu0 0.0
      %1888 = vmatprep.subr.mxu0 0.0
      %1889 = vmatpush1.msra.mxu0 0.0
      %1890 = vmatprep.subr.mxu0 0.0
      %1891 = vmatpush1.msra.mxu0 0.0
      %1892 = vmatprep.subr.mxu0 0.0
      %1893 = vmatpush1.msra.mxu0 0.0
      %1894 = vmatprep.subr.mxu0 0.0
      %1895 = vmatpush1.msra.mxu0 0.0
      %1896 = vmatprep.subr.mxu0 0.0
      %1897 = vmatpush1.msra.mxu0 0.0
      %1898 = vmatprep.subr.mxu0 0.0
      %1899 = vmatpush1.msra.mxu0 0.0
      %1900 = vmatprep.subr.mxu0 0.0
      %1901 = vmatpush1.msra.mxu0 0.0
      %1902 = vmatprep.subr.mxu0 0.0
      %1903 = vmatpush1.msra.mxu0 0.0
      %1904 = vmatprep.subr.mxu0 0.0
      %1905 = vmatpush1.msra.mxu0 0.0
      %1906 = vmatprep.subr.mxu0 0.0
      %1907 = vmatpush1.msra.mxu0 0.0
      %1908 = vmatprep.subr.mxu0 0.0
      %1909 = vmatpush1.msra.mxu0 0.0
      %1910 = vmatprep.subr.mxu0 0.0
      %1911 = vmatpush1.msra.mxu0 0.0
      %1912 = vmatprep.mubr.f32.mxu0 0.0
      %1913 = vmatmul.mubr.f32.gmra.mrb[0].mxu0 %v1843
      %v1914 = vpop.f32.mrb[0].mxu0
      %v1915 = vadd.f32 0.0, %v1914
      %v1916 = vpop.f32.mrb[0].mxu0
      %1917 = vdwg.mxu0
      %v1918 = vpack.c.bf16 %v1915, %v1915
      %v1919 = vld [vmem:[%s10] sm:$0xf]
      %1920 = vrot.lane.b32.xlu0 %v1686, 120
      %v1921 = vpop.permute.xlu0 %1920
      %1922 = vrot.lane.b32.xlu0 %v1739, 120
      %v1923 = vpop.permute.xlu0 %1922
      %1924 = vrot.lane.b32.xlu0 %v1742, 120
      %v1925 = vpop.permute.xlu0 %1924
      %v1926 = vsel %vm720, %v1921, 0
      %v1928 = vsel %vm720, %v1923, 0
      %v1930 = vsel %vm720, %v1925, 0
      %1932 = vmatprep.subr.mxu0 0.0
      %1933 = vmatpush1.xpose.msra.mxu0 %v1928
      %1934 = vmatprep.subr.mxu0 0.0
      %1935 = vmatpush1.xpose.msra.mxu0 %v1930
      %1936 = vmatprep.subr.mxu0 0.0
      %1937 = vmatpush1.xpose.msra.mxu0 0.0
      %1938 = vmatprep.subr.mxu0 0.0
      %1939 = vmatpush1.xpose.msra.mxu0 0.0
      %1940 = vmatprep.subr.mxu0 0.0
      %1941 = vmatpush1.xpose.msra.mxu0 0.0
      %1942 = vmatprep.subr.mxu0 0.0
      %1943 = vmatpush1.xpose.msra.mxu0 0.0
      %1944 = vmatprep.subr.mxu0 0.0
      %1945 = vmatpush1.xpose.msra.mxu0 0.0
      %1946 = vmatprep.subr.mxu0 0.0
      %1947 = vmatpush1.xpose.msra.mxu0 0.0
      %1948 = vmatprep.subr.mxu0 0.0
      %1949 = vmatpush1.xpose.msra.mxu0 0.0
      %1950 = vmatprep.subr.mxu0 0.0
      %1951 = vmatpush1.xpose.msra.mxu0 0.0
      %1952 = vmatprep.subr.mxu0 0.0
      %1953 = vmatpush1.xpose.msra.mxu0 0.0
      %1954 = vmatprep.subr.mxu0 0.0
      %1955 = vmatpush1.xpose.msra.mxu0 0.0
      %1956 = vmatprep.subr.mxu0 0.0
      %1957 = vmatpush1.xpose.msra.mxu0 0.0
      %1958 = vmatprep.subr.mxu0 0.0
      %1959 = vmatpush1.xpose.msra.mxu0 0.0
      %1960 = vmatprep.subr.mxu0 0.0
      %1961 = vmatpush1.xpose.msra.mxu0 0.0
      %1962 = vmatprep.subr.mxu0 0.0
      %1963 = vmatpush1.xpose.msra.mxu0 0.0
      %1964 = vmatprep.subr.mxu0 0.0
      %1965 = vmatpush1.xpose.msra.mxu0 0.0
      %1966 = vmatprep.subr.mxu0 0.0
      %1967 = vmatpush1.xpose.msra.mxu0 0.0
      %1968 = vmatprep.subr.mxu0 0.0
      %1969 = vmatpush1.xpose.msra.mxu0 0.0
      %1970 = vmatprep.subr.mxu0 0.0
      %1971 = vmatpush1.xpose.msra.mxu0 0.0
      %1972 = vmatprep.subr.mxu0 0.0
      %1973 = vmatpush1.xpose.msra.mxu0 0.0
      %1974 = vmatprep.subr.mxu0 0.0
      %1975 = vmatpush1.xpose.msra.mxu0 0.0
      %1976 = vmatprep.subr.mxu0 0.0
      %1977 = vmatpush1.xpose.msra.mxu0 0.0
      %1978 = vmatprep.subr.mxu0 0.0
      %1979 = vmatpush1.xpose.msra.mxu0 0.0
      %1980 = vmatprep.subr.mxu0 0.0
      %1981 = vmatpush1.xpose.msra.mxu0 0.0
      %1982 = vmatprep.subr.mxu0 0.0
      %1983 = vmatpush1.xpose.msra.mxu0 0.0
      %1984 = vmatprep.subr.mxu0 0.0
      %1985 = vmatpush1.xpose.msra.mxu0 0.0
      %1986 = vmatprep.subr.mxu0 0.0
      %1987 = vmatpush1.xpose.msra.mxu0 0.0
      %1988 = vmatprep.subr.mxu0 0.0
      %1989 = vmatpush1.xpose.msra.mxu0 0.0
      %1990 = vmatprep.subr.mxu0 0.0
      %1991 = vmatpush1.xpose.msra.mxu0 0.0
      %1992 = vmatprep.subr.mxu0 0.0
      %1993 = vmatpush1.xpose.msra.mxu0 0.0
      %1994 = vmatprep.subr.mxu0 0.0
      %1995 = vmatpush1.xpose.msra.mxu0 0.0
      %1996 = vmatprep.mubr.f32.mxu0 0.0
      %1997 = vmatmul.mubr.f32.gmra.mrb[0].mxu0 %v1926
      %v1998 = vpop.f32.mrb[0].mxu0
      %v1999 = vadd.f32 0.0, %v1998
      %v2000 = vpop.f32.mrb[0].mxu0
      %2001 = vdwg.mxu0
      %v2002 = vmul.f32 %v1999, 0.35355338
      %v2003 = vsel %vm1825, %v2002, -inf
      %2004 = vmax.xlane.f32.xlu0 %v2003
      %v2005 = vpop.xlane.xlu0 %2004
      %v2006 = vsub.f32 %v2002, %v2005
      %v2007 = vmul.f32 %v2006, 1.442695
      %v2008 = vpow.pop %v2007
      %v2009 = vsel %vm1825, %v2008, 0.0
      %2010 = vadd.xlane.f32.xlu0 %v2009
      %v2011 = vpop.xlane.xlu0 %2010
      %v2012 = vrcp.pop %v2011
      %v2013 = vmul.f32 %v2008, %v2012
      %2014 = vrot.lane.b32.xlu0 %v1739, 88
      %v2015 = vpop.permute.xlu0 %2014
      %2016 = vrot.lane.b32.xlu0 %v1742, 88
      %v2017 = vpop.permute.xlu0 %2016
      %v2020 = vsel %vm1825, %v2013, 0
      %v2022 = vsel %vm1845, %v2017, 0
      %2024 = vmatprep.subr.mxu0 0.0
      %2025 = vmatpush1.msra.mxu0 %v2015
      %2026 = vmatprep.subr.mxu0 0.0
      %2027 = vmatpush1.msra.mxu0 %v2022
      %2028 = vmatprep.subr.mxu0 0.0
      %2029 = vmatpush1.msra.mxu0 0.0
      %2030 = vmatprep.subr.mxu0 0.0
      %2031 = vmatpush1.msra.mxu0 0.0
      %2032 = vmatprep.subr.mxu0 0.0
      %2033 = vmatpush1.msra.mxu0 0.0
      %2034 = vmatprep.subr.mxu0 0.0
      %2035 = vmatpush1.msra.mxu0 0.0
      %2036 = vmatprep.subr.mxu0 0.0
      %2037 = vmatpush1.msra.mxu0 0.0
      %2038 = vmatprep.subr.mxu0 0.0
      %2039 = vmatpush1.msra.mxu0 0.0
      %2040 = vmatprep.subr.mxu0 0.0
      %2041 = vmatpush1.msra.mxu0 0.0
      %2042 = vmatprep.subr.mxu0 0.0
      %2043 = vmatpush1.msra.mxu0 0.0
      %2044 = vmatprep.subr.mxu0 0.0
      %2045 = vmatpush1.msra.mxu0 0.0
      %2046 = vmatprep.subr.mxu0 0.0
      %2047 = vmatpush1.msra.mxu0 0.0
      %2048 = vmatprep.subr.mxu0 0.0
      %2049 = vmatpush1.msra.mxu0 0.0
      %2050 = vmatprep.subr.mxu0 0.0
      %2051 = vmatpush1.msra.mxu0 0.0
      %2052 = vmatprep.subr.mxu0 0.0
      %2053 = vmatpush1.msra.mxu0 0.0
      %2054 = vmatprep.subr.mxu0 0.0
      %2055 = vmatpush1.msra.mxu0 0.0
      %2056 = vmatprep.subr.mxu0 0.0
      %2057 = vmatpush1.msra.mxu0 0.0
      %2058 = vmatprep.subr.mxu0 0.0
      %2059 = vmatpush1.msra.mxu0 0.0
      %2060 = vmatprep.subr.mxu0 0.0
      %2061 = vmatpush1.msra.mxu0 0.0
      %2062 = vmatprep.subr.mxu0 0.0
      %2063 = vmatpush1.msra.mxu0 0.0
      %2064 = vmatprep.subr.mxu0 0.0
      %2065 = vmatpush1.msra.mxu0 0.0
      %2066 = vmatprep.subr.mxu0 0.0
      %2067 = vmatpush1.msra.mxu0 0.0
      %2068 = vmatprep.subr.mxu0 0.0
      %2069 = vmatpush1.msra.mxu0 0.0
      %2070 = vmatprep.subr.mxu0 0.0
      %2071 = vmatpush1.msra.mxu0 0.0
      %2072 = vmatprep.subr.mxu0 0.0
      %2073 = vmatpush1.msra.mxu0 0.0
      %2074 = vmatprep.subr.mxu0 0.0
      %2075 = vmatpush1.msra.mxu0 0.0
      %2076 = vmatprep.subr.mxu0 0.0
      %2077 = vmatpush1.msra.mxu0 0.0
      %2078 = vmatprep.subr.mxu0 0.0
      %2079 = vmatpush1.msra.mxu0 0.0
      %2080 = vmatprep.subr.mxu0 0.0
      %2081 = vmatpush1.msra.mxu0 0.0
      %2082 = vmatprep.subr.mxu0 0.0
      %2083 = vmatpush1.msra.mxu0 0.0
      %2084 = vmatprep.subr.mxu0 0.0
      %2085 = vmatpush1.msra.mxu0 0.0
      %2086 = vmatprep.subr.mxu0 0.0
      %2087 = vmatpush1.msra.mxu0 0.0
      %2088 = vmatprep.mubr.f32.mxu0 0.0
      %2089 = vmatmul.mubr.f32.gmra.mrb[0].mxu0 %v2020
      %v2090 = vpop.f32.mrb[0].mxu0
      %v2091 = vadd.f32 0.0, %v2090
      %v2092 = vpop.f32.mrb[0].mxu0
      %2093 = vdwg.mxu0
      %v2094 = vpack.c.bf16 %v2091, %v2091
      %v2095 = vld [vmem:[%s10 + $0x4] sm:$0xf]
      %v2097 = vsel %vm720, %v2094, 0
      %v2100 = vsel %vm1063, %v2095, 0
      %2102 = vmatprep.subr.bf16.mxu0 0
      %2103 = vmatpush1.bf16.msra.mxu0 %v2100
      %2104 = vmatprep.subr.bf16.mxu0 0
      %2105 = vmatpush1.bf16.msra.mxu0 0
      %2106 = vmatprep.subr.bf16.mxu0 0
      %2107 = vmatpush1.bf16.msra.mxu0 0
      %2108 = vmatprep.subr.bf16.mxu0 0
      %2109 = vmatpush1.bf16.msra.mxu0 0
      %2110 = vmatprep.subr.bf16.mxu0 0
      %2111 = vmatpush1.bf16.msra.mxu0 0
      %2112 = vmatprep.subr.bf16.mxu0 0
      %2113 = vmatpush1.bf16.msra.mxu0 0
      %2114 = vmatprep.subr.bf16.mxu0 0
      %2115 = vmatpush1.bf16.msra.mxu0 0
      %2116 = vmatprep.subr.bf16.mxu0 0
      %2117 = vmatpush1.bf16.msra.mxu0 0
      %2118 = vmatprep.subr.bf16.mxu0 0
      %2119 = vmatpush1.bf16.msra.mxu0 0
      %2120 = vmatprep.subr.bf16.mxu0 0
      %2121 = vmatpush1.bf16.msra.mxu0 0
      %2122 = vmatprep.subr.bf16.mxu0 0
      %2123 = vmatpush1.bf16.msra.mxu0 0
      %2124 = vmatprep.subr.bf16.mxu0 0
      %2125 = vmatpush1.bf16.msra.mxu0 0
      %2126 = vmatprep.subr.bf16.mxu0 0
      %2127 = vmatpush1.bf16.msra.mxu0 0
      %2128 = vmatprep.subr.bf16.mxu0 0
      %2129 = vmatpush1.bf16.msra.mxu0 0
      %2130 = vmatprep.subr.bf16.mxu0 0
      %2131 = vmatpush1.bf16.msra.mxu0 0
      %2132 = vmatprep.subr.bf16.mxu0 0
      %2133 = vmatpush1.bf16.msra.mxu0 0
      %2134 = vmatprep.mubr.bf16.mxu0 0
      %2135 = vmatmul.mubr.bf16.gmra.mrb[0].mxu0 %v2097
      %v2136 = vpop.f32.mrb[0].mxu0
      %v2137 = vadd.f32 0.0, %v2136
      %v2138 = vpop.f32.mrb[0].mxu0
      %v2139 = vpop.f32.mrb[0].mxu0
      %v2140 = vpop.f32.mrb[0].mxu0
      %2141 = vdwg.mxu0
      %v2143 = vsel %vm720, %v1918, 0
      %v2146 = vsel %vm1063, %v1919, 0
      %2148 = vmatprep.subr.bf16.mxu0 0
      %2149 = vmatpush1.bf16.msra.mxu0 %v2146
      %2150 = vmatprep.subr.bf16.mxu0 0
      %2151 = vmatpush1.bf16.msra.mxu0 0
      %2152 = vmatprep.subr.bf16.mxu0 0
      %2153 = vmatpush1.bf16.msra.mxu0 0
      %2154 = vmatprep.subr.bf16.mxu0 0
      %2155 = vmatpush1.bf16.msra.mxu0 0
      %2156 = vmatprep.subr.bf16.mxu0 0
      %2157 = vmatpush1.bf16.msra.mxu0 0
      %2158 = vmatprep.subr.bf16.mxu0 0
      %2159 = vmatpush1.bf16.msra.mxu0 0
      %2160 = vmatprep.subr.bf16.mxu0 0
      %2161 = vmatpush1.bf16.msra.mxu0 0
      %2162 = vmatprep.subr.bf16.mxu0 0
      %2163 = vmatpush1.bf16.msra.mxu0 0
      %2164 = vmatprep.subr.bf16.mxu0 0
      %2165 = vmatpush1.bf16.msra.mxu0 0
      %2166 = vmatprep.subr.bf16.mxu0 0
      %2167 = vmatpush1.bf16.msra.mxu0 0
      %2168 = vmatprep.subr.bf16.mxu0 0
      %2169 = vmatpush1.bf16.msra.mxu0 0
      %2170 = vmatprep.subr.bf16.mxu0 0
      %2171 = vmatpush1.bf16.msra.mxu0 0
      %2172 = vmatprep.subr.bf16.mxu0 0
      %2173 = vmatpush1.bf16.msra.mxu0 0
      %2174 = vmatprep.subr.bf16.mxu0 0
      %2175 = vmatpush1.bf16.msra.mxu0 0
      %2176 = vmatprep.subr.bf16.mxu0 0
      %2177 = vmatpush1.bf16.msra.mxu0 0
      %2178 = vmatprep.subr.bf16.mxu0 0
      %2179 = vmatpush1.bf16.msra.mxu0 0
      %2180 = vmatprep.mubr.bf16.mxu0 0
      %2181 = vmatmul.mubr.bf16.gmra.mrb[0].mxu0 %v2143
      %v2182 = vpop.f32.mrb[0].mxu0
      %v2183 = vadd.f32 %v2137, %v2182
      %v2184 = vpop.f32.mrb[0].mxu0
      %v2185 = vpop.f32.mrb[0].mxu0
      %v2186 = vpop.f32.mrb[0].mxu0
      %2187 = vdwg.mxu0
      %2188 = vrot.lane.b32.xlu0 %v1686, 112
      %v2189 = vpop.permute.xlu0 %2188
      %2190 = vrot.lane.b32.xlu0 %v1739, 112
      %v2191 = vpop.permute.xlu0 %2190
      %2192 = vrot.lane.b32.xlu0 %v1742, 112
      %v2193 = vpop.permute.xlu0 %2192
      %v2194 = vsel %vm720, %v2189, 0
      %v2196 = vsel %vm720, %v2191, 0
      %v2198 = vsel %vm720, %v2193, 0
      %2200 = vmatprep.subr.mxu0 0.0
      %2201 = vmatpush1.xpose.msra.mxu0 %v2196
      %2202 = vmatprep.subr.mxu0 0.0
      %2203 = vmatpush1.xpose.msra.mxu0 %v2198
      %2204 = vmatprep.subr.mxu0 0.0
      %2205 = vmatpush1.xpose.msra.mxu0 0.0
      %2206 = vmatprep.subr.mxu0 0.0
      %2207 = vmatpush1.xpose.msra.mxu0 0.0
      %2208 = vmatprep.subr.mxu0 0.0
      %2209 = vmatpush1.xpose.msra.mxu0 0.0
      %2210 = vmatprep.subr.mxu0 0.0
      %2211 = vmatpush1.xpose.msra.mxu0 0.0
      %2212 = vmatprep.subr.mxu0 0.0
      %2213 = vmatpush1.xpose.msra.mxu0 0.0
      %2214 = vmatprep.subr.mxu0 0.0
      %2215 = vmatpush1.xpose.msra.mxu0 0.0
      %2216 = vmatprep.subr.mxu0 0.0
      %2217 = vmatpush1.xpose.msra.mxu0 0.0
      %2218 = vmatprep.subr.mxu0 0.0
      %2219 = vmatpush1.xpose.msra.mxu0 0.0
      %2220 = vmatprep.subr.mxu0 0.0
      %2221 = vmatpush1.xpose.msra.mxu0 0.0
      %2222 = vmatprep.subr.mxu0 0.0
      %2223 = vmatpush1.xpose.msra.mxu0 0.0
      %2224 = vmatprep.subr.mxu0 0.0
      %2225 = vmatpush1.xpose.msra.mxu0 0.0
      %2226 = vmatprep.subr.mxu0 0.0
      %2227 = vmatpush1.xpose.msra.mxu0 0.0
      %2228 = vmatprep.subr.mxu0 0.0
      %2229 = vmatpush1.xpose.msra.mxu0 0.0
      %2230 = vmatprep.subr.mxu0 0.0
      %2231 = vmatpush1.xpose.msra.mxu0 0.0
      %2232 = vmatprep.subr.mxu0 0.0
      %2233 = vmatpush1.xpose.msra.mxu0 0.0
      %2234 = vmatprep.subr.mxu0 0.0
      %2235 = vmatpush1.xpose.msra.mxu0 0.0
      %2236 = vmatprep.subr.mxu0 0.0
      %2237 = vmatpush1.xpose.msra.mxu0 0.0
      %2238 = vmatprep.subr.mxu0 0.0
      %2239 = vmatpush1.xpose.msra.mxu0 0.0
      %2240 = vmatprep.subr.mxu0 0.0
      %2241 = vmatpush1.xpose.msra.mxu0 0.0
      %2242 = vmatprep.subr.mxu0 0.0
      %2243 = vmatpush1.xpose.msra.mxu0 0.0
      %2244 = vmatprep.subr.mxu0 0.0
      %2245 = vmatpush1.xpose.msra.mxu0 0.0
      %2246 = vmatprep.subr.mxu0 0.0
      %2247 = vmatpush1.xpose.msra.mxu0 0.0
      %2248 = vmatprep.subr.mxu0 0.0
      %2249 = vmatpush1.xpose.msra.mxu0 0.0
      %2250 = vmatprep.subr.mxu0 0.0
      %2251 = vmatpush1.xpose.msra.mxu0 0.0
      %2252 = vmatprep.subr.mxu0 0.0
      %2253 = vmatpush1.xpose.msra.mxu0 0.0
      %2254 = vmatprep.subr.mxu0 0.0
      %2255 = vmatpush1.xpose.msra.mxu0 0.0
      %2256 = vmatprep.subr.mxu0 0.0
      %2257 = vmatpush1.xpose.msra.mxu0 0.0
      %2258 = vmatprep.subr.mxu0 0.0
      %2259 = vmatpush1.xpose.msra.mxu0 0.0
      %2260 = vmatprep.subr.mxu0 0.0
      %2261 = vmatpush1.xpose.msra.mxu0 0.0
      %2262 = vmatprep.subr.mxu0 0.0
      %2263 = vmatpush1.xpose.msra.mxu0 0.0
      %2264 = vmatprep.mubr.f32.mxu0 0.0
      %2265 = vmatmul.mubr.f32.gmra.mrb[0].mxu0 %v2194
      %v2266 = vpop.f32.mrb[0].mxu0
      %v2267 = vadd.f32 0.0, %v2266
      %v2268 = vpop.f32.mrb[0].mxu0
      %2269 = vdwg.mxu0
      %v2270 = vmul.f32 %v2267, 0.35355338
      %v2271 = vsel %vm1825, %v2270, -inf
      %2272 = vmax.xlane.f32.xlu0 %v2271
      %v2273 = vpop.xlane.xlu0 %2272
      %v2274 = vsub.f32 %v2270, %v2273
      %v2275 = vmul.f32 %v2274, 1.442695
      %v2276 = vpow.pop %v2275
      %v2277 = vsel %vm1825, %v2276, 0.0
      %2278 = vadd.xlane.f32.xlu0 %v2277
      %v2279 = vpop.xlane.xlu0 %2278
      %v2280 = vrcp.pop %v2279
      %v2281 = vmul.f32 %v2276, %v2280
      %2282 = vrot.lane.b32.xlu0 %v1739, 80
      %v2283 = vpop.permute.xlu0 %2282
      %2284 = vrot.lane.b32.xlu0 %v1742, 80
      %v2285 = vpop.permute.xlu0 %2284
      %v2288 = vsel %vm1825, %v2281, 0
      %v2290 = vsel %vm1845, %v2285, 0
      %2292 = vmatprep.subr.mxu0 0.0
      %2293 = vmatpush1.msra.mxu0 %v2283
      %2294 = vmatprep.subr.mxu0 0.0
      %2295 = vmatpush1.msra.mxu0 %v2290
      %2296 = vmatprep.subr.mxu0 0.0
      %2297 = vmatpush1.msra.mxu0 0.0
      %2298 = vmatprep.subr.mxu0 0.0
      %2299 = vmatpush1.msra.mxu0 0.0
      %2300 = vmatprep.subr.mxu0 0.0
      %2301 = vmatpush1.msra.mxu0 0.0
      %2302 = vmatprep.subr.mxu0 0.0
      %2303 = vmatpush1.msra.mxu0 0.0
      %2304 = vmatprep.subr.mxu0 0.0
      %2305 = vmatpush1.msra.mxu0 0.0
      %2306 = vmatprep.subr.mxu0 0.0
      %2307 = vmatpush1.msra.mxu0 0.0
      %2308 = vmatprep.subr.mxu0 0.0
      %2309 = vmatpush1.msra.mxu0 0.0
      %2310 = vmatprep.subr.mxu0 0.0
      %2311 = vmatpush1.msra.mxu0 0.0
      %2312 = vmatprep.subr.mxu0 0.0
      %2313 = vmatpush1.msra.mxu0 0.0
      %2314 = vmatprep.subr.mxu0 0.0
      %2315 = vmatpush1.msra.mxu0 0.0
      %2316 = vmatprep.subr.mxu0 0.0
      %2317 = vmatpush1.msra.mxu0 0.0
      %2318 = vmatprep.subr.mxu0 0.0
      %2319 = vmatpush1.msra.mxu0 0.0
      %2320 = vmatprep.subr.mxu0 0.0
      %2321 = vmatpush1.msra.mxu0 0.0
      %2322 = vmatprep.subr.mxu0 0.0
      %2323 = vmatpush1.msra.mxu0 0.0
      %2324 = vmatprep.subr.mxu0 0.0
      %2325 = vmatpush1.msra.mxu0 0.0
      %2326 = vmatprep.subr.mxu0 0.0
      %2327 = vmatpush1.msra.mxu0 0.0
      %2328 = vmatprep.subr.mxu0 0.0
      %2329 = vmatpush1.msra.mxu0 0.0
      %2330 = vmatprep.subr.mxu0 0.0
      %2331 = vmatpush1.msra.mxu0 0.0
      %2332 = vmatprep.subr.mxu0 0.0
      %2333 = vmatpush1.msra.mxu0 0.0
      %2334 = vmatprep.subr.mxu0 0.0
      %2335 = vmatpush1.msra.mxu0 0.0
      %2336 = vmatprep.subr.mxu0 0.0
      %2337 = vmatpush1.msra.mxu0 0.0
      %2338 = vmatprep.subr.mxu0 0.0
      %2339 = vmatpush1.msra.mxu0 0.0
      %2340 = vmatprep.subr.mxu0 0.0
      %2341 = vmatpush1.msra.mxu0 0.0
      %2342 = vmatprep.subr.mxu0 0.0
      %2343 = vmatpush1.msra.mxu0 0.0
      %2344 = vmatprep.subr.mxu0 0.0
      %2345 = vmatpush1.msra.mxu0 0.0
      %2346 = vmatprep.subr.mxu0 0.0
      %2347 = vmatpush1.msra.mxu0 0.0
      %2348 = vmatprep.subr.mxu0 0.0
      %2349 = vmatpush1.msra.mxu0 0.0
      %2350 = vmatprep.subr.mxu0 0.0
      %2351 = vmatpush1.msra.mxu0 0.0
      %2352 = vmatprep.subr.mxu0 0.0
      %2353 = vmatpush1.msra.mxu0 0.0
      %2354 = vmatprep.subr.mxu0 0.0
      %2355 = vmatpush1.msra.mxu0 0.0
      %2356 = vmatprep.mubr.f32.mxu0 0.0
      %2357 = vmatmul.mubr.f32.gmra.mrb[0].mxu0 %v2288
      %v2358 = vpop.f32.mrb[0].mxu0
      %v2359 = vadd.f32 0.0, %v2358
      %v2360 = vpop.f32.mrb[0].mxu0
      %2361 = vdwg.mxu0
      %v2362 = vpack.c.bf16 %v2359, %v2359
      %v2363 = vld [vmem:[%s10 + $0x8] sm:$0xf]
      %v2365 = vsel %vm720, %v2362, 0
      %v2368 = vsel %vm1063, %v2363, 0
      %2370 = vmatprep.subr.bf16.mxu0 0
      %2371 = vmatpush1.bf16.msra.mxu0 %v2368
      %2372 = vmatprep.subr.bf16.mxu0 0
      %2373 = vmatpush1.bf16.msra.mxu0 0
      %2374 = vmatprep.subr.bf16.mxu0 0
      %2375 = vmatpush1.bf16.msra.mxu0 0
      %2376 = vmatprep.subr.bf16.mxu0 0
      %2377 = vmatpush1.bf16.msra.mxu0 0
      %2378 = vmatprep.subr.bf16.mxu0 0
      %2379 = vmatpush1.bf16.msra.mxu0 0
      %2380 = vmatprep.subr.bf16.mxu0 0
      %2381 = vmatpush1.bf16.msra.mxu0 0
      %2382 = vmatprep.subr.bf16.mxu0 0
      %2383 = vmatpush1.bf16.msra.mxu0 0
      %2384 = vmatprep.subr.bf16.mxu0 0
      %2385 = vmatpush1.bf16.msra.mxu0 0
      %2386 = vmatprep.subr.bf16.mxu0 0
      %2387 = vmatpush1.bf16.msra.mxu0 0
      %2388 = vmatprep.subr.bf16.mxu0 0
      %2389 = vmatpush1.bf16.msra.mxu0 0
      %2390 = vmatprep.subr.bf16.mxu0 0
      %2391 = vmatpush1.bf16.msra.mxu0 0
      %2392 = vmatprep.subr.bf16.mxu0 0
      %2393 = vmatpush1.bf16.msra.mxu0 0
      %2394 = vmatprep.subr.bf16.mxu0 0
      %2395 = vmatpush1.bf16.msra.mxu0 0
      %2396 = vmatprep.subr.bf16.mxu0 0
      %2397 = vmatpush1.bf16.msra.mxu0 0
      %2398 = vmatprep.subr.bf16.mxu0 0
      %2399 = vmatpush1.bf16.msra.mxu0 0
      %2400 = vmatprep.subr.bf16.mxu0 0
      %2401 = vmatpush1.bf16.msra.mxu0 0
      %2402 = vmatprep.mubr.bf16.mxu0 0
      %2403 = vmatmul.mubr.bf16.gmra.mrb[0].mxu0 %v2365
      %v2404 = vpop.f32.mrb[0].mxu0
      %v2405 = vadd.f32 0.0, %v2404
      %v2406 = vpop.f32.mrb[0].mxu0
      %v2407 = vpop.f32.mrb[0].mxu0
      %v2408 = vpop.f32.mrb[0].mxu0
      %2409 = vdwg.mxu0
      %v2410 = vadd.f32 %v2183, %v2405
      %2411 = vrot.lane.b32.xlu0 %v1686, 104
      %v2412 = vpop.permute.xlu0 %2411
      %2413 = vrot.lane.b32.xlu0 %v1739, 104
      %v2414 = vpop.permute.xlu0 %2413
      %2415 = vrot.lane.b32.xlu0 %v1742, 104
      %v2416 = vpop.permute.xlu0 %2415
      %v2417 = vsel %vm720, %v2412, 0
      %v2419 = vsel %vm720, %v2414, 0
      %v2421 = vsel %vm720, %v2416, 0
      %2423 = vmatprep.subr.mxu0 0.0
      %2424 = vmatpush1.xpose.msra.mxu0 %v2419
      %2425 = vmatprep.subr.mxu0 0.0
      %2426 = vmatpush1.xpose.msra.mxu0 %v2421
      %2427 = vmatprep.subr.mxu0 0.0
      %2428 = vmatpush1.xpose.msra.mxu0 0.0
      %2429 = vmatprep.subr.mxu0 0.0
      %2430 = vmatpush1.xpose.msra.mxu0 0.0
      %2431 = vmatprep.subr.mxu0 0.0
      %2432 = vmatpush1.xpose.msra.mxu0 0.0
      %2433 = vmatprep.subr.mxu0 0.0
      %2434 = vmatpush1.xpose.msra.mxu0 0.0
      %2435 = vmatprep.subr.mxu0 0.0
      %2436 = vmatpush1.xpose.msra.mxu0 0.0
      %2437 = vmatprep.subr.mxu0 0.0
      %2438 = vmatpush1.xpose.msra.mxu0 0.0
      %2439 = vmatprep.subr.mxu0 0.0
      %2440 = vmatpush1.xpose.msra.mxu0 0.0
      %2441 = vmatprep.subr.mxu0 0.0
      %2442 = vmatpush1.xpose.msra.mxu0 0.0
      %2443 = vmatprep.subr.mxu0 0.0
      %2444 = vmatpush1.xpose.msra.mxu0 0.0
      %2445 = vmatprep.subr.mxu0 0.0
      %2446 = vmatpush1.xpose.msra.mxu0 0.0
      %2447 = vmatprep.subr.mxu0 0.0
      %2448 = vmatpush1.xpose.msra.mxu0 0.0
      %2449 = vmatprep.subr.mxu0 0.0
      %2450 = vmatpush1.xpose.msra.mxu0 0.0
      %2451 = vmatprep.subr.mxu0 0.0
      %2452 = vmatpush1.xpose.msra.mxu0 0.0
      %2453 = vmatprep.subr.mxu0 0.0
      %2454 = vmatpush1.xpose.msra.mxu0 0.0
      %2455 = vmatprep.subr.mxu0 0.0
      %2456 = vmatpush1.xpose.msra.mxu0 0.0
      %2457 = vmatprep.subr.mxu0 0.0
      %2458 = vmatpush1.xpose.msra.mxu0 0.0
      %2459 = vmatprep.subr.mxu0 0.0
      %2460 = vmatpush1.xpose.msra.mxu0 0.0
      %2461 = vmatprep.subr.mxu0 0.0
      %2462 = vmatpush1.xpose.msra.mxu0 0.0
      %2463 = vmatprep.subr.mxu0 0.0
      %2464 = vmatpush1.xpose.msra.mxu0 0.0
      %2465 = vmatprep.subr.mxu0 0.0
      %2466 = vmatpush1.xpose.msra.mxu0 0.0
      %2467 = vmatprep.subr.mxu0 0.0
      %2468 = vmatpush1.xpose.msra.mxu0 0.0
      %2469 = vmatprep.subr.mxu0 0.0
      %2470 = vmatpush1.xpose.msra.mxu0 0.0
      %2471 = vmatprep.subr.mxu0 0.0
      %2472 = vmatpush1.xpose.msra.mxu0 0.0
      %2473 = vmatprep.subr.mxu0 0.0
      %2474 = vmatpush1.xpose.msra.mxu0 0.0
      %2475 = vmatprep.subr.mxu0 0.0
      %2476 = vmatpush1.xpose.msra.mxu0 0.0
      %2477 = vmatprep.subr.mxu0 0.0
      %2478 = vmatpush1.xpose.msra.mxu0 0.0
      %2479 = vmatprep.subr.mxu0 0.0
      %2480 = vmatpush1.xpose.msra.mxu0 0.0
      %2481 = vmatprep.subr.mxu0 0.0
      %2482 = vmatpush1.xpose.msra.mxu0 0.0
      %2483 = vmatprep.subr.mxu0 0.0
      %2484 = vmatpush1.xpose.msra.mxu0 0.0
      %2485 = vmatprep.subr.mxu0 0.0
      %2486 = vmatpush1.xpose.msra.mxu0 0.0
      %2487 = vmatprep.mubr.f32.mxu0 0.0
      %2488 = vmatmul.mubr.f32.gmra.mrb[0].mxu0 %v2417
      %v2489 = vpop.f32.mrb[0].mxu0
      %v2490 = vadd.f32 0.0, %v2489
      %v2491 = vpop.f32.mrb[0].mxu0
      %2492 = vdwg.mxu0
      %v2493 = vmul.f32 %v2490, 0.35355338
      %v2494 = vsel %vm1825, %v2493, -inf
      %2495 = vmax.xlane.f32.xlu0 %v2494
      %v2496 = vpop.xlane.xlu0 %2495
      %v2497 = vsub.f32 %v2493, %v2496
      %v2498 = vmul.f32 %v2497, 1.442695
      %v2499 = vpow.pop %v2498
      %v2500 = vsel %vm1825, %v2499, 0.0
      %2501 = vadd.xlane.f32.xlu0 %v2500
      %v2502 = vpop.xlane.xlu0 %2501
      %v2503 = vrcp.pop %v2502
      %v2504 = vmul.f32 %v2499, %v2503
      %2505 = vrot.lane.b32.xlu0 %v1739, 72
      %v2506 = vpop.permute.xlu0 %2505
      %2507 = vrot.lane.b32.xlu0 %v1742, 72
      %v2508 = vpop.permute.xlu0 %2507
      %v2511 = vsel %vm1825, %v2504, 0
      %v2513 = vsel %vm1845, %v2508, 0
      %2515 = vmatprep.subr.mxu0 0.0
      %2516 = vmatpush1.msra.mxu0 %v2506
      %2517 = vmatprep.subr.mxu0 0.0
      %2518 = vmatpush1.msra.mxu0 %v2513
      %2519 = vmatprep.subr.mxu0 0.0
      %2520 = vmatpush1.msra.mxu0 0.0
      %2521 = vmatprep.subr.mxu0 0.0
      %2522 = vmatpush1.msra.mxu0 0.0
      %2523 = vmatprep.subr.mxu0 0.0
      %2524 = vmatpush1.msra.mxu0 0.0
      %2525 = vmatprep.subr.mxu0 0.0
      %2526 = vmatpush1.msra.mxu0 0.0
      %2527 = vmatprep.subr.mxu0 0.0
      %2528 = vmatpush1.msra.mxu0 0.0
      %2529 = vmatprep.subr.mxu0 0.0
      %2530 = vmatpush1.msra.mxu0 0.0
      %2531 = vmatprep.subr.mxu0 0.0
      %2532 = vmatpush1.msra.mxu0 0.0
      %2533 = vmatprep.subr.mxu0 0.0
      %2534 = vmatpush1.msra.mxu0 0.0
      %2535 = vmatprep.subr.mxu0 0.0
      %2536 = vmatpush1.msra.mxu0 0.0
      %2537 = vmatprep.subr.mxu0 0.0
      %2538 = vmatpush1.msra.mxu0 0.0
      %2539 = vmatprep.subr.mxu0 0.0
      %2540 = vmatpush1.msra.mxu0 0.0
      %2541 = vmatprep.subr.mxu0 0.0
      %2542 = vmatpush1.msra.mxu0 0.0
      %2543 = vmatprep.subr.mxu0 0.0
      %2544 = vmatpush1.msra.mxu0 0.0
      %2545 = vmatprep.subr.mxu0 0.0
      %2546 = vmatpush1.msra.mxu0 0.0
      %2547 = vmatprep.subr.mxu0 0.0
      %2548 = vmatpush1.msra.mxu0 0.0
      %2549 = vmatprep.subr.mxu0 0.0
      %2550 = vmatpush1.msra.mxu0 0.0
      %2551 = vmatprep.subr.mxu0 0.0
      %2552 = vmatpush1.msra.mxu0 0.0
      %2553 = vmatprep.subr.mxu0 0.0
      %2554 = vmatpush1.msra.mxu0 0.0
      %2555 = vmatprep.subr.mxu0 0.0
      %2556 = vmatpush1.msra.mxu0 0.0
      %2557 = vmatprep.subr.mxu0 0.0
      %2558 = vmatpush1.msra.mxu0 0.0
      %2559 = vmatprep.subr.mxu0 0.0
      %2560 = vmatpush1.msra.mxu0 0.0
      %2561 = vmatprep.subr.mxu0 0.0
      %2562 = vmatpush1.msra.mxu0 0.0
      %2563 = vmatprep.subr.mxu0 0.0
      %2564 = vmatpush1.msra.mxu0 0.0
      %2565 = vmatprep.subr.mxu0 0.0
      %2566 = vmatpush1.msra.mxu0 0.0
      %2567 = vmatprep.subr.mxu0 0.0
      %2568 = vmatpush1.msra.mxu0 0.0
      %2569 = vmatprep.subr.mxu0 0.0
      %2570 = vmatpush1.msra.mxu0 0.0
      %2571 = vmatprep.subr.mxu0 0.0
      %2572 = vmatpush1.msra.mxu0 0.0
      %2573 = vmatprep.subr.mxu0 0.0
      %2574 = vmatpush1.msra.mxu0 0.0
      %2575 = vmatprep.subr.mxu0 0.0
      %2576 = vmatpush1.msra.mxu0 0.0
      %2577 = vmatprep.subr.mxu0 0.0
      %2578 = vmatpush1.msra.mxu0 0.0
      %2579 = vmatprep.mubr.f32.mxu0 0.0
      %2580 = vmatmul.mubr.f32.gmra.mrb[0].mxu0 %v2511
      %v2581 = vpop.f32.mrb[0].mxu0
      %v2582 = vadd.f32 0.0, %v2581
      %v2583 = vpop.f32.mrb[0].mxu0
      %2584 = vdwg.mxu0
      %v2585 = vpack.c.bf16 %v2582, %v2582
      %v2586 = vld [vmem:[%s10 + $0xc] sm:$0xf]
      %v2588 = vsel %vm720, %v2585, 0
      %v2591 = vsel %vm1063, %v2586, 0
      %2593 = vmatprep.subr.bf16.mxu0 0
      %2594 = vmatpush1.bf16.msra.mxu0 %v2591
      %2595 = vmatprep.subr.bf16.mxu0 0
      %2596 = vmatpush1.bf16.msra.mxu0 0
      %2597 = vmatprep.subr.bf16.mxu0 0
      %2598 = vmatpush1.bf16.msra.mxu0 0
      %2599 = vmatprep.subr.bf16.mxu0 0
      %2600 = vmatpush1.bf16.msra.mxu0 0
      %2601 = vmatprep.subr.bf16.mxu0 0
      %2602 = vmatpush1.bf16.msra.mxu0 0
      %2603 = vmatprep.subr.bf16.mxu0 0
      %2604 = vmatpush1.bf16.msra.mxu0 0
      %2605 = vmatprep.subr.bf16.mxu0 0
      %2606 = vmatpush1.bf16.msra.mxu0 0
      %2607 = vmatprep.subr.bf16.mxu0 0
      %2608 = vmatpush1.bf16.msra.mxu0 0
      %2609 = vmatprep.subr.bf16.mxu0 0
      %2610 = vmatpush1.bf16.msra.mxu0 0
      %2611 = vmatprep.subr.bf16.mxu0 0
      %2612 = vmatpush1.bf16.msra.mxu0 0
      %2613 = vmatprep.subr.bf16.mxu0 0
      %2614 = vmatpush1.bf16.msra.mxu0 0
      %2615 = vmatprep.subr.bf16.mxu0 0
      %2616 = vmatpush1.bf16.msra.mxu0 0
      %2617 = vmatprep.subr.bf16.mxu0 0
      %2618 = vmatpush1.bf16.msra.mxu0 0
      %2619 = vmatprep.subr.bf16.mxu0 0
      %2620 = vmatpush1.bf16.msra.mxu0 0
      %2621 = vmatprep.subr.bf16.mxu0 0
      %2622 = vmatpush1.bf16.msra.mxu0 0
      %2623 = vmatprep.subr.bf16.mxu0 0
      %2624 = vmatpush1.bf16.msra.mxu0 0
      %2625 = vmatprep.mubr.bf16.mxu0 0
      %2626 = vmatmul.mubr.bf16.gmra.mrb[0].mxu0 %v2588
      %v2627 = vpop.f32.mrb[0].mxu0
      %v2628 = vadd.f32 0.0, %v2627
      %v2629 = vpop.f32.mrb[0].mxu0
      %v2630 = vpop.f32.mrb[0].mxu0
      %v2631 = vpop.f32.mrb[0].mxu0
      %2632 = vdwg.mxu0
      %v2633 = vadd.f32 %v2410, %v2628
      %v2634 = vld [vmem:[%s11] sm:$0x1]
      %v2636 = vlaneseq
      %v2637 = vshrl.u32 %v2636, 7
      %v2638 = vsub.s32 0, %v2637
      %v2639 = vrot.slane %v2634, %v2638
      %v2641 = vadd.f32 %v2633, %v2639
      %v2642 = vadd.f32 %v1623, %v2641
      %v2643 = vld [vmem:[%s12] sm:$0x1]
      %v2644 = vld [vmem:[%s13] sm:$0x1]
      %v2645 = vsel %vm673, %v2642, 0.0
      %2646 = vadd.xlane.f32.xlu0 %v2645
      %v2647 = vpop.xlane.xlu0 %2646
      %v2648 = vmul.f32 %v2647, %v1599
      %v2649 = vsub.f32 %v2642, %v2648
      %v2650 = vmul.f32 %v2649, %v2649
      %v2651 = vsel %vm673, %v2650, 0.0
      %2652 = vadd.xlane.f32.xlu0 %v2651
      %v2653 = vpop.xlane.xlu0 %2652
      %v2654 = vmul.f32 %v2653, %v1599
      %v2655 = vadd.f32 %v2654, 1e-05
      %v2656 = vrsqrt.pop %v2655
      %v2657 = vmul.f32 %v2649, %v2656
      %v2659 = vlaneseq
      %v2660 = vshrl.u32 %v2659, 7
      %v2661 = vsub.s32 0, %v2660
      %v2662 = vrot.slane %v2643, %v2661
      %v2664 = vmul.f32 %v2657, %v2662
      %v2666 = vlaneseq
      %v2667 = vshrl.u32 %v2666, 7
      %v2668 = vsub.s32 0, %v2667
      %v2669 = vrot.slane %v2644, %v2668
      %v2671 = vadd.f32 %v2664, %v2669
      %v2672 = vpack.c.bf16 %v2671, %v2671
      %v2673 = vld [vmem:[%s14] sm:$0xf]
      %v2674 = vld [vmem:[%s14 + $0x4] sm:$0xf]
      %v2675 = vld [vmem:[%s14 + $0x8] sm:$0xf]
      %v2676 = vld [vmem:[%s14 + $0xc] sm:$0xf]
      %v2677 = vld [vmem:[%s15] sm:$0x1]
      %v2679 = vlaneseq
      %v2680 = vshrl.u32 %v2679, 7
      %v2681 = vsub.s32 0, %v2680
      %v2682 = vrot.slane %v2677, %v2681
      %v2688 = vunpack.c.l.b16 %v2673
      %v2689 = vunpack.c.l.b16 %v2674
      %v2690 = vunpack.c.l.b16 %v2675
      %v2691 = vunpack.c.l.b16 %v2676
      %v2692 = vpack.c.b16 %v2689, %v2688
      %v2693 = vpack.c.b16 %v2691, %v2690
      %v2697 = vsel %vm673, %v2672, 0
      %2699 = vmatprep.subr.bf16.mxu0 0
      %2700 = vmatpush1.bf16.msra.mxu0 %v2692
      %2701 = vmatprep.subr.bf16.mxu0 0
      %2702 = vmatpush1.bf16.msra.mxu0 %v2693
      %2703 = vmatprep.subr.bf16.mxu0 0
      %2704 = vmatpush1.bf16.msra.mxu0 0
      %2705 = vmatprep.subr.bf16.mxu0 0
      %2706 = vmatpush1.bf16.msra.mxu0 0
      %2707 = vmatprep.subr.bf16.mxu0 0
      %2708 = vmatpush1.bf16.msra.mxu0 0
      %2709 = vmatprep.subr.bf16.mxu0 0
      %2710 = vmatpush1.bf16.msra.mxu0 0
      %2711 = vmatprep.subr.bf16.mxu0 0
      %2712 = vmatpush1.bf16.msra.mxu0 0
      %2713 = vmatprep.subr.bf16.mxu0 0
      %2714 = vmatpush1.bf16.msra.mxu0 0
      %2715 = vmatprep.subr.bf16.mxu0 0
      %2716 = vmatpush1.bf16.msra.mxu0 0
      %2717 = vmatprep.subr.bf16.mxu0 0
      %2718 = vmatpush1.bf16.msra.mxu0 0
      %2719 = vmatprep.subr.bf16.mxu0 0
      %2720 = vmatpush1.bf16.msra.mxu0 0
      %2721 = vmatprep.subr.bf16.mxu0 0
      %2722 = vmatpush1.bf16.msra.mxu0 0
      %2723 = vmatprep.subr.bf16.mxu0 0
      %2724 = vmatpush1.bf16.msra.mxu0 0
      %2725 = vmatprep.subr.bf16.mxu0 0
      %2726 = vmatpush1.bf16.msra.mxu0 0
      %2727 = vmatprep.subr.bf16.mxu0 0
      %2728 = vmatpush1.bf16.msra.mxu0 0
      %2729 = vmatprep.subr.bf16.mxu0 0
      %2730 = vmatpush1.bf16.msra.mxu0 0
      %2731 = vmatprep.mubr.bf16.mxu0 0
      %2732 = vmatmul.mubr.bf16.gmra.mrb[0].mxu0 %v2697
      %v2733 = vpop.f32.mrb[0].mxu0
      %v2734 = vadd.f32 %v2682, %v2733
      %v2735 = vpop.f32.mrb[0].mxu0
      %v2736 = vpop.f32.mrb[0].mxu0
      %v2737 = vpop.f32.mrb[0].mxu0
      %2738 = vdwg.mxu0
      %v2739 = vmax.f32 %v2734, 0.0
      %v2740 = vpack.c.bf16 %v2739, %v2739
      %v2741 = vld [vmem:[%s16] sm:$0xf]
      %v2742 = vld [vmem:[%s16 + $0x4] sm:$0xf]
      %v2743 = vld [vmem:[%s16 + $0x8] sm:$0xf]
      %v2744 = vld [vmem:[%s16 + $0xc] sm:$0xf]
      %v2745 = vld [vmem:[%s16 + $0x10] sm:$0xf]
      %v2746 = vld [vmem:[%s16 + $0x14] sm:$0xf]
      %v2747 = vld [vmem:[%s16 + $0x18] sm:$0xf]
      %v2748 = vld [vmem:[%s16 + $0x1c] sm:$0xf]
      %v2749 = vld [vmem:[%s16 + $0x20] sm:$0xf]
      %v2750 = vld [vmem:[%s16 + $0x24] sm:$0xf]
      %v2751 = vld [vmem:[%s16 + $0x28] sm:$0xf]
      %v2752 = vld [vmem:[%s16 + $0x2c] sm:$0xf]
      %v2753 = vld [vmem:[%s16 + $0x30] sm:$0xf]
      %v2754 = vld [vmem:[%s16 + $0x34] sm:$0xf]
      %v2755 = vld [vmem:[%s16 + $0x38] sm:$0xf]
      %v2756 = vld [vmem:[%s16 + $0x3c] sm:$0xf]
      %v2757 = vld [vmem:[%s17] sm:$0x1]
      %v2759 = vlaneseq
      %v2760 = vshrl.u32 %v2759, 7
      %v2761 = vsub.s32 0, %v2760
      %v2762 = vrot.slane %v2757, %v2761
      %v2780 = vunpack.c.l.b16 %v2741
      %v2781 = vunpack.c.l.b16 %v2742
      %v2782 = vunpack.c.l.b16 %v2743
      %v2783 = vunpack.c.l.b16 %v2744
      %v2784 = vunpack.c.l.b16 %v2745
      %v2785 = vunpack.c.l.b16 %v2746
      %v2786 = vunpack.c.l.b16 %v2747
      %v2787 = vunpack.c.l.b16 %v2748
      %v2788 = vunpack.c.l.b16 %v2749
      %v2789 = vunpack.c.l.b16 %v2750
      %v2790 = vunpack.c.l.b16 %v2751
      %v2791 = vunpack.c.l.b16 %v2752
      %v2792 = vunpack.c.l.b16 %v2753
      %v2793 = vunpack.c.l.b16 %v2754
      %v2794 = vunpack.c.l.b16 %v2755
      %v2795 = vunpack.c.l.b16 %v2756
      %v2796 = vpack.c.b16 %v2781, %v2780
      %v2797 = vpack.c.b16 %v2783, %v2782
      %v2798 = vpack.c.b16 %v2785, %v2784
      %v2799 = vpack.c.b16 %v2787, %v2786
      %v2800 = vpack.c.b16 %v2789, %v2788
      %v2801 = vpack.c.b16 %v2791, %v2790
      %v2802 = vpack.c.b16 %v2793, %v2792
      %v2803 = vpack.c.b16 %v2795, %v2794
      %2812 = vmatprep.subr.bf16.mxu0 0
      %2813 = vmatpush1.bf16.msra.mxu0 %v2796
      %2814 = vmatprep.subr.bf16.mxu0 0
      %2815 = vmatpush1.bf16.msra.mxu0 %v2797
      %2816 = vmatprep.subr.bf16.mxu0 0
      %2817 = vmatpush1.bf16.msra.mxu0 %v2798
      %2818 = vmatprep.subr.bf16.mxu0 0
      %2819 = vmatpush1.bf16.msra.mxu0 %v2799
      %2820 = vmatprep.subr.bf16.mxu0 0
      %2821 = vmatpush1.bf16.msra.mxu0 %v2800
      %2822 = vmatprep.subr.bf16.mxu0 0
      %2823 = vmatpush1.bf16.msra.mxu0 %v2801
      %2824 = vmatprep.subr.bf16.mxu0 0
      %2825 = vmatpush1.bf16.msra.mxu0 %v2802
      %2826 = vmatprep.subr.bf16.mxu0 0
      %2827 = vmatpush1.bf16.msra.mxu0 %v2803
      %2828 = vmatprep.subr.bf16.mxu0 0
      %2829 = vmatpush1.bf16.msra.mxu0 0
      %2830 = vmatprep.subr.bf16.mxu0 0
      %2831 = vmatpush1.bf16.msra.mxu0 0
      %2832 = vmatprep.subr.bf16.mxu0 0
      %2833 = vmatpush1.bf16.msra.mxu0 0
      %2834 = vmatprep.subr.bf16.mxu0 0
      %2835 = vmatpush1.bf16.msra.mxu0 0
      %2836 = vmatprep.subr.bf16.mxu0 0
      %2837 = vmatpush1.bf16.msra.mxu0 0
      %2838 = vmatprep.subr.bf16.mxu0 0
      %2839 = vmatpush1.bf16.msra.mxu0 0
      %2840 = vmatprep.subr.bf16.mxu0 0
      %2841 = vmatpush1.bf16.msra.mxu0 0
      %2842 = vmatprep.subr.bf16.mxu0 0
      %2843 = vmatpush1.bf16.msra.mxu0 0
      %2844 = vmatprep.mubr.bf16.mxu0 0
      %2845 = vmatmul.mubr.bf16.gmra.mrb[0].mxu0 %v2740
      %v2846 = vpop.f32.mrb[0].mxu0
      %v2847 = vadd.f32 %v2762, %v2846
      %v2848 = vpop.f32.mrb[0].mxu0
      %v2849 = vpop.f32.mrb[0].mxu0
      %v2850 = vpop.f32.mrb[0].mxu0
      %2851 = vdwg.mxu0
      %v2852 = vadd.f32 %v2671, %v2847
      %v2853 = vld [vmem:[%s18] sm:$0x1]
      %v2854 = vld [vmem:[%s19] sm:$0x1]
      %v2855 = vsel %vm673, %v2852, 0.0
      %2856 = vadd.xlane.f32.xlu0 %v2855
      %v2857 = vpop.xlane.xlu0 %2856
      %v2858 = vmul.f32 %v2857, %v1599
      %v2859 = vsub.f32 %v2852, %v2858
      %v2860 = vmul.f32 %v2859, %v2859
      %v2861 = vsel %vm673, %v2860, 0.0
      %2862 = vadd.xlane.f32.xlu0 %v2861
      %v2863 = vpop.xlane.xlu0 %2862
      %v2864 = vmul.f32 %v2863, %v1599
      %v2865 = vadd.f32 %v2864, 1e-05
      %v2866 = vrsqrt.pop %v2865
      %v2867 = vmul.f32 %v2859, %v2866
      %v2869 = vlaneseq
      %v2870 = vshrl.u32 %v2869, 7
      %v2871 = vsub.s32 0, %v2870
      %v2872 = vrot.slane %v2853, %v2871
      %v2874 = vmul.f32 %v2867, %v2872
      %v2876 = vlaneseq
      %v2877 = vshrl.u32 %v2876, 7
      %v2878 = vsub.s32 0, %v2877
      %v2879 = vrot.slane %v2854, %v2878
      %v2881 = vadd.f32 %v2874, %v2879
      %2882 = vst.msk [vmem:[%s644] sm:$0xff] %vm673, %v2881
      %p2883 = scmp.lt.s32.totalorder %s31, 1
      %s2884 = scalar_select %p2883, %s31, 1
      %s2885 = smul.addr %s2884, 8
      %s2886 = scalar_lea.vmem %s20, %s2885
      // Predicated region
      $region101: #{_forward_core.3} parent=99 // pred_check
        %p2887 = pneg %p479
      $region102: #{_forward_core.3} parent=99 // pred_check_branch
        %2889 = sbr.rel (%p2887) target = $region104
      $region103: #{_forward_core.3} parent=99 // pred_region
        _
      $region104: #{_forward_core.3} parent=99 // pred_fallthru
        _
    $region100: #{_forward_core.3} parent=5 // pred_fallthru
      _
    %p2890 = scmp.le.s32.totalorder 2, %s26
    // Predicated region
    $region105: #{_forward_core.3} parent=5 // pred_check
      %p2891 = pneg %p2890
    $region106: #{_forward_core.3} parent=5 // pred_check_branch
      %2893 = sbr.rel (%p2891) target = $region108
    $region107: #{_forward_core.3} parent=5 // pred_region
      %s2894 = ssub.s32 %s26, 2
      // Predicated region
      $region109: #{_forward_core.3} parent=107 // pred_check
        %p2895 = pneg %p485
      $region110: #{_forward_core.3} parent=107 // pred_check_branch
        %2897 = sbr.rel (%p2895) target = $region112
      $region111: #{_forward_core.3} parent=107 // pred_region
        %p2898 = scmp.lt.s32.totalorder %s32, 1
        %s2899 = scalar_select %p2898, %s32, 1
        %s2900 = smul.addr %s2899, 8
        %s2901 = scalar_lea.vmem %s20, %s2900
      $region112: #{_forward_core.3} parent=107 // pred_fallthru
        _
    $region108: #{_forward_core.3} parent=5 // pred_fallthru
      _
  $region6: #{_forward_core.3} parent=0 // loop_footer
    %s30 = sadd.s32 1, %s26
  $region7: #{_forward_core.3} parent=0 // loop_footer_branch
    %25 = sbr.rel target = $region3
  $region8: #{_forward_core.3} parent=0 // loop_exit
    _

</llo_original>
